<compile_context>
chip_gen: v7x
topology: tpu7x:2x2x1
jax: 0.10.0
libtpu: 0.0.40
codegen_flags: <defaults>
</compile_context>

<pallas_src>
import jax
import jax.numpy as jnp
from jax.experimental import pallas as pl
from jax.experimental.pallas import tpu as pltpu

# ----------------------- configuration (small, synthetic) -------------------
HIDDEN = 32          # args.hidden_dim
MEM = 16             # args.mem_dim
TEXT_DIM = 20        # args.text_dim
AUDIO_DIM = 12       # args.audio_dim
VIDEO_DIM = 16       # args.video_dim
OUT1 = 6             # args.output_dim1
OUT2 = 1             # args.output_dim2
WINDOW = 2           # args.window_dim (forward implies cStar = 2 * total_h)
BATCH = 4
SEQ = 6

IN_ALL = TEXT_DIM + AUDIO_DIM + VIDEO_DIM    # 48
H3 = 3 * HIDDEN                              # 96  (total_h_dim)
HPAD = 128                                   # lane-padded h / c width
GATES_PAD = 4 * HPAD                         # 512 (i|f|g|o groups, lane aligned)
ATT_IN = H3 * WINDOW                         # 192 (real cStar width)
CSTAR_PAD = 2 * HPAD                         # 256 (padded cStar width)
GAMMA_IN = ATT_IN + MEM                      # 208
FINAL_OUT = H3 + MEM                         # 112
OUT_DIM = HIDDEN // 2                        # 16
HEAD_PAD = 128                               # packed output row: feat|emos|vals|0
NEG = -1e30                                  # softmax mask for padded lanes

# Bias-slab lane regions (all starts are multiples of 128 for aligned loads).
REG_G = 0            # (512) fused LSTM gate bias (bih + bhh, gate-grouped)
REG_A11 = 512        # (32)  att1_fc1 bias
REG_A12 = 640        # (256) att1_fc2 bias, -1e30 in padded lanes
REG_H1 = 896         # (128) [att2_fc1 | gamma1_fc1 | gamma2_fc1] bias
REG_H2 = 1024        # (128) [att2_fc2 | gamma1_fc2 | gamma2_fc2] bias
REG_O1 = 1152        # (32)  out_fc1 bias
REG_HEAD = 1280      # (128) folded head bias
NB_LANES = 1408


# --------------------------------- kernel -----------------------------------
def mfn_kernel(x_ref, wk48_ref, wk128_ref, wk256_ref, wk32_ref, wk16_ref,
               b_ref, out_ref):
    f32 = jnp.float32
    bf16 = jnp.bfloat16

    def dot(a, b):
        # bf16 MXU operands, f32 accumulation; element-wise math stays f32.
        return jnp.dot(a.astype(bf16), b, preferred_element_type=f32)

    # --- Hoisted input projection: ONE matmul for all SEQ steps -------------
    # gates_x[t*B:(t+1)*B] holds x_t @ W_ih (+ gate bias) for step t.
    gates_x = dot(x_ref[...], wk48_ref[...]) + b_ref[0:1, REG_G:REG_G + GATES_PAD]

    h = jnp.zeros((BATCH, HPAD), f32)
    c = jnp.zeros((BATCH, HPAD), f32)
    mem = jnp.zeros((BATCH, MEM), f32)

    # Fully unrolled recurrence (SEQ is small & static); weight refs are read
    # at their use sites each step (VMEM-resident, no long vreg live ranges).
    for t in range(SEQ):
        # Fused 3-LSTM gates; groups [i|f|g|o], each 128-lane aligned.
        gates = gates_x[t * BATCH:(t + 1) * BATCH, :] + dot(h, wk128_ref[:, 0:GATES_PAD])
        i_g = jax.nn.sigmoid(gates[:, 0 * HPAD:1 * HPAD])
        f_g = jax.nn.sigmoid(gates[:, 1 * HPAD:2 * HPAD])
        g_g = jnp.tanh(gates[:, 2 * HPAD:3 * HPAD])
        o_g = jax.nn.sigmoid(gates[:, 3 * HPAD:4 * HPAD])
        c_new = f_g * c + i_g * g_g                    # pad lanes stay exactly 0
        h_new = o_g * jnp.tanh(c_new)                  # pad lanes stay exactly 0

        # cStar = [prev_c | new_c] (two 128-aligned blocks; pads are 0).
        c_star = jnp.concatenate([c, c_new], axis=1)   # (B, 256)

        # Attention over cStar (padded logits carry a -1e30 bias).
        att_h = jax.nn.relu(dot(c_star, wk256_ref[:, HPAD:HPAD + HIDDEN])
                            + b_ref[:, REG_A11:REG_A11 + HIDDEN])
        logits = (dot(att_h, wk32_ref[:, 0:CSTAR_PAD])
                  + b_ref[:, REG_A12:REG_A12 + CSTAR_PAD])
        logits = logits - jnp.max(logits, axis=1, keepdims=True)
        e = jnp.exp(logits)
        inv = pl.reciprocal(jnp.sum(e, axis=1, keepdims=True), approx=True)
        attended = (e * inv) * c_star                  # pad lanes stay exactly 0

        # Fused att2/gamma1/gamma2 first layer: one (B,256)@(256,128) plus one
        # (B,16)@(16,128) -> hid = [att2_h | g1_h | g2_h | 0].
        hid = jax.nn.relu(dot(attended, wk256_ref[:, 0:HPAD])
                          + dot(mem, wk16_ref[:, 0:HPAD])
                          + b_ref[:, REG_H1:REG_H1 + HPAD])
        # Fused block-diagonal second layer -> [cHat_pre | g1_pre | g2_pre | 0].
        res2 = (dot(hid, wk128_ref[:, GATES_PAD:GATES_PAD + HPAD])
                + b_ref[:, REG_H2:REG_H2 + HPAD])
        c_hat = jnp.tanh(res2[:, 0:MEM])
        gamma1 = jax.nn.sigmoid(res2[:, MEM:2 * MEM])
        gamma2 = jax.nn.sigmoid(res2[:, 2 * MEM:3 * MEM])
        mem = gamma1 * mem + gamma2 * c_hat

        h, c = h_new, c_new

    # Epilogue: out_fc1 then the host-folded (out_fc2 ∘ [I | fc_out_1 | fc_out_2]).
    o_h = jax.nn.relu(
        dot(h, wk128_ref[:, GATES_PAD + HPAD:GATES_PAD + HPAD + HIDDEN])
        + dot(mem, wk16_ref[:, HPAD:HPAD + HIDDEN])
        + b_ref[:, REG_O1:REG_O1 + HIDDEN])
    out_ref[...] = (dot(o_h, wk32_ref[:, CSTAR_PAD:CSTAR_PAD + HEAD_PAD])
                    + b_ref[:, REG_HEAD:REG_HEAD + HEAD_PAD])


# ------------------------------ weight packing -------------------------------
def pack_weights(ws):
    """Repack raw (PyTorch-layout) weights into fused/padded bf16 slabs + bias slab."""
    (wih_l, whh_l, bih_l, bhh_l,
     wih_a, whh_a, bih_a, bhh_a,
     wih_v, whh_v, bih_v, bhh_v,
     w_a11, b_a11, w_a12, b_a12,
     w_a21, b_a21, w_a22, b_a22,
     w_g11, b_g11, w_g12, b_g12,
     w_g21, b_g21, w_g22, b_g22,
     w_o1, b_o1, w_o2, b_o2,
     w_f1, b_f1, w_f2, b_f2) = ws

    f32 = jnp.float32
    bf16 = jnp.bfloat16
    in_dims = (TEXT_DIM, AUDIO_DIM, VIDEO_DIM)
    row_off = (0, TEXT_DIM, TEXT_DIM + AUDIO_DIM)
    wihs = (wih_l, wih_a, wih_v)
    whhs = (whh_l, whh_a, whh_v)
    bsum = (bih_l + bhh_l, bih_a + bhh_a, bih_v + bhh_v)   # fold bih + bhh

    # Fused block-diagonal LSTM weights, gate-grouped & lane-padded to 512.
    w_ih = jnp.zeros((IN_ALL, GATES_PAD), f32)
    w_hh = jnp.zeros((HPAD, GATES_PAD), f32)
    b_g = jnp.zeros((1, GATES_PAD), f32)
    for m in range(3):
        r0, rn = row_off[m], in_dims[m]
        for g in range(4):                               # PyTorch order: i, f, g, o
            src = slice(g * HIDDEN, (g + 1) * HIDDEN)
            dst = slice(g * HPAD + m * HIDDEN, g * HPAD + (m + 1) * HIDDEN)
            w_ih = w_ih.at[r0:r0 + rn, dst].set(wihs[m][:, src])
            w_hh = w_hh.at[m * HIDDEN:(m + 1) * HIDDEN, dst].set(whhs[m][:, src])
            b_g = b_g.at[:, dst].set(bsum[m][:, src])

    # Map real cStar layout (192) onto padded layout (256): [0:96]->[0:96],
    # [96:192]->[128:224]; pad rows/cols are zero (or -1e30 for softmax bias).
    def pad_rows(w):
        out = jnp.zeros((CSTAR_PAD, w.shape[1]), f32)
        out = out.at[0:H3, :].set(w[0:H3, :])
        out = out.at[HPAD:HPAD + H3, :].set(w[H3:ATT_IN, :])
        return out

    def pad_cols(w, fill=0.0):
        out = jnp.full((w.shape[0], CSTAR_PAD), fill, f32)
        out = out.at[:, 0:H3].set(w[:, 0:H3])
        out = out.at[:, HPAD:HPAD + H3].set(w[:, H3:ATT_IN])
        return out

    wa11p = pad_rows(w_a11)                      # (256, 32)
    wa12p = pad_cols(w_a12)                      # (32, 256)
    ba12p = pad_cols(b_a12, fill=NEG)            # (1, 256); pads -> -1e30

    # Fused first layer (shared LHS = attended / mem): [att2 | gamma1 | gamma2 | 0].
    w_att = jnp.zeros((CSTAR_PAD, HPAD), f32)
    w_att = w_att.at[:, 0:HIDDEN].set(pad_rows(w_a21))
    w_att = w_att.at[:, HIDDEN:2 * HIDDEN].set(pad_rows(w_g11[:ATT_IN]))
    w_att = w_att.at[:, 2 * HIDDEN:3 * HIDDEN].set(pad_rows(w_g21[:ATT_IN]))

    w_mem = jnp.zeros((MEM, HPAD), f32)
    w_mem = w_mem.at[:, HIDDEN:2 * HIDDEN].set(w_g11[ATT_IN:])
    w_mem = w_mem.at[:, 2 * HIDDEN:3 * HIDDEN].set(w_g21[ATT_IN:])

    b_h1 = jnp.zeros((1, HPAD), f32)
    b_h1 = b_h1.at[:, 0:HIDDEN].set(b_a21)
    b_h1 = b_h1.at[:, HIDDEN:2 * HIDDEN].set(b_g11)
    b_h1 = b_h1.at[:, 2 * HIDDEN:3 * HIDDEN].set(b_g21)

    # Fused block-diagonal second layer -> [cHat_pre | g1_pre | g2_pre | 0].
    w2 = jnp.zeros((HPAD, HPAD), f32)
    w2 = w2.at[0:HIDDEN, 0:MEM].set(w_a22)
    w2 = w2.at[HIDDEN:2 * HIDDEN, MEM:2 * MEM].set(w_g12)
    w2 = w2.at[2 * HIDDEN:3 * HIDDEN, 2 * MEM:3 * MEM].set(w_g22)

    b_h2 = jnp.zeros((1, HPAD), f32)
    b_h2 = b_h2.at[:, 0:MEM].set(b_a22)
    b_h2 = b_h2.at[:, MEM:2 * MEM].set(b_g12)
    b_h2 = b_h2.at[:, 2 * MEM:3 * MEM].set(b_g22)

    # out_fc1 split: h part (padded-h rows) and mem part.
    w_o1h = jnp.zeros((HPAD, HIDDEN), f32).at[0:H3, :].set(w_o1[0:H3])
    w_o1m = w_o1[H3:FINAL_OUT]                   # (16, 32)

    # Folded head: out = o_h @ (w_o2 @ w_head) + (b_o2 @ w_head + b_head),
    # where w_head = [I | fc_out_1 | fc_out_2 | 0] -> lanes 0:16 are exact features.
    w_head = jnp.zeros((OUT_DIM, HEAD_PAD), f32)
    w_head = w_head.at[:, 0:OUT_DIM].set(jnp.eye(OUT_DIM, dtype=f32))
    w_head = w_head.at[:, OUT_DIM:OUT_DIM + OUT1].set(w_f1)
    w_head = w_head.at[:, OUT_DIM + OUT1:OUT_DIM + OUT1 + OUT2].set(w_f2)
    b_head = jnp.zeros((1, HEAD_PAD), f32)
    b_head = b_head.at[:, OUT_DIM:OUT_DIM + OUT1].set(b_f1)
    b_head = b_head.at[:, OUT_DIM + OUT1:OUT_DIM + OUT1 + OUT2].set(b_f2)
    w_fold = w_o1 @ jnp.zeros((HIDDEN, 1), f32) if False else (w_o2 @ w_head)  # (32,128)
    b_fold = b_o2 @ w_head + b_head                                            # (1,128)

    # ---- weight slabs, grouped by contraction width K, cast to bf16 --------
    wk48 = w_ih.astype(bf16)                                            # (48, 512)
    wk128 = jnp.concatenate([w_hh, w2, w_o1h], axis=1).astype(bf16)     # (128, 672)
    wk256 = jnp.concatenate([w_att, wa11p], axis=1).astype(bf16)        # (256, 160)
    wk32 = jnp.concatenate([wa12p, w_fold], axis=1).astype(bf16)        # (32, 384)
    wk16 = jnp.concatenate([w_mem, w_o1m], axis=1).astype(bf16)         # (16, 160)

    # ---- one f32 bias slab, pre-broadcast to BATCH rows, 128-aligned regions.
    bias = jnp.zeros((BATCH, NB_LANES), f32)

    def put(slab, off, b):
        w = b.shape[1]
        return slab.at[:, off:off + w].set(jnp.broadcast_to(b, (BATCH, w)))

    bias = put(bias, REG_G, b_g)
    bias = put(bias, REG_A11, b_a11)
    bias = put(bias, REG_A12, ba12p)
    bias = put(bias, REG_H1, b_h1)
    bias = put(bias, REG_H2, b_h2)
    bias = put(bias, REG_O1, b_o1)
    bias = put(bias, REG_HEAD, b_fold)

    return [wk48, wk128, wk256, wk32, wk16, bias]


# --------------------------------- wrapper ----------------------------------
def mfn_forward(texts, audios, videos, packed):
    """texts/audios/videos: (batch, seq, dim). packed: list from pack_weights."""
    # Concatenate modalities, go time-major, and flatten (seq, batch) so the
    # input projection can be hoisted to a single matmul inside the kernel.
    x_all = jnp.concatenate([texts, audios, videos], axis=-1)          # (B,SEQ,48)
    x2d = jnp.transpose(x_all, (1, 0, 2)).reshape(SEQ * BATCH, IN_ALL)  # (SEQ*B,48)

    n_in = 1 + len(packed)
    out = pl.pallas_call(
        mfn_kernel,
        out_shape=jax.ShapeDtypeStruct((BATCH, HEAD_PAD), jnp.float32),
        in_specs=[pl.BlockSpec(memory_space=pltpu.MemorySpace.VMEM)
                  for _ in range(n_in)],
        out_specs=pl.BlockSpec(memory_space=pltpu.MemorySpace.VMEM),
    )(x2d, *packed)

    features = out[:, :OUT_DIM]
    emos_out = out[:, OUT_DIM:OUT_DIM + OUT1]
    vals_out = out[:, OUT_DIM + OUT1:OUT_DIM + OUT1 + OUT2]
    interloss = jnp.zeros((), jnp.float32)
    return features, emos_out, vals_out, interloss


# ------------------------------ param init ----------------------------------
def init_weights(key):
    ws = []
    scale = 0.1

    def nxt():
        nonlocal key
        key, sub = jax.random.split(key)
        return sub

    def lstm(in_dim):
        # transposed relative to PyTorch: x @ W_ih_T, h @ W_hh_T ; gates i,f,g,o
        return [
            scale * jax.random.normal(nxt(), (in_dim, 4 * HIDDEN), jnp.float32),
            scale * jax.random.normal(nxt(), (HIDDEN, 4 * HIDDEN), jnp.float32),
            scale * jax.random.normal(nxt(), (1, 4 * HIDDEN), jnp.float32),
            scale * jax.random.normal(nxt(), (1, 4 * HIDDEN), jnp.float32),
        ]

    def linear(in_dim, out_dim):
        return [
            scale * jax.random.normal(nxt(), (in_dim, out_dim), jnp.float32),
            scale * jax.random.normal(nxt(), (1, out_dim), jnp.float32),
        ]

    ws += lstm(TEXT_DIM) + lstm(AUDIO_DIM) + lstm(VIDEO_DIM)
    ws += linear(ATT_IN, HIDDEN) + linear(HIDDEN, ATT_IN)        # att1
    ws += linear(ATT_IN, HIDDEN) + linear(HIDDEN, MEM)           # att2
    ws += linear(GAMMA_IN, HIDDEN) + linear(HIDDEN, MEM)         # gamma1
    ws += linear(GAMMA_IN, HIDDEN) + linear(HIDDEN, MEM)         # gamma2
    ws += linear(FINAL_OUT, HIDDEN) + linear(HIDDEN, OUT_DIM)    # out
    ws += linear(OUT_DIM, OUT1) + linear(OUT_DIM, OUT2)          # heads
    return ws


# ---------------------------- pure-JAX reference -----------------------------
def mfn_reference(texts, audios, videos, weights):
    (wih_l, whh_l, bih_l, bhh_l,
     wih_a, whh_a, bih_a, bhh_a,
     wih_v, whh_v, bih_v, bhh_v,
     w_a11, b_a11, w_a12, b_a12,
     w_a21, b_a21, w_a22, b_a22,
     w_g11, b_g11, w_g12, b_g12,
     w_g21, b_g21, w_g22, b_g22,
     w_o1, b_o1, w_o2, b_o2,
     w_f1, b_f1, w_f2, b_f2) = weights

    def lstm_cell(x, h, c, wih, whh, bih, bhh):
        g = x @ wih + h @ whh + bih + bhh
        i = jax.nn.sigmoid(g[:, :HIDDEN])
        f = jax.nn.sigmoid(g[:, HIDDEN:2 * HIDDEN])
        gg = jnp.tanh(g[:, 2 * HIDDEN:3 * HIDDEN])
        o = jax.nn.sigmoid(g[:, 3 * HIDDEN:])
        c_new = f * c + i * gg
        return o * jnp.tanh(c_new), c_new

    text_tm = jnp.transpose(texts, (1, 0, 2))
    audio_tm = jnp.transpose(audios, (1, 0, 2))
    video_tm = jnp.transpose(videos, (1, 0, 2))

    h_l = h_a = h_v = jnp.zeros((BATCH, HIDDEN), jnp.float32)
    c_l = c_a = c_v = jnp.zeros((BATCH, HIDDEN), jnp.float32)
    mem = jnp.zeros((BATCH, MEM), jnp.float32)

    for t in range(SEQ):
        p_l, p_a, p_v = c_l, c_a, c_v
        h_l, c_l = lstm_cell(text_tm[t], h_l, p_l, wih_l, whh_l, bih_l, bhh_l)
        h_a, c_a = lstm_cell(audio_tm[t], h_a, p_a, wih_a, whh_a, bih_a, bhh_a)
        h_v, c_v = lstm_cell(video_tm[t], h_v, p_v, wih_v, whh_v, bih_v, bhh_v)
        c_star = jnp.concatenate([p_l, p_a, p_v, c_l, c_a, c_v], axis=1)
        att = jax.nn.softmax(jax.nn.relu(c_star @ w_a11 + b_a11) @ w_a12 + b_a12, axis=1)
        attended = att * c_star
        c_hat = jnp.tanh(jax.nn.relu(attended @ w_a21 + b_a21) @ w_a22 + b_a22)
        both = jnp.concatenate([attended, mem], axis=1)
        g1 = jax.nn.sigmoid(jax.nn.relu(both @ w_g11 + b_g11) @ w_g12 + b_g12)
        g2 = jax.nn.sigmoid(jax.nn.relu(both @ w_g21 + b_g21) @ w_g22 + b_g22)
        mem = g1 * mem + g2 * c_hat

    last_hs = jnp.concatenate([h_l, h_a, h_v, mem], axis=1)
    features = jax.nn.relu(last_hs @ w_o1 + b_o1) @ w_o2 + b_o2
    return features, features @ w_f1 + b_f1, features @ w_f2 + b_f2


# ----------------------------------- main ------------------------------------
if __name__ == "__main__":
    key = jax.random.PRNGKey(0)
    k_t, k_a, k_v, k_w = jax.random.split(key, 4)

    texts = jax.random.normal(k_t, (BATCH, SEQ, TEXT_DIM), jnp.float32)
    audios = jax.random.normal(k_a, (BATCH, SEQ, AUDIO_DIM), jnp.float32)
    videos = jax.random.normal(k_v, (BATCH, SEQ, VIDEO_DIM), jnp.float32)

    raw_weights = init_weights(k_w)
    packed_weights = pack_weights(raw_weights)   # one-time host-side repacking

    fwd = jax.jit(mfn_forward)
    features, emos_out, vals_out, interloss = fwd(texts, audios, videos, packed_weights)
    jax.block_until_ready((features, emos_out, vals_out, interloss))

    # sanity check against pure-JAX f32 reference (tolerance covers the bf16
    # matmul operands and the approx reciprocal in the in-kernel softmax)
    f_ref, e_ref, v_ref = mfn_reference(texts, audios, videos, raw_weights)
    assert jnp.allclose(features, f_ref, atol=2e-2, rtol=2e-2)
    assert jnp.allclose(emos_out, e_ref, atol=2e-2, rtol=2e-2)
    assert jnp.allclose(vals_out, v_ref, atol=2e-2, rtol=2e-2)

    print("KERNEL_OK")
</pallas_src>

<mosaic_0001>
module attributes {stable_mosaic.version = 11 : i64} {
  func.func @mfn_kernel(%arg0: memref<24x48xf32, #tpu.memory_space<vmem>>, %arg1: memref<48x512xbf16, #tpu.memory_space<vmem>>, %arg2: memref<128x672xbf16, #tpu.memory_space<vmem>>, %arg3: memref<256x160xbf16, #tpu.memory_space<vmem>>, %arg4: memref<32x384xbf16, #tpu.memory_space<vmem>>, %arg5: memref<16x160xbf16, #tpu.memory_space<vmem>>, %arg6: memref<4x1408xf32, #tpu.memory_space<vmem>>, %arg7: memref<4x128xf32, #tpu.memory_space<vmem>>) attributes {dimension_semantics = [], scalar_prefetch = 0 : i64, scratch_operands = 0 : i64, tpu.core_type = #tpu.core_type<tc>} {
    %c0 = arith.constant 0 : index
    %c0_0 = arith.constant 0 : index
    %0 = vector.load %arg0[%c0, %c0_0] : memref<24x48xf32, #tpu.memory_space<vmem>>, vector<24x48xf32>
    %c0_1 = arith.constant 0 : index
    %c0_2 = arith.constant 0 : index
    %1 = vector.load %arg1[%c0_1, %c0_2] : memref<48x512xbf16, #tpu.memory_space<vmem>>, vector<48x512xbf16>
    %2 = arith.truncf %0 : vector<24x48xf32> to vector<24x48xbf16>
    %cst = arith.constant dense<0.000000e+00> : vector<24x512xf32>
    %3 = tpu.matmul %2, %1, %cst {dimension_numbers = #tpu.dot_dimension_numbers<[1], [0], [0], [1], [0, 0, 1, 1], [], []>} : vector<24x48xbf16>, vector<48x512xbf16>, vector<24x512xf32> -> vector<24x512xf32>
    %c0_3 = arith.constant 0 : index
    %c0_4 = arith.constant 0 : index
    %4 = vector.load %arg6[%c0_3, %c0_4] : memref<4x1408xf32, #tpu.memory_space<vmem>>, vector<1x512xf32>
    %5 = vector.broadcast %4 : vector<1x512xf32> to vector<24x512xf32>
    %6 = arith.addf %3, %5 : vector<24x512xf32>
    %cst_5 = arith.constant 0.000000e+00 : f32
    %7 = vector.broadcast %cst_5 : f32 to vector<4x128xf32>
    %cst_6 = arith.constant 0.000000e+00 : f32
    %8 = vector.broadcast %cst_6 : f32 to vector<4x128xf32>
    %cst_7 = arith.constant 0.000000e+00 : f32
    %9 = vector.broadcast %cst_7 : f32 to vector<4x16xf32>
    %10 = vector.extract_strided_slice %6 {offsets = [0, 0], sizes = [4, 512], strides = [1, 1]} : vector<24x512xf32> to vector<4x512xf32>
    %c0_8 = arith.constant 0 : index
    %c0_9 = arith.constant 0 : index
    %11 = vector.load %arg2[%c0_8, %c0_9] : memref<128x672xbf16, #tpu.memory_space<vmem>>, vector<128x512xbf16>
    %12 = arith.truncf %7 : vector<4x128xf32> to vector<4x128xbf16>
    %cst_10 = arith.constant dense<0.000000e+00> : vector<4x512xf32>
    %13 = tpu.matmul %12, %11, %cst_10 {dimension_numbers = #tpu.dot_dimension_numbers<[1], [0], [0], [1], [0, 0, 1, 1], [], []>} : vector<4x128xbf16>, vector<128x512xbf16>, vector<4x512xf32> -> vector<4x512xf32>
    %14 = arith.addf %10, %13 : vector<4x512xf32>
    %15 = vector.extract_strided_slice %14 {offsets = [0, 0], sizes = [4, 128], strides = [1, 1]} : vector<4x512xf32> to vector<4x128xf32>
    %16 = arith.negf %15 : vector<4x128xf32>
    %17 = math.exp %16 : vector<4x128xf32>
    %cst_11 = arith.constant 1.000000e+00 : f32
    %18 = vector.broadcast %cst_11 : f32 to vector<4x128xf32>
    %19 = arith.addf %18, %17 : vector<4x128xf32>
    %20 = arith.divf %18, %19 : vector<4x128xf32>
    %21 = vector.extract_strided_slice %14 {offsets = [0, 128], sizes = [4, 128], strides = [1, 1]} : vector<4x512xf32> to vector<4x128xf32>
    %22 = arith.negf %21 : vector<4x128xf32>
    %23 = math.exp %22 : vector<4x128xf32>
    %cst_12 = arith.constant 1.000000e+00 : f32
    %24 = vector.broadcast %cst_12 : f32 to vector<4x128xf32>
    %25 = arith.addf %24, %23 : vector<4x128xf32>
    %26 = arith.divf %24, %25 : vector<4x128xf32>
    %27 = vector.extract_strided_slice %14 {offsets = [0, 256], sizes = [4, 128], strides = [1, 1]} : vector<4x512xf32> to vector<4x128xf32>
    %28 = math.tanh %27 : vector<4x128xf32>
    %29 = vector.extract_strided_slice %14 {offsets = [0, 384], sizes = [4, 128], strides = [1, 1]} : vector<4x512xf32> to vector<4x128xf32>
    %30 = arith.negf %29 : vector<4x128xf32>
    %31 = math.exp %30 : vector<4x128xf32>
    %cst_13 = arith.constant 1.000000e+00 : f32
    %32 = vector.broadcast %cst_13 : f32 to vector<4x128xf32>
    %33 = arith.addf %32, %31 : vector<4x128xf32>
    %34 = arith.divf %32, %33 : vector<4x128xf32>
    %35 = arith.mulf %26, %8 : vector<4x128xf32>
    %36 = arith.mulf %20, %28 : vector<4x128xf32>
    %37 = arith.addf %35, %36 : vector<4x128xf32>
    %38 = math.tanh %37 : vector<4x128xf32>
    %39 = arith.mulf %34, %38 : vector<4x128xf32>
    %40 = tpu.concatenate %8, %37 in 1 : vector<4x128xf32>, vector<4x128xf32> -> vector<4x256xf32>
    %c0_14 = arith.constant 0 : index
    %c128 = arith.constant 128 : index
    %41 = vector.load %arg3[%c0_14, %c128] : memref<256x160xbf16, #tpu.memory_space<vmem>>, vector<256x32xbf16>
    %42 = arith.truncf %40 : vector<4x256xf32> to vector<4x256xbf16>
    %cst_15 = arith.constant dense<0.000000e+00> : vector<4x32xf32>
    %43 = tpu.matmul %42, %41, %cst_15 {dimension_numbers = #tpu.dot_dimension_numbers<[1], [0], [0], [1], [0, 0, 1, 1], [], []>} : vector<4x256xbf16>, vector<256x32xbf16>, vector<4x32xf32> -> vector<4x32xf32>
    %c0_16 = arith.constant 0 : index
    %c512 = arith.constant 512 : index
    %44 = vector.load %arg6[%c0_16, %c512] : memref<4x1408xf32, #tpu.memory_space<vmem>>, vector<4x32xf32>
    %45 = arith.addf %43, %44 : vector<4x32xf32>
    %cst_17 = arith.constant 0.000000e+00 : f32
    %46 = vector.broadcast %cst_17 : f32 to vector<4x32xf32>
    %47 = arith.maximumf %45, %46 : vector<4x32xf32>
    %c0_18 = arith.constant 0 : index
    %c0_19 = arith.constant 0 : index
    %48 = vector.load %arg4[%c0_18, %c0_19] : memref<32x384xbf16, #tpu.memory_space<vmem>>, vector<32x256xbf16>
    %49 = arith.truncf %47 : vector<4x32xf32> to vector<4x32xbf16>
    %cst_20 = arith.constant dense<0.000000e+00> : vector<4x256xf32>
    %50 = tpu.matmul %49, %48, %cst_20 {dimension_numbers = #tpu.dot_dimension_numbers<[1], [0], [0], [1], [0, 0, 1, 1], [], []>} : vector<4x32xbf16>, vector<32x256xbf16>, vector<4x256xf32> -> vector<4x256xf32>
    %c0_21 = arith.constant 0 : index
    %c640 = arith.constant 640 : index
    %51 = vector.load %arg6[%c0_21, %c640] : memref<4x1408xf32, #tpu.memory_space<vmem>>, vector<4x256xf32>
    %52 = arith.addf %50, %51 : vector<4x256xf32>
    %cst_22 = arith.constant dense<0xFF800000> : vector<4xf32>
    %53 = vector.multi_reduction <maximumf>, %52, %cst_22 [1] : vector<4x256xf32> to vector<4xf32>
    %54 = vector.shape_cast %53 : vector<4xf32> to vector<4x1xf32>
    %55 = vector.broadcast %54 : vector<4x1xf32> to vector<4x256xf32>
    %56 = arith.subf %52, %55 : vector<4x256xf32>
    %57 = math.exp %56 : vector<4x256xf32>
    %cst_23 = arith.constant dense<0.000000e+00> : vector<4xf32>
    %58 = vector.multi_reduction <add>, %57, %cst_23 [1] : vector<4x256xf32> to vector<4xf32>
    %59 = vector.shape_cast %58 : vector<4xf32> to vector<4x1xf32>
    %60 = tpu.reciprocal %59 {approx = true} : vector<4x1xf32> -> vector<4x1xf32>
    %61 = vector.broadcast %60 : vector<4x1xf32> to vector<4x256xf32>
    %62 = arith.mulf %57, %61 : vector<4x256xf32>
    %63 = arith.mulf %62, %40 : vector<4x256xf32>
    %c0_24 = arith.constant 0 : index
    %c0_25 = arith.constant 0 : index
    %64 = vector.load %arg3[%c0_24, %c0_25] : memref<256x160xbf16, #tpu.memory_space<vmem>>, vector<256x128xbf16>
    %65 = arith.truncf %63 : vector<4x256xf32> to vector<4x256xbf16>
    %cst_26 = arith.constant dense<0.000000e+00> : vector<4x128xf32>
    %66 = tpu.matmul %65, %64, %cst_26 {dimension_numbers = #tpu.dot_dimension_numbers<[1], [0], [0], [1], [0, 0, 1, 1], [], []>} : vector<4x256xbf16>, vector<256x128xbf16>, vector<4x128xf32> -> vector<4x128xf32>
    %c0_27 = arith.constant 0 : index
    %c0_28 = arith.constant 0 : index
    %67 = vector.load %arg5[%c0_27, %c0_28] : memref<16x160xbf16, #tpu.memory_space<vmem>>, vector<16x128xbf16>
    %68 = arith.truncf %9 : vector<4x16xf32> to vector<4x16xbf16>
    %cst_29 = arith.constant dense<0.000000e+00> : vector<4x128xf32>
    %69 = tpu.matmul %68, %67, %cst_29 {dimension_numbers = #tpu.dot_dimension_numbers<[1], [0], [0], [1], [0, 0, 1, 1], [], []>} : vector<4x16xbf16>, vector<16x128xbf16>, vector<4x128xf32> -> vector<4x128xf32>
    %70 = arith.addf %66, %69 : vector<4x128xf32>
    %c0_30 = arith.constant 0 : index
    %c896 = arith.constant 896 : index
    %71 = vector.load %arg6[%c0_30, %c896] : memref<4x1408xf32, #tpu.memory_space<vmem>>, vector<4x128xf32>
    %72 = arith.addf %70, %71 : vector<4x128xf32>
    %cst_31 = arith.constant 0.000000e+00 : f32
    %73 = vector.broadcast %cst_31 : f32 to vector<4x128xf32>
    %74 = arith.maximumf %72, %73 : vector<4x128xf32>
    %c0_32 = arith.constant 0 : index
    %c512_33 = arith.constant 512 : index
    %75 = vector.load %arg2[%c0_32, %c512_33] : memref<128x672xbf16, #tpu.memory_space<vmem>>, vector<128x128xbf16>
    %76 = arith.truncf %74 : vector<4x128xf32> to vector<4x128xbf16>
    %cst_34 = arith.constant dense<0.000000e+00> : vector<4x128xf32>
    %77 = tpu.matmul %76, %75, %cst_34 {dimension_numbers = #tpu.dot_dimension_numbers<[1], [0], [0], [1], [0, 0, 1, 1], [], []>} : vector<4x128xbf16>, vector<128x128xbf16>, vector<4x128xf32> -> vector<4x128xf32>
    %c0_35 = arith.constant 0 : index
    %c1024 = arith.constant 1024 : index
    %78 = vector.load %arg6[%c0_35, %c1024] : memref<4x1408xf32, #tpu.memory_space<vmem>>, vector<4x128xf32>
    %79 = arith.addf %77, %78 : vector<4x128xf32>
    %80 = vector.extract_strided_slice %79 {offsets = [0, 0], sizes = [4, 16], strides = [1, 1]} : vector<4x128xf32> to vector<4x16xf32>
    %81 = math.tanh %80 : vector<4x16xf32>
    %82 = vector.extract_strided_slice %79 {offsets = [0, 16], sizes = [4, 16], strides = [1, 1]} : vector<4x128xf32> to vector<4x16xf32>
    %83 = arith.negf %82 : vector<4x16xf32>
    %84 = math.exp %83 : vector<4x16xf32>
    %cst_36 = arith.constant 1.000000e+00 : f32
    %85 = vector.broadcast %cst_36 : f32 to vector<4x16xf32>
    %86 = arith.addf %85, %84 : vector<4x16xf32>
    %87 = arith.divf %85, %86 : vector<4x16xf32>
    %88 = vector.extract_strided_slice %79 {offsets = [0, 32], sizes = [4, 16], strides = [1, 1]} : vector<4x128xf32> to vector<4x16xf32>
    %89 = arith.negf %88 : vector<4x16xf32>
    %90 = math.exp %89 : vector<4x16xf32>
    %cst_37 = arith.constant 1.000000e+00 : f32
    %91 = vector.broadcast %cst_37 : f32 to vector<4x16xf32>
    %92 = arith.addf %91, %90 : vector<4x16xf32>
    %93 = arith.divf %91, %92 : vector<4x16xf32>
    %94 = arith.mulf %87, %9 : vector<4x16xf32>
    %95 = arith.mulf %93, %81 : vector<4x16xf32>
    %96 = arith.addf %94, %95 : vector<4x16xf32>
    %97 = vector.extract_strided_slice %6 {offsets = [4, 0], sizes = [4, 512], strides = [1, 1]} : vector<24x512xf32> to vector<4x512xf32>
    %c0_38 = arith.constant 0 : index
    %c0_39 = arith.constant 0 : index
    %98 = vector.load %arg2[%c0_38, %c0_39] : memref<128x672xbf16, #tpu.memory_space<vmem>>, vector<128x512xbf16>
    %99 = arith.truncf %39 : vector<4x128xf32> to vector<4x128xbf16>
    %cst_40 = arith.constant dense<0.000000e+00> : vector<4x512xf32>
    %100 = tpu.matmul %99, %98, %cst_40 {dimension_numbers = #tpu.dot_dimension_numbers<[1], [0], [0], [1], [0, 0, 1, 1], [], []>} : vector<4x128xbf16>, vector<128x512xbf16>, vector<4x512xf32> -> vector<4x512xf32>
    %101 = arith.addf %97, %100 : vector<4x512xf32>
    %102 = vector.extract_strided_slice %101 {offsets = [0, 0], sizes = [4, 128], strides = [1, 1]} : vector<4x512xf32> to vector<4x128xf32>
    %103 = arith.negf %102 : vector<4x128xf32>
    %104 = math.exp %103 : vector<4x128xf32>
    %cst_41 = arith.constant 1.000000e+00 : f32
    %105 = vector.broadcast %cst_41 : f32 to vector<4x128xf32>
    %106 = arith.addf %105, %104 : vector<4x128xf32>
    %107 = arith.divf %105, %106 : vector<4x128xf32>
    %108 = vector.extract_strided_slice %101 {offsets = [0, 128], sizes = [4, 128], strides = [1, 1]} : vector<4x512xf32> to vector<4x128xf32>
    %109 = arith.negf %108 : vector<4x128xf32>
    %110 = math.exp %109 : vector<4x128xf32>
    %cst_42 = arith.constant 1.000000e+00 : f32
    %111 = vector.broadcast %cst_42 : f32 to vector<4x128xf32>
    %112 = arith.addf %111, %110 : vector<4x128xf32>
    %113 = arith.divf %111, %112 : vector<4x128xf32>
    %114 = vector.extract_strided_slice %101 {offsets = [0, 256], sizes = [4, 128], strides = [1, 1]} : vector<4x512xf32> to vector<4x128xf32>
    %115 = math.tanh %114 : vector<4x128xf32>
    %116 = vector.extract_strided_slice %101 {offsets = [0, 384], sizes = [4, 128], strides = [1, 1]} : vector<4x512xf32> to vector<4x128xf32>
    %117 = arith.negf %116 : vector<4x128xf32>
    %118 = math.exp %117 : vector<4x128xf32>
    %cst_43 = arith.constant 1.000000e+00 : f32
    %119 = vector.broadcast %cst_43 : f32 to vector<4x128xf32>
    %120 = arith.addf %119, %118 : vector<4x128xf32>
    %121 = arith.divf %119, %120 : vector<4x128xf32>
    %122 = arith.mulf %113, %37 : vector<4x128xf32>
    %123 = arith.mulf %107, %115 : vector<4x128xf32>
    %124 = arith.addf %122, %123 : vector<4x128xf32>
    %125 = math.tanh %124 : vector<4x128xf32>
    %126 = arith.mulf %121, %125 : vector<4x128xf32>
    %127 = tpu.concatenate %37, %124 in 1 : vector<4x128xf32>, vector<4x128xf32> -> vector<4x256xf32>
    %c0_44 = arith.constant 0 : index
    %c128_45 = arith.constant 128 : index
    %128 = vector.load %arg3[%c0_44, %c128_45] : memref<256x160xbf16, #tpu.memory_space<vmem>>, vector<256x32xbf16>
    %129 = arith.truncf %127 : vector<4x256xf32> to vector<4x256xbf16>
    %cst_46 = arith.constant dense<0.000000e+00> : vector<4x32xf32>
    %130 = tpu.matmul %129, %128, %cst_46 {dimension_numbers = #tpu.dot_dimension_numbers<[1], [0], [0], [1], [0, 0, 1, 1], [], []>} : vector<4x256xbf16>, vector<256x32xbf16>, vector<4x32xf32> -> vector<4x32xf32>
    %c0_47 = arith.constant 0 : index
    %c512_48 = arith.constant 512 : index
    %131 = vector.load %arg6[%c0_47, %c512_48] : memref<4x1408xf32, #tpu.memory_space<vmem>>, vector<4x32xf32>
    %132 = arith.addf %130, %131 : vector<4x32xf32>
    %cst_49 = arith.constant 0.000000e+00 : f32
    %133 = vector.broadcast %cst_49 : f32 to vector<4x32xf32>
    %134 = arith.maximumf %132, %133 : vector<4x32xf32>
    %c0_50 = arith.constant 0 : index
    %c0_51 = arith.constant 0 : index
    %135 = vector.load %arg4[%c0_50, %c0_51] : memref<32x384xbf16, #tpu.memory_space<vmem>>, vector<32x256xbf16>
    %136 = arith.truncf %134 : vector<4x32xf32> to vector<4x32xbf16>
    %cst_52 = arith.constant dense<0.000000e+00> : vector<4x256xf32>
    %137 = tpu.matmul %136, %135, %cst_52 {dimension_numbers = #tpu.dot_dimension_numbers<[1], [0], [0], [1], [0, 0, 1, 1], [], []>} : vector<4x32xbf16>, vector<32x256xbf16>, vector<4x256xf32> -> vector<4x256xf32>
    %c0_53 = arith.constant 0 : index
    %c640_54 = arith.constant 640 : index
    %138 = vector.load %arg6[%c0_53, %c640_54] : memref<4x1408xf32, #tpu.memory_space<vmem>>, vector<4x256xf32>
    %139 = arith.addf %137, %138 : vector<4x256xf32>
    %cst_55 = arith.constant dense<0xFF800000> : vector<4xf32>
    %140 = vector.multi_reduction <maximumf>, %139, %cst_55 [1] : vector<4x256xf32> to vector<4xf32>
    %141 = vector.shape_cast %140 : vector<4xf32> to vector<4x1xf32>
    %142 = vector.broadcast %141 : vector<4x1xf32> to vector<4x256xf32>
    %143 = arith.subf %139, %142 : vector<4x256xf32>
    %144 = math.exp %143 : vector<4x256xf32>
    %cst_56 = arith.constant dense<0.000000e+00> : vector<4xf32>
    %145 = vector.multi_reduction <add>, %144, %cst_56 [1] : vector<4x256xf32> to vector<4xf32>
    %146 = vector.shape_cast %145 : vector<4xf32> to vector<4x1xf32>
    %147 = tpu.reciprocal %146 {approx = true} : vector<4x1xf32> -> vector<4x1xf32>
    %148 = vector.broadcast %147 : vector<4x1xf32> to vector<4x256xf32>
    %149 = arith.mulf %144, %148 : vector<4x256xf32>
    %150 = arith.mulf %149, %127 : vector<4x256xf32>
    %c0_57 = arith.constant 0 : index
    %c0_58 = arith.constant 0 : index
    %151 = vector.load %arg3[%c0_57, %c0_58] : memref<256x160xbf16, #tpu.memory_space<vmem>>, vector<256x128xbf16>
    %152 = arith.truncf %150 : vector<4x256xf32> to vector<4x256xbf16>
    %cst_59 = arith.constant dense<0.000000e+00> : vector<4x128xf32>
    %153 = tpu.matmul %152, %151, %cst_59 {dimension_numbers = #tpu.dot_dimension_numbers<[1], [0], [0], [1], [0, 0, 1, 1], [], []>} : vector<4x256xbf16>, vector<256x128xbf16>, vector<4x128xf32> -> vector<4x128xf32>
    %c0_60 = arith.constant 0 : index
    %c0_61 = arith.constant 0 : index
    %154 = vector.load %arg5[%c0_60, %c0_61] : memref<16x160xbf16, #tpu.memory_space<vmem>>, vector<16x128xbf16>
    %155 = arith.truncf %96 : vector<4x16xf32> to vector<4x16xbf16>
    %cst_62 = arith.constant dense<0.000000e+00> : vector<4x128xf32>
    %156 = tpu.matmul %155, %154, %cst_62 {dimension_numbers = #tpu.dot_dimension_numbers<[1], [0], [0], [1], [0, 0, 1, 1], [], []>} : vector<4x16xbf16>, vector<16x128xbf16>, vector<4x128xf32> -> vector<4x128xf32>
    %157 = arith.addf %153, %156 : vector<4x128xf32>
    %c0_63 = arith.constant 0 : index
    %c896_64 = arith.constant 896 : index
    %158 = vector.load %arg6[%c0_63, %c896_64] : memref<4x1408xf32, #tpu.memory_space<vmem>>, vector<4x128xf32>
    %159 = arith.addf %157, %158 : vector<4x128xf32>
    %cst_65 = arith.constant 0.000000e+00 : f32
    %160 = vector.broadcast %cst_65 : f32 to vector<4x128xf32>
    %161 = arith.maximumf %159, %160 : vector<4x128xf32>
    %c0_66 = arith.constant 0 : index
    %c512_67 = arith.constant 512 : index
    %162 = vector.load %arg2[%c0_66, %c512_67] : memref<128x672xbf16, #tpu.memory_space<vmem>>, vector<128x128xbf16>
    %163 = arith.truncf %161 : vector<4x128xf32> to vector<4x128xbf16>
    %cst_68 = arith.constant dense<0.000000e+00> : vector<4x128xf32>
    %164 = tpu.matmul %163, %162, %cst_68 {dimension_numbers = #tpu.dot_dimension_numbers<[1], [0], [0], [1], [0, 0, 1, 1], [], []>} : vector<4x128xbf16>, vector<128x128xbf16>, vector<4x128xf32> -> vector<4x128xf32>
    %c0_69 = arith.constant 0 : index
    %c1024_70 = arith.constant 1024 : index
    %165 = vector.load %arg6[%c0_69, %c1024_70] : memref<4x1408xf32, #tpu.memory_space<vmem>>, vector<4x128xf32>
    %166 = arith.addf %164, %165 : vector<4x128xf32>
    %167 = vector.extract_strided_slice %166 {offsets = [0, 0], sizes = [4, 16], strides = [1, 1]} : vector<4x128xf32> to vector<4x16xf32>
    %168 = math.tanh %167 : vector<4x16xf32>
    %169 = vector.extract_strided_slice %166 {offsets = [0, 16], sizes = [4, 16], strides = [1, 1]} : vector<4x128xf32> to vector<4x16xf32>
    %170 = arith.negf %169 : vector<4x16xf32>
    %171 = math.exp %170 : vector<4x16xf32>
    %cst_71 = arith.constant 1.000000e+00 : f32
    %172 = vector.broadcast %cst_71 : f32 to vector<4x16xf32>
    %173 = arith.addf %172, %171 : vector<4x16xf32>
    %174 = arith.divf %172, %173 : vector<4x16xf32>
    %175 = vector.extract_strided_slice %166 {offsets = [0, 32], sizes = [4, 16], strides = [1, 1]} : vector<4x128xf32> to vector<4x16xf32>
    %176 = arith.negf %175 : vector<4x16xf32>
    %177 = math.exp %176 : vector<4x16xf32>
    %cst_72 = arith.constant 1.000000e+00 : f32
    %178 = vector.broadcast %cst_72 : f32 to vector<4x16xf32>
    %179 = arith.addf %178, %177 : vector<4x16xf32>
    %180 = arith.divf %178, %179 : vector<4x16xf32>
    %181 = arith.mulf %174, %96 : vector<4x16xf32>
    %182 = arith.mulf %180, %168 : vector<4x16xf32>
    %183 = arith.addf %181, %182 : vector<4x16xf32>
    %184 = vector.extract_strided_slice %6 {offsets = [8, 0], sizes = [4, 512], strides = [1, 1]} : vector<24x512xf32> to vector<4x512xf32>
    %c0_73 = arith.constant 0 : index
    %c0_74 = arith.constant 0 : index
    %185 = vector.load %arg2[%c0_73, %c0_74] : memref<128x672xbf16, #tpu.memory_space<vmem>>, vector<128x512xbf16>
    %186 = arith.truncf %126 : vector<4x128xf32> to vector<4x128xbf16>
    %cst_75 = arith.constant dense<0.000000e+00> : vector<4x512xf32>
    %187 = tpu.matmul %186, %185, %cst_75 {dimension_numbers = #tpu.dot_dimension_numbers<[1], [0], [0], [1], [0, 0, 1, 1], [], []>} : vector<4x128xbf16>, vector<128x512xbf16>, vector<4x512xf32> -> vector<4x512xf32>
    %188 = arith.addf %184, %187 : vector<4x512xf32>
    %189 = vector.extract_strided_slice %188 {offsets = [0, 0], sizes = [4, 128], strides = [1, 1]} : vector<4x512xf32> to vector<4x128xf32>
    %190 = arith.negf %189 : vector<4x128xf32>
    %191 = math.exp %190 : vector<4x128xf32>
    %cst_76 = arith.constant 1.000000e+00 : f32
    %192 = vector.broadcast %cst_76 : f32 to vector<4x128xf32>
    %193 = arith.addf %192, %191 : vector<4x128xf32>
    %194 = arith.divf %192, %193 : vector<4x128xf32>
    %195 = vector.extract_strided_slice %188 {offsets = [0, 128], sizes = [4, 128], strides = [1, 1]} : vector<4x512xf32> to vector<4x128xf32>
    %196 = arith.negf %195 : vector<4x128xf32>
    %197 = math.exp %196 : vector<4x128xf32>
    %cst_77 = arith.constant 1.000000e+00 : f32
    %198 = vector.broadcast %cst_77 : f32 to vector<4x128xf32>
    %199 = arith.addf %198, %197 : vector<4x128xf32>
    %200 = arith.divf %198, %199 : vector<4x128xf32>
    %201 = vector.extract_strided_slice %188 {offsets = [0, 256], sizes = [4, 128], strides = [1, 1]} : vector<4x512xf32> to vector<4x128xf32>
    %202 = math.tanh %201 : vector<4x128xf32>
    %203 = vector.extract_strided_slice %188 {offsets = [0, 384], sizes = [4, 128], strides = [1, 1]} : vector<4x512xf32> to vector<4x128xf32>
    %204 = arith.negf %203 : vector<4x128xf32>
    %205 = math.exp %204 : vector<4x128xf32>
    %cst_78 = arith.constant 1.000000e+00 : f32
    %206 = vector.broadcast %cst_78 : f32 to vector<4x128xf32>
    %207 = arith.addf %206, %205 : vector<4x128xf32>
    %208 = arith.divf %206, %207 : vector<4x128xf32>
    %209 = arith.mulf %200, %124 : vector<4x128xf32>
    %210 = arith.mulf %194, %202 : vector<4x128xf32>
    %211 = arith.addf %209, %210 : vector<4x128xf32>
    %212 = math.tanh %211 : vector<4x128xf32>
    %213 = arith.mulf %208, %212 : vector<4x128xf32>
    %214 = tpu.concatenate %124, %211 in 1 : vector<4x128xf32>, vector<4x128xf32> -> vector<4x256xf32>
    %c0_79 = arith.constant 0 : index
    %c128_80 = arith.constant 128 : index
    %215 = vector.load %arg3[%c0_79, %c128_80] : memref<256x160xbf16, #tpu.memory_space<vmem>>, vector<256x32xbf16>
    %216 = arith.truncf %214 : vector<4x256xf32> to vector<4x256xbf16>
    %cst_81 = arith.constant dense<0.000000e+00> : vector<4x32xf32>
    %217 = tpu.matmul %216, %215, %cst_81 {dimension_numbers = #tpu.dot_dimension_numbers<[1], [0], [0], [1], [0, 0, 1, 1], [], []>} : vector<4x256xbf16>, vector<256x32xbf16>, vector<4x32xf32> -> vector<4x32xf32>
    %c0_82 = arith.constant 0 : index
    %c512_83 = arith.constant 512 : index
    %218 = vector.load %arg6[%c0_82, %c512_83] : memref<4x1408xf32, #tpu.memory_space<vmem>>, vector<4x32xf32>
    %219 = arith.addf %217, %218 : vector<4x32xf32>
    %cst_84 = arith.constant 0.000000e+00 : f32
    %220 = vector.broadcast %cst_84 : f32 to vector<4x32xf32>
    %221 = arith.maximumf %219, %220 : vector<4x32xf32>
    %c0_85 = arith.constant 0 : index
    %c0_86 = arith.constant 0 : index
    %222 = vector.load %arg4[%c0_85, %c0_86] : memref<32x384xbf16, #tpu.memory_space<vmem>>, vector<32x256xbf16>
    %223 = arith.truncf %221 : vector<4x32xf32> to vector<4x32xbf16>
    %cst_87 = arith.constant dense<0.000000e+00> : vector<4x256xf32>
    %224 = tpu.matmul %223, %222, %cst_87 {dimension_numbers = #tpu.dot_dimension_numbers<[1], [0], [0], [1], [0, 0, 1, 1], [], []>} : vector<4x32xbf16>, vector<32x256xbf16>, vector<4x256xf32> -> vector<4x256xf32>
    %c0_88 = arith.constant 0 : index
    %c640_89 = arith.constant 640 : index
    %225 = vector.load %arg6[%c0_88, %c640_89] : memref<4x1408xf32, #tpu.memory_space<vmem>>, vector<4x256xf32>
    %226 = arith.addf %224, %225 : vector<4x256xf32>
    %cst_90 = arith.constant dense<0xFF800000> : vector<4xf32>
    %227 = vector.multi_reduction <maximumf>, %226, %cst_90 [1] : vector<4x256xf32> to vector<4xf32>
    %228 = vector.shape_cast %227 : vector<4xf32> to vector<4x1xf32>
    %229 = vector.broadcast %228 : vector<4x1xf32> to vector<4x256xf32>
    %230 = arith.subf %226, %229 : vector<4x256xf32>
    %231 = math.exp %230 : vector<4x256xf32>
    %cst_91 = arith.constant dense<0.000000e+00> : vector<4xf32>
    %232 = vector.multi_reduction <add>, %231, %cst_91 [1] : vector<4x256xf32> to vector<4xf32>
    %233 = vector.shape_cast %232 : vector<4xf32> to vector<4x1xf32>
    %234 = tpu.reciprocal %233 {approx = true} : vector<4x1xf32> -> vector<4x1xf32>
    %235 = vector.broadcast %234 : vector<4x1xf32> to vector<4x256xf32>
    %236 = arith.mulf %231, %235 : vector<4x256xf32>
    %237 = arith.mulf %236, %214 : vector<4x256xf32>
    %c0_92 = arith.constant 0 : index
    %c0_93 = arith.constant 0 : index
    %238 = vector.load %arg3[%c0_92, %c0_93] : memref<256x160xbf16, #tpu.memory_space<vmem>>, vector<256x128xbf16>
    %239 = arith.truncf %237 : vector<4x256xf32> to vector<4x256xbf16>
    %cst_94 = arith.constant dense<0.000000e+00> : vector<4x128xf32>
    %240 = tpu.matmul %239, %238, %cst_94 {dimension_numbers = #tpu.dot_dimension_numbers<[1], [0], [0], [1], [0, 0, 1, 1], [], []>} : vector<4x256xbf16>, vector<256x128xbf16>, vector<4x128xf32> -> vector<4x128xf32>
    %c0_95 = arith.constant 0 : index
    %c0_96 = arith.constant 0 : index
    %241 = vector.load %arg5[%c0_95, %c0_96] : memref<16x160xbf16, #tpu.memory_space<vmem>>, vector<16x128xbf16>
    %242 = arith.truncf %183 : vector<4x16xf32> to vector<4x16xbf16>
    %cst_97 = arith.constant dense<0.000000e+00> : vector<4x128xf32>
    %243 = tpu.matmul %242, %241, %cst_97 {dimension_numbers = #tpu.dot_dimension_numbers<[1], [0], [0], [1], [0, 0, 1, 1], [], []>} : vector<4x16xbf16>, vector<16x128xbf16>, vector<4x128xf32> -> vector<4x128xf32>
    %244 = arith.addf %240, %243 : vector<4x128xf32>
    %c0_98 = arith.constant 0 : index
    %c896_99 = arith.constant 896 : index
    %245 = vector.load %arg6[%c0_98, %c896_99] : memref<4x1408xf32, #tpu.memory_space<vmem>>, vector<4x128xf32>
    %246 = arith.addf %244, %245 : vector<4x128xf32>
    %cst_100 = arith.constant 0.000000e+00 : f32
    %247 = vector.broadcast %cst_100 : f32 to vector<4x128xf32>
    %248 = arith.maximumf %246, %247 : vector<4x128xf32>
    %c0_101 = arith.constant 0 : index
    %c512_102 = arith.constant 512 : index
    %249 = vector.load %arg2[%c0_101, %c512_102] : memref<128x672xbf16, #tpu.memory_space<vmem>>, vector<128x128xbf16>
    %250 = arith.truncf %248 : vector<4x128xf32> to vector<4x128xbf16>
    %cst_103 = arith.constant dense<0.000000e+00> : vector<4x128xf32>
    %251 = tpu.matmul %250, %249, %cst_103 {dimension_numbers = #tpu.dot_dimension_numbers<[1], [0], [0], [1], [0, 0, 1, 1], [], []>} : vector<4x128xbf16>, vector<128x128xbf16>, vector<4x128xf32> -> vector<4x128xf32>
    %c0_104 = arith.constant 0 : index
    %c1024_105 = arith.constant 1024 : index
    %252 = vector.load %arg6[%c0_104, %c1024_105] : memref<4x1408xf32, #tpu.memory_space<vmem>>, vector<4x128xf32>
    %253 = arith.addf %251, %252 : vector<4x128xf32>
    %254 = vector.extract_strided_slice %253 {offsets = [0, 0], sizes = [4, 16], strides = [1, 1]} : vector<4x128xf32> to vector<4x16xf32>
    %255 = math.tanh %254 : vector<4x16xf32>
    %256 = vector.extract_strided_slice %253 {offsets = [0, 16], sizes = [4, 16], strides = [1, 1]} : vector<4x128xf32> to vector<4x16xf32>
    %257 = arith.negf %256 : vector<4x16xf32>
    %258 = math.exp %257 : vector<4x16xf32>
    %cst_106 = arith.constant 1.000000e+00 : f32
    %259 = vector.broadcast %cst_106 : f32 to vector<4x16xf32>
    %260 = arith.addf %259, %258 : vector<4x16xf32>
    %261 = arith.divf %259, %260 : vector<4x16xf32>
    %262 = vector.extract_strided_slice %253 {offsets = [0, 32], sizes = [4, 16], strides = [1, 1]} : vector<4x128xf32> to vector<4x16xf32>
    %263 = arith.negf %262 : vector<4x16xf32>
    %264 = math.exp %263 : vector<4x16xf32>
    %cst_107 = arith.constant 1.000000e+00 : f32
    %265 = vector.broadcast %cst_107 : f32 to vector<4x16xf32>
    %266 = arith.addf %265, %264 : vector<4x16xf32>
    %267 = arith.divf %265, %266 : vector<4x16xf32>
    %268 = arith.mulf %261, %183 : vector<4x16xf32>
    %269 = arith.mulf %267, %255 : vector<4x16xf32>
    %270 = arith.addf %268, %269 : vector<4x16xf32>
    %271 = vector.extract_strided_slice %6 {offsets = [12, 0], sizes = [4, 512], strides = [1, 1]} : vector<24x512xf32> to vector<4x512xf32>
    %c0_108 = arith.constant 0 : index
    %c0_109 = arith.constant 0 : index
    %272 = vector.load %arg2[%c0_108, %c0_109] : memref<128x672xbf16, #tpu.memory_space<vmem>>, vector<128x512xbf16>
    %273 = arith.truncf %213 : vector<4x128xf32> to vector<4x128xbf16>
    %cst_110 = arith.constant dense<0.000000e+00> : vector<4x512xf32>
    %274 = tpu.matmul %273, %272, %cst_110 {dimension_numbers = #tpu.dot_dimension_numbers<[1], [0], [0], [1], [0, 0, 1, 1], [], []>} : vector<4x128xbf16>, vector<128x512xbf16>, vector<4x512xf32> -> vector<4x512xf32>
    %275 = arith.addf %271, %274 : vector<4x512xf32>
    %276 = vector.extract_strided_slice %275 {offsets = [0, 0], sizes = [4, 128], strides = [1, 1]} : vector<4x512xf32> to vector<4x128xf32>
    %277 = arith.negf %276 : vector<4x128xf32>
    %278 = math.exp %277 : vector<4x128xf32>
    %cst_111 = arith.constant 1.000000e+00 : f32
    %279 = vector.broadcast %cst_111 : f32 to vector<4x128xf32>
    %280 = arith.addf %279, %278 : vector<4x128xf32>
    %281 = arith.divf %279, %280 : vector<4x128xf32>
    %282 = vector.extract_strided_slice %275 {offsets = [0, 128], sizes = [4, 128], strides = [1, 1]} : vector<4x512xf32> to vector<4x128xf32>
    %283 = arith.negf %282 : vector<4x128xf32>
    %284 = math.exp %283 : vector<4x128xf32>
    %cst_112 = arith.constant 1.000000e+00 : f32
    %285 = vector.broadcast %cst_112 : f32 to vector<4x128xf32>
    %286 = arith.addf %285, %284 : vector<4x128xf32>
    %287 = arith.divf %285, %286 : vector<4x128xf32>
    %288 = vector.extract_strided_slice %275 {offsets = [0, 256], sizes = [4, 128], strides = [1, 1]} : vector<4x512xf32> to vector<4x128xf32>
    %289 = math.tanh %288 : vector<4x128xf32>
    %290 = vector.extract_strided_slice %275 {offsets = [0, 384], sizes = [4, 128], strides = [1, 1]} : vector<4x512xf32> to vector<4x128xf32>
    %291 = arith.negf %290 : vector<4x128xf32>
    %292 = math.exp %291 : vector<4x128xf32>
    %cst_113 = arith.constant 1.000000e+00 : f32
    %293 = vector.broadcast %cst_113 : f32 to vector<4x128xf32>
    %294 = arith.addf %293, %292 : vector<4x128xf32>
    %295 = arith.divf %293, %294 : vector<4x128xf32>
    %296 = arith.mulf %287, %211 : vector<4x128xf32>
    %297 = arith.mulf %281, %289 : vector<4x128xf32>
    %298 = arith.addf %296, %297 : vector<4x128xf32>
    %299 = math.tanh %298 : vector<4x128xf32>
    %300 = arith.mulf %295, %299 : vector<4x128xf32>
    %301 = tpu.concatenate %211, %298 in 1 : vector<4x128xf32>, vector<4x128xf32> -> vector<4x256xf32>
    %c0_114 = arith.constant 0 : index
    %c128_115 = arith.constant 128 : index
    %302 = vector.load %arg3[%c0_114, %c128_115] : memref<256x160xbf16, #tpu.memory_space<vmem>>, vector<256x32xbf16>
    %303 = arith.truncf %301 : vector<4x256xf32> to vector<4x256xbf16>
    %cst_116 = arith.constant dense<0.000000e+00> : vector<4x32xf32>
    %304 = tpu.matmul %303, %302, %cst_116 {dimension_numbers = #tpu.dot_dimension_numbers<[1], [0], [0], [1], [0, 0, 1, 1], [], []>} : vector<4x256xbf16>, vector<256x32xbf16>, vector<4x32xf32> -> vector<4x32xf32>
    %c0_117 = arith.constant 0 : index
    %c512_118 = arith.constant 512 : index
    %305 = vector.load %arg6[%c0_117, %c512_118] : memref<4x1408xf32, #tpu.memory_space<vmem>>, vector<4x32xf32>
    %306 = arith.addf %304, %305 : vector<4x32xf32>
    %cst_119 = arith.constant 0.000000e+00 : f32
    %307 = vector.broadcast %cst_119 : f32 to vector<4x32xf32>
    %308 = arith.maximumf %306, %307 : vector<4x32xf32>
    %c0_120 = arith.constant 0 : index
    %c0_121 = arith.constant 0 : index
    %309 = vector.load %arg4[%c0_120, %c0_121] : memref<32x384xbf16, #tpu.memory_space<vmem>>, vector<32x256xbf16>
    %310 = arith.truncf %308 : vector<4x32xf32> to vector<4x32xbf16>
    %cst_122 = arith.constant dense<0.000000e+00> : vector<4x256xf32>
    %311 = tpu.matmul %310, %309, %cst_122 {dimension_numbers = #tpu.dot_dimension_numbers<[1], [0], [0], [1], [0, 0, 1, 1], [], []>} : vector<4x32xbf16>, vector<32x256xbf16>, vector<4x256xf32> -> vector<4x256xf32>
    %c0_123 = arith.constant 0 : index
    %c640_124 = arith.constant 640 : index
    %312 = vector.load %arg6[%c0_123, %c640_124] : memref<4x1408xf32, #tpu.memory_space<vmem>>, vector<4x256xf32>
    %313 = arith.addf %311, %312 : vector<4x256xf32>
    %cst_125 = arith.constant dense<0xFF800000> : vector<4xf32>
    %314 = vector.multi_reduction <maximumf>, %313, %cst_125 [1] : vector<4x256xf32> to vector<4xf32>
    %315 = vector.shape_cast %314 : vector<4xf32> to vector<4x1xf32>
    %316 = vector.broadcast %315 : vector<4x1xf32> to vector<4x256xf32>
    %317 = arith.subf %313, %316 : vector<4x256xf32>
    %318 = math.exp %317 : vector<4x256xf32>
    %cst_126 = arith.constant dense<0.000000e+00> : vector<4xf32>
    %319 = vector.multi_reduction <add>, %318, %cst_126 [1] : vector<4x256xf32> to vector<4xf32>
    %320 = vector.shape_cast %319 : vector<4xf32> to vector<4x1xf32>
    %321 = tpu.reciprocal %320 {approx = true} : vector<4x1xf32> -> vector<4x1xf32>
    %322 = vector.broadcast %321 : vector<4x1xf32> to vector<4x256xf32>
    %323 = arith.mulf %318, %322 : vector<4x256xf32>
    %324 = arith.mulf %323, %301 : vector<4x256xf32>
    %c0_127 = arith.constant 0 : index
    %c0_128 = arith.constant 0 : index
    %325 = vector.load %arg3[%c0_127, %c0_128] : memref<256x160xbf16, #tpu.memory_space<vmem>>, vector<256x128xbf16>
    %326 = arith.truncf %324 : vector<4x256xf32> to vector<4x256xbf16>
    %cst_129 = arith.constant dense<0.000000e+00> : vector<4x128xf32>
    %327 = tpu.matmul %326, %325, %cst_129 {dimension_numbers = #tpu.dot_dimension_numbers<[1], [0], [0], [1], [0, 0, 1, 1], [], []>} : vector<4x256xbf16>, vector<256x128xbf16>, vector<4x128xf32> -> vector<4x128xf32>
    %c0_130 = arith.constant 0 : index
    %c0_131 = arith.constant 0 : index
    %328 = vector.load %arg5[%c0_130, %c0_131] : memref<16x160xbf16, #tpu.memory_space<vmem>>, vector<16x128xbf16>
    %329 = arith.truncf %270 : vector<4x16xf32> to vector<4x16xbf16>
    %cst_132 = arith.constant dense<0.000000e+00> : vector<4x128xf32>
    %330 = tpu.matmul %329, %328, %cst_132 {dimension_numbers = #tpu.dot_dimension_numbers<[1], [0], [0], [1], [0, 0, 1, 1], [], []>} : vector<4x16xbf16>, vector<16x128xbf16>, vector<4x128xf32> -> vector<4x128xf32>
    %331 = arith.addf %327, %330 : vector<4x128xf32>
    %c0_133 = arith.constant 0 : index
    %c896_134 = arith.constant 896 : index
    %332 = vector.load %arg6[%c0_133, %c896_134] : memref<4x1408xf32, #tpu.memory_space<vmem>>, vector<4x128xf32>
    %333 = arith.addf %331, %332 : vector<4x128xf32>
    %cst_135 = arith.constant 0.000000e+00 : f32
    %334 = vector.broadcast %cst_135 : f32 to vector<4x128xf32>
    %335 = arith.maximumf %333, %334 : vector<4x128xf32>
    %c0_136 = arith.constant 0 : index
    %c512_137 = arith.constant 512 : index
    %336 = vector.load %arg2[%c0_136, %c512_137] : memref<128x672xbf16, #tpu.memory_space<vmem>>, vector<128x128xbf16>
    %337 = arith.truncf %335 : vector<4x128xf32> to vector<4x128xbf16>
    %cst_138 = arith.constant dense<0.000000e+00> : vector<4x128xf32>
    %338 = tpu.matmul %337, %336, %cst_138 {dimension_numbers = #tpu.dot_dimension_numbers<[1], [0], [0], [1], [0, 0, 1, 1], [], []>} : vector<4x128xbf16>, vector<128x128xbf16>, vector<4x128xf32> -> vector<4x128xf32>
    %c0_139 = arith.constant 0 : index
    %c1024_140 = arith.constant 1024 : index
    %339 = vector.load %arg6[%c0_139, %c1024_140] : memref<4x1408xf32, #tpu.memory_space<vmem>>, vector<4x128xf32>
    %340 = arith.addf %338, %339 : vector<4x128xf32>
    %341 = vector.extract_strided_slice %340 {offsets = [0, 0], sizes = [4, 16], strides = [1, 1]} : vector<4x128xf32> to vector<4x16xf32>
    %342 = math.tanh %341 : vector<4x16xf32>
    %343 = vector.extract_strided_slice %340 {offsets = [0, 16], sizes = [4, 16], strides = [1, 1]} : vector<4x128xf32> to vector<4x16xf32>
    %344 = arith.negf %343 : vector<4x16xf32>
    %345 = math.exp %344 : vector<4x16xf32>
    %cst_141 = arith.constant 1.000000e+00 : f32
    %346 = vector.broadcast %cst_141 : f32 to vector<4x16xf32>
    %347 = arith.addf %346, %345 : vector<4x16xf32>
    %348 = arith.divf %346, %347 : vector<4x16xf32>
    %349 = vector.extract_strided_slice %340 {offsets = [0, 32], sizes = [4, 16], strides = [1, 1]} : vector<4x128xf32> to vector<4x16xf32>
    %350 = arith.negf %349 : vector<4x16xf32>
    %351 = math.exp %350 : vector<4x16xf32>
    %cst_142 = arith.constant 1.000000e+00 : f32
    %352 = vector.broadcast %cst_142 : f32 to vector<4x16xf32>
    %353 = arith.addf %352, %351 : vector<4x16xf32>
    %354 = arith.divf %352, %353 : vector<4x16xf32>
    %355 = arith.mulf %348, %270 : vector<4x16xf32>
    %356 = arith.mulf %354, %342 : vector<4x16xf32>
    %357 = arith.addf %355, %356 : vector<4x16xf32>
    %358 = vector.extract_strided_slice %6 {offsets = [16, 0], sizes = [4, 512], strides = [1, 1]} : vector<24x512xf32> to vector<4x512xf32>
    %c0_143 = arith.constant 0 : index
    %c0_144 = arith.constant 0 : index
    %359 = vector.load %arg2[%c0_143, %c0_144] : memref<128x672xbf16, #tpu.memory_space<vmem>>, vector<128x512xbf16>
    %360 = arith.truncf %300 : vector<4x128xf32> to vector<4x128xbf16>
    %cst_145 = arith.constant dense<0.000000e+00> : vector<4x512xf32>
    %361 = tpu.matmul %360, %359, %cst_145 {dimension_numbers = #tpu.dot_dimension_numbers<[1], [0], [0], [1], [0, 0, 1, 1], [], []>} : vector<4x128xbf16>, vector<128x512xbf16>, vector<4x512xf32> -> vector<4x512xf32>
    %362 = arith.addf %358, %361 : vector<4x512xf32>
    %363 = vector.extract_strided_slice %362 {offsets = [0, 0], sizes = [4, 128], strides = [1, 1]} : vector<4x512xf32> to vector<4x128xf32>
    %364 = arith.negf %363 : vector<4x128xf32>
    %365 = math.exp %364 : vector<4x128xf32>
    %cst_146 = arith.constant 1.000000e+00 : f32
    %366 = vector.broadcast %cst_146 : f32 to vector<4x128xf32>
    %367 = arith.addf %366, %365 : vector<4x128xf32>
    %368 = arith.divf %366, %367 : vector<4x128xf32>
    %369 = vector.extract_strided_slice %362 {offsets = [0, 128], sizes = [4, 128], strides = [1, 1]} : vector<4x512xf32> to vector<4x128xf32>
    %370 = arith.negf %369 : vector<4x128xf32>
    %371 = math.exp %370 : vector<4x128xf32>
    %cst_147 = arith.constant 1.000000e+00 : f32
    %372 = vector.broadcast %cst_147 : f32 to vector<4x128xf32>
    %373 = arith.addf %372, %371 : vector<4x128xf32>
    %374 = arith.divf %372, %373 : vector<4x128xf32>
    %375 = vector.extract_strided_slice %362 {offsets = [0, 256], sizes = [4, 128], strides = [1, 1]} : vector<4x512xf32> to vector<4x128xf32>
    %376 = math.tanh %375 : vector<4x128xf32>
    %377 = vector.extract_strided_slice %362 {offsets = [0, 384], sizes = [4, 128], strides = [1, 1]} : vector<4x512xf32> to vector<4x128xf32>
    %378 = arith.negf %377 : vector<4x128xf32>
    %379 = math.exp %378 : vector<4x128xf32>
    %cst_148 = arith.constant 1.000000e+00 : f32
    %380 = vector.broadcast %cst_148 : f32 to vector<4x128xf32>
    %381 = arith.addf %380, %379 : vector<4x128xf32>
    %382 = arith.divf %380, %381 : vector<4x128xf32>
    %383 = arith.mulf %374, %298 : vector<4x128xf32>
    %384 = arith.mulf %368, %376 : vector<4x128xf32>
    %385 = arith.addf %383, %384 : vector<4x128xf32>
    %386 = math.tanh %385 : vector<4x128xf32>
    %387 = arith.mulf %382, %386 : vector<4x128xf32>
    %388 = tpu.concatenate %298, %385 in 1 : vector<4x128xf32>, vector<4x128xf32> -> vector<4x256xf32>
    %c0_149 = arith.constant 0 : index
    %c128_150 = arith.constant 128 : index
    %389 = vector.load %arg3[%c0_149, %c128_150] : memref<256x160xbf16, #tpu.memory_space<vmem>>, vector<256x32xbf16>
    %390 = arith.truncf %388 : vector<4x256xf32> to vector<4x256xbf16>
    %cst_151 = arith.constant dense<0.000000e+00> : vector<4x32xf32>
    %391 = tpu.matmul %390, %389, %cst_151 {dimension_numbers = #tpu.dot_dimension_numbers<[1], [0], [0], [1], [0, 0, 1, 1], [], []>} : vector<4x256xbf16>, vector<256x32xbf16>, vector<4x32xf32> -> vector<4x32xf32>
    %c0_152 = arith.constant 0 : index
    %c512_153 = arith.constant 512 : index
    %392 = vector.load %arg6[%c0_152, %c512_153] : memref<4x1408xf32, #tpu.memory_space<vmem>>, vector<4x32xf32>
    %393 = arith.addf %391, %392 : vector<4x32xf32>
    %cst_154 = arith.constant 0.000000e+00 : f32
    %394 = vector.broadcast %cst_154 : f32 to vector<4x32xf32>
    %395 = arith.maximumf %393, %394 : vector<4x32xf32>
    %c0_155 = arith.constant 0 : index
    %c0_156 = arith.constant 0 : index
    %396 = vector.load %arg4[%c0_155, %c0_156] : memref<32x384xbf16, #tpu.memory_space<vmem>>, vector<32x256xbf16>
    %397 = arith.truncf %395 : vector<4x32xf32> to vector<4x32xbf16>
    %cst_157 = arith.constant dense<0.000000e+00> : vector<4x256xf32>
    %398 = tpu.matmul %397, %396, %cst_157 {dimension_numbers = #tpu.dot_dimension_numbers<[1], [0], [0], [1], [0, 0, 1, 1], [], []>} : vector<4x32xbf16>, vector<32x256xbf16>, vector<4x256xf32> -> vector<4x256xf32>
    %c0_158 = arith.constant 0 : index
    %c640_159 = arith.constant 640 : index
    %399 = vector.load %arg6[%c0_158, %c640_159] : memref<4x1408xf32, #tpu.memory_space<vmem>>, vector<4x256xf32>
    %400 = arith.addf %398, %399 : vector<4x256xf32>
    %cst_160 = arith.constant dense<0xFF800000> : vector<4xf32>
    %401 = vector.multi_reduction <maximumf>, %400, %cst_160 [1] : vector<4x256xf32> to vector<4xf32>
    %402 = vector.shape_cast %401 : vector<4xf32> to vector<4x1xf32>
    %403 = vector.broadcast %402 : vector<4x1xf32> to vector<4x256xf32>
    %404 = arith.subf %400, %403 : vector<4x256xf32>
    %405 = math.exp %404 : vector<4x256xf32>
    %cst_161 = arith.constant dense<0.000000e+00> : vector<4xf32>
    %406 = vector.multi_reduction <add>, %405, %cst_161 [1] : vector<4x256xf32> to vector<4xf32>
    %407 = vector.shape_cast %406 : vector<4xf32> to vector<4x1xf32>
    %408 = tpu.reciprocal %407 {approx = true} : vector<4x1xf32> -> vector<4x1xf32>
    %409 = vector.broadcast %408 : vector<4x1xf32> to vector<4x256xf32>
    %410 = arith.mulf %405, %409 : vector<4x256xf32>
    %411 = arith.mulf %410, %388 : vector<4x256xf32>
    %c0_162 = arith.constant 0 : index
    %c0_163 = arith.constant 0 : index
    %412 = vector.load %arg3[%c0_162, %c0_163] : memref<256x160xbf16, #tpu.memory_space<vmem>>, vector<256x128xbf16>
    %413 = arith.truncf %411 : vector<4x256xf32> to vector<4x256xbf16>
    %cst_164 = arith.constant dense<0.000000e+00> : vector<4x128xf32>
    %414 = tpu.matmul %413, %412, %cst_164 {dimension_numbers = #tpu.dot_dimension_numbers<[1], [0], [0], [1], [0, 0, 1, 1], [], []>} : vector<4x256xbf16>, vector<256x128xbf16>, vector<4x128xf32> -> vector<4x128xf32>
    %c0_165 = arith.constant 0 : index
    %c0_166 = arith.constant 0 : index
    %415 = vector.load %arg5[%c0_165, %c0_166] : memref<16x160xbf16, #tpu.memory_space<vmem>>, vector<16x128xbf16>
    %416 = arith.truncf %357 : vector<4x16xf32> to vector<4x16xbf16>
    %cst_167 = arith.constant dense<0.000000e+00> : vector<4x128xf32>
    %417 = tpu.matmul %416, %415, %cst_167 {dimension_numbers = #tpu.dot_dimension_numbers<[1], [0], [0], [1], [0, 0, 1, 1], [], []>} : vector<4x16xbf16>, vector<16x128xbf16>, vector<4x128xf32> -> vector<4x128xf32>
    %418 = arith.addf %414, %417 : vector<4x128xf32>
    %c0_168 = arith.constant 0 : index
    %c896_169 = arith.constant 896 : index
    %419 = vector.load %arg6[%c0_168, %c896_169] : memref<4x1408xf32, #tpu.memory_space<vmem>>, vector<4x128xf32>
    %420 = arith.addf %418, %419 : vector<4x128xf32>
    %cst_170 = arith.constant 0.000000e+00 : f32
    %421 = vector.broadcast %cst_170 : f32 to vector<4x128xf32>
    %422 = arith.maximumf %420, %421 : vector<4x128xf32>
    %c0_171 = arith.constant 0 : index
    %c512_172 = arith.constant 512 : index
    %423 = vector.load %arg2[%c0_171, %c512_172] : memref<128x672xbf16, #tpu.memory_space<vmem>>, vector<128x128xbf16>
    %424 = arith.truncf %422 : vector<4x128xf32> to vector<4x128xbf16>
    %cst_173 = arith.constant dense<0.000000e+00> : vector<4x128xf32>
    %425 = tpu.matmul %424, %423, %cst_173 {dimension_numbers = #tpu.dot_dimension_numbers<[1], [0], [0], [1], [0, 0, 1, 1], [], []>} : vector<4x128xbf16>, vector<128x128xbf16>, vector<4x128xf32> -> vector<4x128xf32>
    %c0_174 = arith.constant 0 : index
    %c1024_175 = arith.constant 1024 : index
    %426 = vector.load %arg6[%c0_174, %c1024_175] : memref<4x1408xf32, #tpu.memory_space<vmem>>, vector<4x128xf32>
    %427 = arith.addf %425, %426 : vector<4x128xf32>
    %428 = vector.extract_strided_slice %427 {offsets = [0, 0], sizes = [4, 16], strides = [1, 1]} : vector<4x128xf32> to vector<4x16xf32>
    %429 = math.tanh %428 : vector<4x16xf32>
    %430 = vector.extract_strided_slice %427 {offsets = [0, 16], sizes = [4, 16], strides = [1, 1]} : vector<4x128xf32> to vector<4x16xf32>
    %431 = arith.negf %430 : vector<4x16xf32>
    %432 = math.exp %431 : vector<4x16xf32>
    %cst_176 = arith.constant 1.000000e+00 : f32
    %433 = vector.broadcast %cst_176 : f32 to vector<4x16xf32>
    %434 = arith.addf %433, %432 : vector<4x16xf32>
    %435 = arith.divf %433, %434 : vector<4x16xf32>
    %436 = vector.extract_strided_slice %427 {offsets = [0, 32], sizes = [4, 16], strides = [1, 1]} : vector<4x128xf32> to vector<4x16xf32>
    %437 = arith.negf %436 : vector<4x16xf32>
    %438 = math.exp %437 : vector<4x16xf32>
    %cst_177 = arith.constant 1.000000e+00 : f32
    %439 = vector.broadcast %cst_177 : f32 to vector<4x16xf32>
    %440 = arith.addf %439, %438 : vector<4x16xf32>
    %441 = arith.divf %439, %440 : vector<4x16xf32>
    %442 = arith.mulf %435, %357 : vector<4x16xf32>
    %443 = arith.mulf %441, %429 : vector<4x16xf32>
    %444 = arith.addf %442, %443 : vector<4x16xf32>
    %445 = vector.extract_strided_slice %6 {offsets = [20, 0], sizes = [4, 512], strides = [1, 1]} : vector<24x512xf32> to vector<4x512xf32>
    %c0_178 = arith.constant 0 : index
    %c0_179 = arith.constant 0 : index
    %446 = vector.load %arg2[%c0_178, %c0_179] : memref<128x672xbf16, #tpu.memory_space<vmem>>, vector<128x512xbf16>
    %447 = arith.truncf %387 : vector<4x128xf32> to vector<4x128xbf16>
    %cst_180 = arith.constant dense<0.000000e+00> : vector<4x512xf32>
    %448 = tpu.matmul %447, %446, %cst_180 {dimension_numbers = #tpu.dot_dimension_numbers<[1], [0], [0], [1], [0, 0, 1, 1], [], []>} : vector<4x128xbf16>, vector<128x512xbf16>, vector<4x512xf32> -> vector<4x512xf32>
    %449 = arith.addf %445, %448 : vector<4x512xf32>
    %450 = vector.extract_strided_slice %449 {offsets = [0, 0], sizes = [4, 128], strides = [1, 1]} : vector<4x512xf32> to vector<4x128xf32>
    %451 = arith.negf %450 : vector<4x128xf32>
    %452 = math.exp %451 : vector<4x128xf32>
    %cst_181 = arith.constant 1.000000e+00 : f32
    %453 = vector.broadcast %cst_181 : f32 to vector<4x128xf32>
    %454 = arith.addf %453, %452 : vector<4x128xf32>
    %455 = arith.divf %453, %454 : vector<4x128xf32>
    %456 = vector.extract_strided_slice %449 {offsets = [0, 128], sizes = [4, 128], strides = [1, 1]} : vector<4x512xf32> to vector<4x128xf32>
    %457 = arith.negf %456 : vector<4x128xf32>
    %458 = math.exp %457 : vector<4x128xf32>
    %cst_182 = arith.constant 1.000000e+00 : f32
    %459 = vector.broadcast %cst_182 : f32 to vector<4x128xf32>
    %460 = arith.addf %459, %458 : vector<4x128xf32>
    %461 = arith.divf %459, %460 : vector<4x128xf32>
    %462 = vector.extract_strided_slice %449 {offsets = [0, 256], sizes = [4, 128], strides = [1, 1]} : vector<4x512xf32> to vector<4x128xf32>
    %463 = math.tanh %462 : vector<4x128xf32>
    %464 = vector.extract_strided_slice %449 {offsets = [0, 384], sizes = [4, 128], strides = [1, 1]} : vector<4x512xf32> to vector<4x128xf32>
    %465 = arith.negf %464 : vector<4x128xf32>
    %466 = math.exp %465 : vector<4x128xf32>
    %cst_183 = arith.constant 1.000000e+00 : f32
    %467 = vector.broadcast %cst_183 : f32 to vector<4x128xf32>
    %468 = arith.addf %467, %466 : vector<4x128xf32>
    %469 = arith.divf %467, %468 : vector<4x128xf32>
    %470 = arith.mulf %461, %385 : vector<4x128xf32>
    %471 = arith.mulf %455, %463 : vector<4x128xf32>
    %472 = arith.addf %470, %471 : vector<4x128xf32>
    %473 = math.tanh %472 : vector<4x128xf32>
    %474 = arith.mulf %469, %473 : vector<4x128xf32>
    %475 = tpu.concatenate %385, %472 in 1 : vector<4x128xf32>, vector<4x128xf32> -> vector<4x256xf32>
    %c0_184 = arith.constant 0 : index
    %c128_185 = arith.constant 128 : index
    %476 = vector.load %arg3[%c0_184, %c128_185] : memref<256x160xbf16, #tpu.memory_space<vmem>>, vector<256x32xbf16>
    %477 = arith.truncf %475 : vector<4x256xf32> to vector<4x256xbf16>
    %cst_186 = arith.constant dense<0.000000e+00> : vector<4x32xf32>
    %478 = tpu.matmul %477, %476, %cst_186 {dimension_numbers = #tpu.dot_dimension_numbers<[1], [0], [0], [1], [0, 0, 1, 1], [], []>} : vector<4x256xbf16>, vector<256x32xbf16>, vector<4x32xf32> -> vector<4x32xf32>
    %c0_187 = arith.constant 0 : index
    %c512_188 = arith.constant 512 : index
    %479 = vector.load %arg6[%c0_187, %c512_188] : memref<4x1408xf32, #tpu.memory_space<vmem>>, vector<4x32xf32>
    %480 = arith.addf %478, %479 : vector<4x32xf32>
    %cst_189 = arith.constant 0.000000e+00 : f32
    %481 = vector.broadcast %cst_189 : f32 to vector<4x32xf32>
    %482 = arith.maximumf %480, %481 : vector<4x32xf32>
    %c0_190 = arith.constant 0 : index
    %c0_191 = arith.constant 0 : index
    %483 = vector.load %arg4[%c0_190, %c0_191] : memref<32x384xbf16, #tpu.memory_space<vmem>>, vector<32x256xbf16>
    %484 = arith.truncf %482 : vector<4x32xf32> to vector<4x32xbf16>
    %cst_192 = arith.constant dense<0.000000e+00> : vector<4x256xf32>
    %485 = tpu.matmul %484, %483, %cst_192 {dimension_numbers = #tpu.dot_dimension_numbers<[1], [0], [0], [1], [0, 0, 1, 1], [], []>} : vector<4x32xbf16>, vector<32x256xbf16>, vector<4x256xf32> -> vector<4x256xf32>
    %c0_193 = arith.constant 0 : index
    %c640_194 = arith.constant 640 : index
    %486 = vector.load %arg6[%c0_193, %c640_194] : memref<4x1408xf32, #tpu.memory_space<vmem>>, vector<4x256xf32>
    %487 = arith.addf %485, %486 : vector<4x256xf32>
    %cst_195 = arith.constant dense<0xFF800000> : vector<4xf32>
    %488 = vector.multi_reduction <maximumf>, %487, %cst_195 [1] : vector<4x256xf32> to vector<4xf32>
    %489 = vector.shape_cast %488 : vector<4xf32> to vector<4x1xf32>
    %490 = vector.broadcast %489 : vector<4x1xf32> to vector<4x256xf32>
    %491 = arith.subf %487, %490 : vector<4x256xf32>
    %492 = math.exp %491 : vector<4x256xf32>
    %cst_196 = arith.constant dense<0.000000e+00> : vector<4xf32>
    %493 = vector.multi_reduction <add>, %492, %cst_196 [1] : vector<4x256xf32> to vector<4xf32>
    %494 = vector.shape_cast %493 : vector<4xf32> to vector<4x1xf32>
    %495 = tpu.reciprocal %494 {approx = true} : vector<4x1xf32> -> vector<4x1xf32>
    %496 = vector.broadcast %495 : vector<4x1xf32> to vector<4x256xf32>
    %497 = arith.mulf %492, %496 : vector<4x256xf32>
    %498 = arith.mulf %497, %475 : vector<4x256xf32>
    %c0_197 = arith.constant 0 : index
    %c0_198 = arith.constant 0 : index
    %499 = vector.load %arg3[%c0_197, %c0_198] : memref<256x160xbf16, #tpu.memory_space<vmem>>, vector<256x128xbf16>
    %500 = arith.truncf %498 : vector<4x256xf32> to vector<4x256xbf16>
    %cst_199 = arith.constant dense<0.000000e+00> : vector<4x128xf32>
    %501 = tpu.matmul %500, %499, %cst_199 {dimension_numbers = #tpu.dot_dimension_numbers<[1], [0], [0], [1], [0, 0, 1, 1], [], []>} : vector<4x256xbf16>, vector<256x128xbf16>, vector<4x128xf32> -> vector<4x128xf32>
    %c0_200 = arith.constant 0 : index
    %c0_201 = arith.constant 0 : index
    %502 = vector.load %arg5[%c0_200, %c0_201] : memref<16x160xbf16, #tpu.memory_space<vmem>>, vector<16x128xbf16>
    %503 = arith.truncf %444 : vector<4x16xf32> to vector<4x16xbf16>
    %cst_202 = arith.constant dense<0.000000e+00> : vector<4x128xf32>
    %504 = tpu.matmul %503, %502, %cst_202 {dimension_numbers = #tpu.dot_dimension_numbers<[1], [0], [0], [1], [0, 0, 1, 1], [], []>} : vector<4x16xbf16>, vector<16x128xbf16>, vector<4x128xf32> -> vector<4x128xf32>
    %505 = arith.addf %501, %504 : vector<4x128xf32>
    %c0_203 = arith.constant 0 : index
    %c896_204 = arith.constant 896 : index
    %506 = vector.load %arg6[%c0_203, %c896_204] : memref<4x1408xf32, #tpu.memory_space<vmem>>, vector<4x128xf32>
    %507 = arith.addf %505, %506 : vector<4x128xf32>
    %cst_205 = arith.constant 0.000000e+00 : f32
    %508 = vector.broadcast %cst_205 : f32 to vector<4x128xf32>
    %509 = arith.maximumf %507, %508 : vector<4x128xf32>
    %c0_206 = arith.constant 0 : index
    %c512_207 = arith.constant 512 : index
    %510 = vector.load %arg2[%c0_206, %c512_207] : memref<128x672xbf16, #tpu.memory_space<vmem>>, vector<128x128xbf16>
    %511 = arith.truncf %509 : vector<4x128xf32> to vector<4x128xbf16>
    %cst_208 = arith.constant dense<0.000000e+00> : vector<4x128xf32>
    %512 = tpu.matmul %511, %510, %cst_208 {dimension_numbers = #tpu.dot_dimension_numbers<[1], [0], [0], [1], [0, 0, 1, 1], [], []>} : vector<4x128xbf16>, vector<128x128xbf16>, vector<4x128xf32> -> vector<4x128xf32>
    %c0_209 = arith.constant 0 : index
    %c1024_210 = arith.constant 1024 : index
    %513 = vector.load %arg6[%c0_209, %c1024_210] : memref<4x1408xf32, #tpu.memory_space<vmem>>, vector<4x128xf32>
    %514 = arith.addf %512, %513 : vector<4x128xf32>
    %515 = vector.extract_strided_slice %514 {offsets = [0, 0], sizes = [4, 16], strides = [1, 1]} : vector<4x128xf32> to vector<4x16xf32>
    %516 = math.tanh %515 : vector<4x16xf32>
    %517 = vector.extract_strided_slice %514 {offsets = [0, 16], sizes = [4, 16], strides = [1, 1]} : vector<4x128xf32> to vector<4x16xf32>
    %518 = arith.negf %517 : vector<4x16xf32>
    %519 = math.exp %518 : vector<4x16xf32>
    %cst_211 = arith.constant 1.000000e+00 : f32
    %520 = vector.broadcast %cst_211 : f32 to vector<4x16xf32>
    %521 = arith.addf %520, %519 : vector<4x16xf32>
    %522 = arith.divf %520, %521 : vector<4x16xf32>
    %523 = vector.extract_strided_slice %514 {offsets = [0, 32], sizes = [4, 16], strides = [1, 1]} : vector<4x128xf32> to vector<4x16xf32>
    %524 = arith.negf %523 : vector<4x16xf32>
    %525 = math.exp %524 : vector<4x16xf32>
    %cst_212 = arith.constant 1.000000e+00 : f32
    %526 = vector.broadcast %cst_212 : f32 to vector<4x16xf32>
    %527 = arith.addf %526, %525 : vector<4x16xf32>
    %528 = arith.divf %526, %527 : vector<4x16xf32>
    %529 = arith.mulf %522, %444 : vector<4x16xf32>
    %530 = arith.mulf %528, %516 : vector<4x16xf32>
    %531 = arith.addf %529, %530 : vector<4x16xf32>
    %c0_213 = arith.constant 0 : index
    %c640_214 = arith.constant 640 : index
    %532 = vector.load %arg2[%c0_213, %c640_214] : memref<128x672xbf16, #tpu.memory_space<vmem>>, vector<128x32xbf16>
    %533 = arith.truncf %474 : vector<4x128xf32> to vector<4x128xbf16>
    %cst_215 = arith.constant dense<0.000000e+00> : vector<4x32xf32>
    %534 = tpu.matmul %533, %532, %cst_215 {dimension_numbers = #tpu.dot_dimension_numbers<[1], [0], [0], [1], [0, 0, 1, 1], [], []>} : vector<4x128xbf16>, vector<128x32xbf16>, vector<4x32xf32> -> vector<4x32xf32>
    %c0_216 = arith.constant 0 : index
    %c128_217 = arith.constant 128 : index
    %535 = vector.load %arg5[%c0_216, %c128_217] : memref<16x160xbf16, #tpu.memory_space<vmem>>, vector<16x32xbf16>
    %536 = arith.truncf %531 : vector<4x16xf32> to vector<4x16xbf16>
    %cst_218 = arith.constant dense<0.000000e+00> : vector<4x32xf32>
    %537 = tpu.matmul %536, %535, %cst_218 {dimension_numbers = #tpu.dot_dimension_numbers<[1], [0], [0], [1], [0, 0, 1, 1], [], []>} : vector<4x16xbf16>, vector<16x32xbf16>, vector<4x32xf32> -> vector<4x32xf32>
    %538 = arith.addf %534, %537 : vector<4x32xf32>
    %c0_219 = arith.constant 0 : index
    %c1152 = arith.constant 1152 : index
    %539 = vector.load %arg6[%c0_219, %c1152] : memref<4x1408xf32, #tpu.memory_space<vmem>>, vector<4x32xf32>
    %540 = arith.addf %538, %539 : vector<4x32xf32>
    %cst_220 = arith.constant 0.000000e+00 : f32
    %541 = vector.broadcast %cst_220 : f32 to vector<4x32xf32>
    %542 = arith.maximumf %540, %541 : vector<4x32xf32>
    %c0_221 = arith.constant 0 : index
    %c256 = arith.constant 256 : index
    %543 = vector.load %arg4[%c0_221, %c256] : memref<32x384xbf16, #tpu.memory_space<vmem>>, vector<32x128xbf16>
    %544 = arith.truncf %542 : vector<4x32xf32> to vector<4x32xbf16>
    %cst_222 = arith.constant dense<0.000000e+00> : vector<4x128xf32>
    %545 = tpu.matmul %544, %543, %cst_222 {dimension_numbers = #tpu.dot_dimension_numbers<[1], [0], [0], [1], [0, 0, 1, 1], [], []>} : vector<4x32xbf16>, vector<32x128xbf16>, vector<4x128xf32> -> vector<4x128xf32>
    %c0_223 = arith.constant 0 : index
    %c1280 = arith.constant 1280 : index
    %546 = vector.load %arg6[%c0_223, %c1280] : memref<4x1408xf32, #tpu.memory_space<vmem>>, vector<4x128xf32>
    %547 = arith.addf %545, %546 : vector<4x128xf32>
    %c0_224 = arith.constant 0 : index
    %c0_225 = arith.constant 0 : index
    %548 = vector.load %arg7[%c0_224, %c0_225] : memref<4x128xf32, #tpu.memory_space<vmem>>, vector<4x128xf32>
    tpu.vector_store %arg7[%c0_224, %c0_225], %547 {strides = array<i32>} : memref<4x128xf32, #tpu.memory_space<vmem>>, vector<4x128xf32>,
    return
  }
}

</mosaic_0001>

<llo_original>
// kernel: mfn_forward.1
$region0: #{mfn_forward.1}
  #allocation0 [shape = 'u32[]', space=smem, size = 0x4, offset = 0x4, fixed_abs, tag = 'smem constant byte address 0x4 - core index']
  #allocation1 [shape = 'u32[144,128]{1,0:T(1,128)}', space=vmem, size = 0x12000, scoped, tag = 'internal scratch']
  %s0 = inlined_call_operand.vmem [shape: f32[24,48], index: 0, kind: input, shape index: {}]
  %s1 = inlined_call_operand.vmem [shape: bf16[48,512], index: 1, kind: input, shape index: {}]
  %s2 = inlined_call_operand.vmem [shape: bf16[128,672], index: 2, kind: input, shape index: {}]
  %s3 = inlined_call_operand.vmem [shape: bf16[256,160], index: 3, kind: input, shape index: {}]
  %s4 = inlined_call_operand.vmem [shape: bf16[32,384], index: 4, kind: input, shape index: {}]
  %s5 = inlined_call_operand.vmem [shape: bf16[16,160], index: 5, kind: input, shape index: {}]
  %s6 = inlined_call_operand.vmem [shape: f32[4,1408], index: 6, kind: input, shape index: {}]
  %s7 = inlined_call_operand.vmem [shape: f32[4,128], index: 7, kind: output, shape index: {}]
  %s8 = sld [smem:[#allocation0]]
  $region38: #{mfn_forward.1} parent=0
    _
  %s10 = ssub.s32 1, %s8
  %s11 = scalar_select 0, %s10, %s8
  // Predicated region
  $region2: #{mfn_forward.1} parent=0 // pred_check
    _
  $region3: #{mfn_forward.1} parent=0 // pred_check_branch
    %13 = sbr.rel (0) target = $region5
  $region4: #{mfn_forward.1} parent=0 // pred_region
    _
  $region5: #{mfn_forward.1} parent=0 // pred_fallthru
    _
  // Predicated region
  $region6: #{mfn_forward.1} parent=0 // pred_check
    _
  $region7: #{mfn_forward.1} parent=0 // pred_check_branch
    %15 = sbr.rel (0) target = $region9
  $region8: #{mfn_forward.1} parent=0 // pred_region
    _
  $region9: #{mfn_forward.1} parent=0 // pred_fallthru
    _
  // Predicated region
  $region10: #{mfn_forward.1} parent=0 // pred_check
    _
  $region11: #{mfn_forward.1} parent=0 // pred_check_branch
    %17 = sbr.rel (0) target = $region13
  $region12: #{mfn_forward.1} parent=0 // pred_region
    _
  $region13: #{mfn_forward.1} parent=0 // pred_fallthru
    _
  // Predicated region
  $region14: #{mfn_forward.1} parent=0 // pred_check
    _
  $region15: #{mfn_forward.1} parent=0 // pred_check_branch
    %19 = sbr.rel (0) target = $region17
  $region16: #{mfn_forward.1} parent=0 // pred_region
    _
  $region17: #{mfn_forward.1} parent=0 // pred_fallthru
    _
  // Predicated region
  $region18: #{mfn_forward.1} parent=0 // pred_check
    _
  $region19: #{mfn_forward.1} parent=0 // pred_check_branch
    %21 = sbr.rel (0) target = $region21
  $region20: #{mfn_forward.1} parent=0 // pred_region
    _
  $region21: #{mfn_forward.1} parent=0 // pred_fallthru
    _
  // Predicated region
  $region22: #{mfn_forward.1} parent=0 // pred_check
    _
  $region23: #{mfn_forward.1} parent=0 // pred_check_branch
    %23 = sbr.rel (0) target = $region25
  $region24: #{mfn_forward.1} parent=0 // pred_region
    _
  $region25: #{mfn_forward.1} parent=0 // pred_fallthru
    _
  // Predicated region
  $region26: #{mfn_forward.1} parent=0 // pred_check
    _
  $region27: #{mfn_forward.1} parent=0 // pred_check_branch
    %25 = sbr.rel (0) target = $region29
  $region28: #{mfn_forward.1} parent=0 // pred_region
    _
  $region29: #{mfn_forward.1} parent=0 // pred_fallthru
    _
  %v27 = vld [vmem:[%s0] sm:$0xff]
  %v28 = vld [vmem:[%s0 + $0x8] sm:$0xff]
  %v29 = vld [vmem:[%s0 + $0x10] sm:$0xff]
  %v30 = vld [vmem:[%s1] sm:$0xff]
  %v31 = vld [vmem:[%s1 + $0x8] sm:$0xff]
  %v32 = vld [vmem:[%s1 + $0x10] sm:$0xff]
  %v33 = vld [vmem:[%s1 + $0x18] sm:$0xff]
  %v34 = vld [vmem:[%s1 + $0x20] sm:$0xff]
  %v35 = vld [vmem:[%s1 + $0x28] sm:$0xff]
  %v36 = vld [vmem:[%s1 + $0x30] sm:$0xff]
  %v37 = vld [vmem:[%s1 + $0x38] sm:$0xff]
  %v38 = vld [vmem:[%s1 + $0x40] sm:$0xff]
  %v39 = vld [vmem:[%s1 + $0x48] sm:$0xff]
  %v40 = vld [vmem:[%s1 + $0x50] sm:$0xff]
  %v41 = vld [vmem:[%s1 + $0x58] sm:$0xff]
  %v42 = vpack.c.bf16 %v28, %v27
  %v43 = vpack.c.bf16 %v29, %v29
  %v44 = vld [vmem:[%s6] ss:$4 sm:$0xf]
  %v46 = vlaneseq
  %v47 = vshrl.u32 %v46, 7
  %v48 = vsub.s32 0, %v47
  %v49 = vrot.slane %v44, %v48
  %v50 = vlaneseq
  %v51 = vshrl.u32 %v50, 7
  %v52 = vsub.s32 1, %v51
  %v53 = vrot.slane %v44, %v52
  %v54 = vlaneseq
  %v55 = vshrl.u32 %v54, 7
  %v56 = vsub.s32 2, %v55
  %v57 = vrot.slane %v44, %v56
  %v58 = vlaneseq
  %v59 = vshrl.u32 %v58, 7
  %v60 = vsub.s32 3, %v59
  %v61 = vrot.slane %v44, %v60
  %v78 = vunpack.c.l.b16 %v30
  %v79 = vunpack.c.h.b16 %v30
  %v80 = vunpack.c.l.b16 %v31
  %v81 = vunpack.c.h.b16 %v31
  %v82 = vunpack.c.l.b16 %v32
  %v83 = vunpack.c.h.b16 %v32
  %v84 = vunpack.c.l.b16 %v33
  %v85 = vunpack.c.h.b16 %v33
  %v86 = vunpack.c.l.b16 %v34
  %v87 = vunpack.c.h.b16 %v34
  %v88 = vunpack.c.l.b16 %v35
  %v89 = vunpack.c.h.b16 %v35
  %v90 = vunpack.c.l.b16 %v36
  %v91 = vunpack.c.h.b16 %v36
  %v92 = vunpack.c.l.b16 %v37
  %v93 = vunpack.c.h.b16 %v37
  %v94 = vunpack.c.l.b16 %v38
  %v95 = vunpack.c.h.b16 %v38
  %v96 = vunpack.c.l.b16 %v39
  %v97 = vunpack.c.h.b16 %v39
  %v98 = vunpack.c.l.b16 %v40
  %v99 = vunpack.c.h.b16 %v40
  %v100 = vunpack.c.l.b16 %v41
  %v101 = vunpack.c.h.b16 %v41
  %v102 = vpack.c.b16 %v82, %v78
  %v103 = vpack.c.b16 %v83, %v79
  %v104 = vpack.c.b16 %v84, %v80
  %v105 = vpack.c.b16 %v85, %v81
  %v106 = vpack.c.b16 %v90, %v86
  %v107 = vpack.c.b16 %v91, %v87
  %v108 = vpack.c.b16 %v92, %v88
  %v109 = vpack.c.b16 %v93, %v89
  %v110 = vpack.c.b16 %v98, %v94
  %v111 = vpack.c.b16 %v99, %v95
  %v112 = vpack.c.b16 %v100, %v96
  %v113 = vpack.c.b16 %v101, %v97
  %vm126 = vcmask 392192
  %v128 = vsel %vm126, %v42, 0
  %v131 = vsel %vm126, %v43, 0
  %133 = vmatprep.subr.bf16.mxu0 %v103
  %134 = vmatpush1.bf16.msra.mxu0 %v102
  %135 = vmatprep.subr.bf16.mxu0 %v107
  %136 = vmatpush1.bf16.msra.mxu0 %v106
  %137 = vmatprep.subr.bf16.mxu0 %v111
  %138 = vmatpush1.bf16.msra.mxu0 %v110
  %139 = vmatprep.subr.bf16.mxu0 0
  %140 = vmatpush1.bf16.msra.mxu0 0
  %141 = vmatprep.subr.bf16.mxu0 0
  %142 = vmatpush1.bf16.msra.mxu0 0
  %143 = vmatprep.subr.bf16.mxu0 0
  %144 = vmatpush1.bf16.msra.mxu0 0
  %145 = vmatprep.subr.bf16.mxu0 0
  %146 = vmatpush1.bf16.msra.mxu0 0
  %147 = vmatprep.subr.bf16.mxu0 0
  %148 = vmatpush1.bf16.msra.mxu0 0
  %149 = vmatprep.subr.bf16.mxu0 0
  %150 = vmatpush1.bf16.msra.mxu0 0
  %151 = vmatprep.subr.bf16.mxu0 0
  %152 = vmatpush1.bf16.msra.mxu0 0
  %153 = vmatprep.subr.bf16.mxu0 0
  %154 = vmatpush1.bf16.msra.mxu0 0
  %155 = vmatprep.subr.bf16.mxu0 0
  %156 = vmatpush1.bf16.msra.mxu0 0
  %157 = vmatprep.subr.bf16.mxu0 0
  %158 = vmatpush1.bf16.msra.mxu0 0
  %159 = vmatprep.subr.bf16.mxu0 0
  %160 = vmatpush1.bf16.msra.mxu0 0
  %161 = vmatprep.subr.bf16.mxu0 0
  %162 = vmatpush1.bf16.msra.mxu0 0
  %163 = vmatprep.subr.bf16.mxu0 0
  %164 = vmatpush1.bf16.msra.mxu0 0
  %165 = vmatprep.mubr.bf16.mxu0 0
  %166 = vmatmul.mubr.bf16.gmra.mrb[0].mxu0 %v128
  %v167 = vpop.f32.mrb[0].mxu0
  %v168 = vadd.f32 %v49, %v167
  %v169 = vpop.f32.mrb[0].mxu0
  %v170 = vadd.f32 %v53, %v169
  %v171 = vpop.f32.mrb[0].mxu0
  %v172 = vadd.f32 %v49, %v171
  %v173 = vpop.f32.mrb[0].mxu0
  %v174 = vadd.f32 %v53, %v173
  %175 = vmatprep.mubr.bf16.mxu0 0
  %176 = vmatmul.mubr.bf16.gmra.mrb[0].mxu0 %v131
  %v177 = vpop.f32.mrb[0].mxu0
  %v178 = vadd.f32 %v49, %v177
  %v179 = vpop.f32.mrb[0].mxu0
  %v180 = vadd.f32 %v53, %v179
  %v181 = vpop.f32.mrb[0].mxu0
  %v182 = vpop.f32.mrb[0].mxu0
  %183 = vdwg.mxu0
  %184 = vmatprep.subr.bf16.mxu0 %v105
  %185 = vmatpush1.bf16.msra.mxu0 %v104
  %186 = vmatprep.subr.bf16.mxu0 %v109
  %187 = vmatpush1.bf16.msra.mxu0 %v108
  %188 = vmatprep.subr.bf16.mxu0 %v113
  %189 = vmatpush1.bf16.msra.mxu0 %v112
  %190 = vmatprep.subr.bf16.mxu0 0
  %191 = vmatpush1.bf16.msra.mxu0 0
  %192 = vmatprep.subr.bf16.mxu0 0
  %193 = vmatpush1.bf16.msra.mxu0 0
  %194 = vmatprep.subr.bf16.mxu0 0
  %195 = vmatpush1.bf16.msra.mxu0 0
  %196 = vmatprep.subr.bf16.mxu0 0
  %197 = vmatpush1.bf16.msra.mxu0 0
  %198 = vmatprep.subr.bf16.mxu0 0
  %199 = vmatpush1.bf16.msra.mxu0 0
  %200 = vmatprep.subr.bf16.mxu0 0
  %201 = vmatpush1.bf16.msra.mxu0 0
  %202 = vmatprep.subr.bf16.mxu0 0
  %203 = vmatpush1.bf16.msra.mxu0 0
  %204 = vmatprep.subr.bf16.mxu0 0
  %205 = vmatpush1.bf16.msra.mxu0 0
  %206 = vmatprep.subr.bf16.mxu0 0
  %207 = vmatpush1.bf16.msra.mxu0 0
  %208 = vmatprep.subr.bf16.mxu0 0
  %209 = vmatpush1.bf16.msra.mxu0 0
  %210 = vmatprep.subr.bf16.mxu0 0
  %211 = vmatpush1.bf16.msra.mxu0 0
  %212 = vmatprep.subr.bf16.mxu0 0
  %213 = vmatpush1.bf16.msra.mxu0 0
  %214 = vmatprep.subr.bf16.mxu0 0
  %215 = vmatpush1.bf16.msra.mxu0 0
  %216 = vmatprep.mubr.bf16.mxu0 0
  %217 = vmatmul.mubr.bf16.gmra.mrb[0].mxu0 %v128
  %v218 = vpop.f32.mrb[0].mxu0
  %v219 = vadd.f32 %v57, %v218
  %v220 = vpop.f32.mrb[0].mxu0
  %v221 = vadd.f32 %v61, %v220
  %v222 = vpop.f32.mrb[0].mxu0
  %v223 = vadd.f32 %v57, %v222
  %v224 = vpop.f32.mrb[0].mxu0
  %v225 = vadd.f32 %v61, %v224
  %226 = vmatprep.mubr.bf16.mxu0 0
  %227 = vmatmul.mubr.bf16.gmra.mrb[0].mxu0 %v131
  %v228 = vpop.f32.mrb[0].mxu0
  %v229 = vadd.f32 %v57, %v228
  %v230 = vpop.f32.mrb[0].mxu0
  %v231 = vadd.f32 %v61, %v230
  %v232 = vpop.f32.mrb[0].mxu0
  %v233 = vpop.f32.mrb[0].mxu0
  %234 = vdwg.mxu0
  %v235 = vld [vmem:[%s2] sm:$0xff]
  %v236 = vld [vmem:[%s2 + $0x8] sm:$0xff]
  %v237 = vld [vmem:[%s2 + $0x18] sm:$0xff]
  %v238 = vld [vmem:[%s2 + $0x20] sm:$0xff]
  %v239 = vld [vmem:[%s2 + $0x30] sm:$0xff]
  %v240 = vld [vmem:[%s2 + $0x38] sm:$0xff]
  %v241 = vld [vmem:[%s2 + $0x48] sm:$0xff]
  %v242 = vld [vmem:[%s2 + $0x50] sm:$0xff]
  %v243 = vld [vmem:[%s2 + $0x60] sm:$0xff]
  %v244 = vld [vmem:[%s2 + $0x68] sm:$0xff]
  %v245 = vld [vmem:[%s2 + $0x78] sm:$0xff]
  %v246 = vld [vmem:[%s2 + $0x80] sm:$0xff]
  %v247 = vld [vmem:[%s2 + $0x90] sm:$0xff]
  %v248 = vld [vmem:[%s2 + $0x98] sm:$0xff]
  %v249 = vld [vmem:[%s2 + $0xa8] sm:$0xff]
  %v250 = vld [vmem:[%s2 + $0xb0] sm:$0xff]
  %v251 = vld [vmem:[%s2 + $0xc0] sm:$0xff]
  %v252 = vld [vmem:[%s2 + $0xc8] sm:$0xff]
  %v253 = vld [vmem:[%s2 + $0xd8] sm:$0xff]
  %v254 = vld [vmem:[%s2 + $0xe0] sm:$0xff]
  %v255 = vld [vmem:[%s2 + $0xf0] sm:$0xff]
  %v256 = vld [vmem:[%s2 + $0xf8] sm:$0xff]
  %v257 = vld [vmem:[%s2 + $0x108] sm:$0xff]
  %v258 = vld [vmem:[%s2 + $0x110] sm:$0xff]
  %v259 = vld [vmem:[%s2 + $0x120] sm:$0xff]
  %v260 = vld [vmem:[%s2 + $0x128] sm:$0xff]
  %v261 = vld [vmem:[%s2 + $0x138] sm:$0xff]
  %v262 = vld [vmem:[%s2 + $0x140] sm:$0xff]
  %v263 = vld [vmem:[%s2 + $0x150] sm:$0xff]
  %v264 = vld [vmem:[%s2 + $0x158] sm:$0xff]
  %v265 = vld [vmem:[%s2 + $0x168] sm:$0xff]
  %v266 = vld [vmem:[%s2 + $0x170] sm:$0xff]
  %v299 = vunpack.c.l.b16 %v235
  %v300 = vunpack.c.h.b16 %v235
  %v301 = vunpack.c.l.b16 %v236
  %v302 = vunpack.c.h.b16 %v236
  %v303 = vunpack.c.l.b16 %v237
  %v304 = vunpack.c.h.b16 %v237
  %v305 = vunpack.c.l.b16 %v238
  %v306 = vunpack.c.h.b16 %v238
  %v307 = vunpack.c.l.b16 %v239
  %v308 = vunpack.c.h.b16 %v239
  %v309 = vunpack.c.l.b16 %v240
  %v310 = vunpack.c.h.b16 %v240
  %v311 = vunpack.c.l.b16 %v241
  %v312 = vunpack.c.h.b16 %v241
  %v313 = vunpack.c.l.b16 %v242
  %v314 = vunpack.c.h.b16 %v242
  %v315 = vunpack.c.l.b16 %v243
  %v316 = vunpack.c.h.b16 %v243
  %v317 = vunpack.c.l.b16 %v244
  %v318 = vunpack.c.h.b16 %v244
  %v319 = vunpack.c.l.b16 %v245
  %v320 = vunpack.c.h.b16 %v245
  %v321 = vunpack.c.l.b16 %v246
  %v322 = vunpack.c.h.b16 %v246
  %v323 = vunpack.c.l.b16 %v247
  %v324 = vunpack.c.h.b16 %v247
  %v325 = vunpack.c.l.b16 %v248
  %v326 = vunpack.c.h.b16 %v248
  %v327 = vunpack.c.l.b16 %v249
  %v328 = vunpack.c.h.b16 %v249
  %v329 = vunpack.c.l.b16 %v250
  %v330 = vunpack.c.h.b16 %v250
  %v331 = vunpack.c.l.b16 %v251
  %v332 = vunpack.c.h.b16 %v251
  %v333 = vunpack.c.l.b16 %v252
  %v334 = vunpack.c.h.b16 %v252
  %v335 = vunpack.c.l.b16 %v253
  %v336 = vunpack.c.h.b16 %v253
  %v337 = vunpack.c.l.b16 %v254
  %v338 = vunpack.c.h.b16 %v254
  %v339 = vunpack.c.l.b16 %v255
  %v340 = vunpack.c.h.b16 %v255
  %v341 = vunpack.c.l.b16 %v256
  %v342 = vunpack.c.h.b16 %v256
  %v343 = vunpack.c.l.b16 %v257
  %v344 = vunpack.c.h.b16 %v257
  %v345 = vunpack.c.l.b16 %v258
  %v346 = vunpack.c.h.b16 %v258
  %v347 = vunpack.c.l.b16 %v259
  %v348 = vunpack.c.h.b16 %v259
  %v349 = vunpack.c.l.b16 %v260
  %v350 = vunpack.c.h.b16 %v260
  %v351 = vunpack.c.l.b16 %v261
  %v352 = vunpack.c.h.b16 %v261
  %v353 = vunpack.c.l.b16 %v262
  %v354 = vunpack.c.h.b16 %v262
  %v355 = vunpack.c.l.b16 %v263
  %v356 = vunpack.c.h.b16 %v263
  %v357 = vunpack.c.l.b16 %v264
  %v358 = vunpack.c.h.b16 %v264
  %v359 = vunpack.c.l.b16 %v265
  %v360 = vunpack.c.h.b16 %v265
  %v361 = vunpack.c.l.b16 %v266
  %v362 = vunpack.c.h.b16 %v266
  %v363 = vpack.c.b16 %v303, %v299
  %v364 = vpack.c.b16 %v304, %v300
  %v365 = vpack.c.b16 %v305, %v301
  %v366 = vpack.c.b16 %v306, %v302
  %v367 = vpack.c.b16 %v311, %v307
  %v368 = vpack.c.b16 %v312, %v308
  %v369 = vpack.c.b16 %v313, %v309
  %v370 = vpack.c.b16 %v314, %v310
  %v371 = vpack.c.b16 %v319, %v315
  %v372 = vpack.c.b16 %v320, %v316
  %v373 = vpack.c.b16 %v321, %v317
  %v374 = vpack.c.b16 %v322, %v318
  %v375 = vpack.c.b16 %v327, %v323
  %v376 = vpack.c.b16 %v328, %v324
  %v377 = vpack.c.b16 %v329, %v325
  %v378 = vpack.c.b16 %v330, %v326
  %v379 = vpack.c.b16 %v335, %v331
  %v380 = vpack.c.b16 %v336, %v332
  %v381 = vpack.c.b16 %v337, %v333
  %v382 = vpack.c.b16 %v338, %v334
  %v383 = vpack.c.b16 %v343, %v339
  %v384 = vpack.c.b16 %v344, %v340
  %v385 = vpack.c.b16 %v345, %v341
  %v386 = vpack.c.b16 %v346, %v342
  %v387 = vpack.c.b16 %v351, %v347
  %v388 = vpack.c.b16 %v352, %v348
  %v389 = vpack.c.b16 %v353, %v349
  %v390 = vpack.c.b16 %v354, %v350
  %v391 = vpack.c.b16 %v359, %v355
  %v392 = vpack.c.b16 %v360, %v356
  %v393 = vpack.c.b16 %v361, %v357
  %v394 = vpack.c.b16 %v362, %v358
  %427 = vmatprep.subr.bf16.mxu0 %v364
  %428 = vmatpush1.bf16.msra.mxu0 %v363
  %429 = vmatprep.subr.bf16.mxu0 %v368
  %430 = vmatpush1.bf16.msra.mxu0 %v367
  %431 = vmatprep.subr.bf16.mxu0 %v372
  %432 = vmatpush1.bf16.msra.mxu0 %v371
  %433 = vmatprep.subr.bf16.mxu0 %v376
  %434 = vmatpush1.bf16.msra.mxu0 %v375
  %435 = vmatprep.subr.bf16.mxu0 %v380
  %436 = vmatpush1.bf16.msra.mxu0 %v379
  %437 = vmatprep.subr.bf16.mxu0 %v384
  %438 = vmatpush1.bf16.msra.mxu0 %v383
  %439 = vmatprep.subr.bf16.mxu0 %v388
  %440 = vmatpush1.bf16.msra.mxu0 %v387
  %441 = vmatprep.subr.bf16.mxu0 %v392
  %442 = vmatpush1.bf16.msra.mxu0 %v391
  %443 = vmatprep.subr.bf16.mxu0 0
  %444 = vmatpush1.bf16.msra.mxu0 0
  %445 = vmatprep.subr.bf16.mxu0 0
  %446 = vmatpush1.bf16.msra.mxu0 0
  %447 = vmatprep.subr.bf16.mxu0 0
  %448 = vmatpush1.bf16.msra.mxu0 0
  %449 = vmatprep.subr.bf16.mxu0 0
  %450 = vmatpush1.bf16.msra.mxu0 0
  %451 = vmatprep.subr.bf16.mxu0 0
  %452 = vmatpush1.bf16.msra.mxu0 0
  %453 = vmatprep.subr.bf16.mxu0 0
  %454 = vmatpush1.bf16.msra.mxu0 0
  %455 = vmatprep.subr.bf16.mxu0 0
  %456 = vmatpush1.bf16.msra.mxu0 0
  %457 = vmatprep.subr.bf16.mxu0 0
  %458 = vmatpush1.bf16.msra.mxu0 0
  %459 = vmatprep.mubr.bf16.mxu0 0
  %460 = vmatmul.mubr.bf16.gmra.mrb[0].mxu0 0
  %v461 = vpop.f32.mrb[0].mxu0
  %v462 = vadd.f32 0.0, %v461
  %v463 = vpop.f32.mrb[0].mxu0
  %v464 = vadd.f32 0.0, %v463
  %v465 = vpop.f32.mrb[0].mxu0
  %v466 = vpop.f32.mrb[0].mxu0
  %467 = vdwg.mxu0
  %468 = vmatprep.subr.bf16.mxu0 %v366
  %469 = vmatpush1.bf16.msra.mxu0 %v365
  %470 = vmatprep.subr.bf16.mxu0 %v370
  %471 = vmatpush1.bf16.msra.mxu0 %v369
  %472 = vmatprep.subr.bf16.mxu0 %v374
  %473 = vmatpush1.bf16.msra.mxu0 %v373
  %474 = vmatprep.subr.bf16.mxu0 %v378
  %475 = vmatpush1.bf16.msra.mxu0 %v377
  %476 = vmatprep.subr.bf16.mxu0 %v382
  %477 = vmatpush1.bf16.msra.mxu0 %v381
  %478 = vmatprep.subr.bf16.mxu0 %v386
  %479 = vmatpush1.bf16.msra.mxu0 %v385
  %480 = vmatprep.subr.bf16.mxu0 %v390
  %481 = vmatpush1.bf16.msra.mxu0 %v389
  %482 = vmatprep.subr.bf16.mxu0 %v394
  %483 = vmatpush1.bf16.msra.mxu0 %v393
  %484 = vmatprep.subr.bf16.mxu0 0
  %485 = vmatpush1.bf16.msra.mxu0 0
  %486 = vmatprep.subr.bf16.mxu0 0
  %487 = vmatpush1.bf16.msra.mxu0 0
  %488 = vmatprep.subr.bf16.mxu0 0
  %489 = vmatpush1.bf16.msra.mxu0 0
  %490 = vmatprep.subr.bf16.mxu0 0
  %491 = vmatpush1.bf16.msra.mxu0 0
  %492 = vmatprep.subr.bf16.mxu0 0
  %493 = vmatpush1.bf16.msra.mxu0 0
  %494 = vmatprep.subr.bf16.mxu0 0
  %495 = vmatpush1.bf16.msra.mxu0 0
  %496 = vmatprep.subr.bf16.mxu0 0
  %497 = vmatpush1.bf16.msra.mxu0 0
  %498 = vmatprep.subr.bf16.mxu0 0
  %499 = vmatpush1.bf16.msra.mxu0 0
  %500 = vmatprep.mubr.bf16.mxu0 0
  %501 = vmatmul.mubr.bf16.gmra.mrb[0].mxu0 0
  %v502 = vpop.f32.mrb[0].mxu0
  %v503 = vadd.f32 0.0, %v502
  %v504 = vpop.f32.mrb[0].mxu0
  %v505 = vadd.f32 0.0, %v504
  %v506 = vpop.f32.mrb[0].mxu0
  %v507 = vpop.f32.mrb[0].mxu0
  %508 = vdwg.mxu0
  %v509 = vadd.f32 %v168, %v462
  %v510 = vadd.f32 %v170, %v464
  %v511 = vadd.f32 %v219, %v503
  %v512 = vadd.f32 %v221, %v505
  %v513 = vxor.u32 %v509, 2147483648
  %v514 = vmul.f32 %v513, 1.442695
  %v515 = vpow.pop %v514
  %v516 = vadd.f32 %v515, 1.0
  %v517 = vrcp.pop %v516
  %v518 = vmul.f32 1.0, %v517
  %v519 = vxor.u32 %v510, 2147483648
  %v520 = vmul.f32 %v519, 1.442695
  %v521 = vpow.pop %v520
  %v522 = vadd.f32 %v521, 1.0
  %v523 = vrcp.pop %v522
  %v524 = vmul.f32 1.0, %v523
  %v525 = vtanh.pop %v511
  %v526 = vxor.u32 %v512, 2147483648
  %v527 = vmul.f32 %v526, 1.442695
  %v528 = vpow.pop %v527
  %v529 = vadd.f32 %v528, 1.0
  %v530 = vrcp.pop %v529
  %v531 = vmul.f32 1.0, %v530
  %v532 = vmul.f32 %v524, 0.0
  %v533 = vmul.f32 %v518, %v525
  %v534 = vadd.f32 %v532, %v533
  %v535 = vtanh.pop %v534
  %v536 = vmul.f32 %v531, %v535
  %v537 = vld [vmem:[%s3 + $0x4] sm:$0xf]
  %v538 = vld [vmem:[%s3 + $0xc] sm:$0xf]
  %v539 = vld [vmem:[%s3 + $0x14] sm:$0xf]
  %v540 = vld [vmem:[%s3 + $0x1c] sm:$0xf]
  %v541 = vld [vmem:[%s3 + $0x24] sm:$0xf]
  %v542 = vld [vmem:[%s3 + $0x2c] sm:$0xf]
  %v543 = vld [vmem:[%s3 + $0x34] sm:$0xf]
  %v544 = vld [vmem:[%s3 + $0x3c] sm:$0xf]
  %v545 = vld [vmem:[%s3 + $0x44] sm:$0xf]
  %v546 = vld [vmem:[%s3 + $0x4c] sm:$0xf]
  %v547 = vld [vmem:[%s3 + $0x54] sm:$0xf]
  %v548 = vld [vmem:[%s3 + $0x5c] sm:$0xf]
  %v549 = vld [vmem:[%s3 + $0x64] sm:$0xf]
  %v550 = vld [vmem:[%s3 + $0x6c] sm:$0xf]
  %v551 = vld [vmem:[%s3 + $0x74] sm:$0xf]
  %v552 = vld [vmem:[%s3 + $0x7c] sm:$0xf]
  %v553 = vld [vmem:[%s3 + $0x84] sm:$0xf]
  %v554 = vld [vmem:[%s3 + $0x8c] sm:$0xf]
  %v555 = vld [vmem:[%s3 + $0x94] sm:$0xf]
  %v556 = vld [vmem:[%s3 + $0x9c] sm:$0xf]
  %v557 = vld [vmem:[%s3 + $0xa4] sm:$0xf]
  %v558 = vld [vmem:[%s3 + $0xac] sm:$0xf]
  %v559 = vld [vmem:[%s3 + $0xb4] sm:$0xf]
  %v560 = vld [vmem:[%s3 + $0xbc] sm:$0xf]
  %v561 = vld [vmem:[%s3 + $0xc4] sm:$0xf]
  %v562 = vld [vmem:[%s3 + $0xcc] sm:$0xf]
  %v563 = vld [vmem:[%s3 + $0xd4] sm:$0xf]
  %v564 = vld [vmem:[%s3 + $0xdc] sm:$0xf]
  %v565 = vld [vmem:[%s3 + $0xe4] sm:$0xf]
  %v566 = vld [vmem:[%s3 + $0xec] sm:$0xf]
  %v567 = vld [vmem:[%s3 + $0xf4] sm:$0xf]
  %v568 = vld [vmem:[%s3 + $0xfc] sm:$0xf]
  %v569 = vpack.c.bf16 0.0, 0.0
  %v570 = vpack.c.bf16 %v534, %v534
  %v571 = vld [vmem:[%s6 + $0x10] sm:$0xf]
  %v604 = vunpack.c.l.b16 %v537
  %v605 = vunpack.c.l.b16 %v538
  %v606 = vunpack.c.l.b16 %v539
  %v607 = vunpack.c.l.b16 %v540
  %v608 = vunpack.c.l.b16 %v541
  %v609 = vunpack.c.l.b16 %v542
  %v610 = vunpack.c.l.b16 %v543
  %v611 = vunpack.c.l.b16 %v544
  %v612 = vunpack.c.l.b16 %v545
  %v613 = vunpack.c.l.b16 %v546
  %v614 = vunpack.c.l.b16 %v547
  %v615 = vunpack.c.l.b16 %v548
  %v616 = vunpack.c.l.b16 %v549
  %v617 = vunpack.c.l.b16 %v550
  %v618 = vunpack.c.l.b16 %v551
  %v619 = vunpack.c.l.b16 %v552
  %v620 = vunpack.c.l.b16 %v553
  %v621 = vunpack.c.l.b16 %v554
  %v622 = vunpack.c.l.b16 %v555
  %v623 = vunpack.c.l.b16 %v556
  %v624 = vunpack.c.l.b16 %v557
  %v625 = vunpack.c.l.b16 %v558
  %v626 = vunpack.c.l.b16 %v559
  %v627 = vunpack.c.l.b16 %v560
  %v628 = vunpack.c.l.b16 %v561
  %v629 = vunpack.c.l.b16 %v562
  %v630 = vunpack.c.l.b16 %v563
  %v631 = vunpack.c.l.b16 %v564
  %v632 = vunpack.c.l.b16 %v565
  %v633 = vunpack.c.l.b16 %v566
  %v634 = vunpack.c.l.b16 %v567
  %v635 = vunpack.c.l.b16 %v568
  %v636 = vpack.c.b16 %v605, %v604
  %v637 = vpack.c.b16 %v607, %v606
  %v638 = vpack.c.b16 %v609, %v608
  %v639 = vpack.c.b16 %v611, %v610
  %v640 = vpack.c.b16 %v613, %v612
  %v641 = vpack.c.b16 %v615, %v614
  %v642 = vpack.c.b16 %v617, %v616
  %v643 = vpack.c.b16 %v619, %v618
  %v644 = vpack.c.b16 %v621, %v620
  %v645 = vpack.c.b16 %v623, %v622
  %v646 = vpack.c.b16 %v625, %v624
  %v647 = vpack.c.b16 %v627, %v626
  %v648 = vpack.c.b16 %v629, %v628
  %v649 = vpack.c.b16 %v631, %v630
  %v650 = vpack.c.b16 %v633, %v632
  %v651 = vpack.c.b16 %v635, %v634
  %668 = vmatprep.subr.bf16.mxu0 0
  %669 = vmatpush1.bf16.msra.mxu0 %v636
  %670 = vmatprep.subr.bf16.mxu0 0
  %671 = vmatpush1.bf16.msra.mxu0 %v637
  %672 = vmatprep.subr.bf16.mxu0 0
  %673 = vmatpush1.bf16.msra.mxu0 %v638
  %674 = vmatprep.subr.bf16.mxu0 0
  %675 = vmatpush1.bf16.msra.mxu0 %v639
  %676 = vmatprep.subr.bf16.mxu0 0
  %677 = vmatpush1.bf16.msra.mxu0 %v640
  %678 = vmatprep.subr.bf16.mxu0 0
  %679 = vmatpush1.bf16.msra.mxu0 %v641
  %680 = vmatprep.subr.bf16.mxu0 0
  %681 = vmatpush1.bf16.msra.mxu0 %v642
  %682 = vmatprep.subr.bf16.mxu0 0
  %683 = vmatpush1.bf16.msra.mxu0 %v643
  %684 = vmatprep.subr.bf16.mxu0 0
  %685 = vmatpush1.bf16.msra.mxu0 %v644
  %686 = vmatprep.subr.bf16.mxu0 0
  %687 = vmatpush1.bf16.msra.mxu0 %v645
  %688 = vmatprep.subr.bf16.mxu0 0
  %689 = vmatpush1.bf16.msra.mxu0 %v646
  %690 = vmatprep.subr.bf16.mxu0 0
  %691 = vmatpush1.bf16.msra.mxu0 %v647
  %692 = vmatprep.subr.bf16.mxu0 0
  %693 = vmatpush1.bf16.msra.mxu0 %v648
  %694 = vmatprep.subr.bf16.mxu0 0
  %695 = vmatpush1.bf16.msra.mxu0 %v649
  %696 = vmatprep.subr.bf16.mxu0 0
  %697 = vmatpush1.bf16.msra.mxu0 %v650
  %698 = vmatprep.subr.bf16.mxu0 0
  %699 = vmatpush1.bf16.msra.mxu0 %v651
  %700 = vmatprep.mubr.bf16.mxu0 %v570
  %701 = vmatmul.mubr.bf16.gmra.mrb[0].mxu0 %v569
  %v702 = vpop.f32.mrb[0].mxu0
  %v703 = vadd.f32 %v571, %v702
  %v704 = vpop.f32.mrb[0].mxu0
  %v705 = vpop.f32.mrb[0].mxu0
  %v706 = vpop.f32.mrb[0].mxu0
  %707 = vdwg.mxu0
  %v708 = vmax.f32 %v703, 0.0
  %v709 = vld [vmem:[%s4] sm:$0xff]
  %v710 = vld [vmem:[%s4 + $0xc] sm:$0xff]
  %v711 = vld [vmem:[%s4 + $0x18] sm:$0xff]
  %v712 = vld [vmem:[%s4 + $0x24] sm:$0xff]
  %v713 = vpack.c.bf16 %v708, %v708
  %v714 = vld [vmem:[%s6 + $0x14] sm:$0xff]
  %v719 = vunpack.c.l.b16 %v709
  %v720 = vunpack.c.h.b16 %v709
  %v721 = vunpack.c.l.b16 %v710
  %v722 = vunpack.c.h.b16 %v710
  %v723 = vunpack.c.l.b16 %v711
  %v724 = vunpack.c.h.b16 %v711
  %v725 = vunpack.c.l.b16 %v712
  %v726 = vunpack.c.h.b16 %v712
  %v727 = vpack.c.b16 %v721, %v719
  %v728 = vpack.c.b16 %v722, %v720
  %v729 = vpack.c.b16 %v725, %v723
  %v730 = vpack.c.b16 %v726, %v724
  %v736 = vcombine.high %v714, %v714
  %vm738 = vcmask 261120
  %v740 = vsel %vm738, %v713, 0
  %742 = vmatprep.subr.bf16.mxu0 %v728
  %743 = vmatpush1.bf16.msra.mxu0 %v727
  %744 = vmatprep.subr.bf16.mxu0 %v730
  %745 = vmatpush1.bf16.msra.mxu0 %v729
  %746 = vmatprep.subr.bf16.mxu0 0
  %747 = vmatpush1.bf16.msra.mxu0 0
  %748 = vmatprep.subr.bf16.mxu0 0
  %749 = vmatpush1.bf16.msra.mxu0 0
  %750 = vmatprep.subr.bf16.mxu0 0
  %751 = vmatpush1.bf16.msra.mxu0 0
  %752 = vmatprep.subr.bf16.mxu0 0
  %753 = vmatpush1.bf16.msra.mxu0 0
  %754 = vmatprep.subr.bf16.mxu0 0
  %755 = vmatpush1.bf16.msra.mxu0 0
  %756 = vmatprep.subr.bf16.mxu0 0
  %757 = vmatpush1.bf16.msra.mxu0 0
  %758 = vmatprep.subr.bf16.mxu0 0
  %759 = vmatpush1.bf16.msra.mxu0 0
  %760 = vmatprep.subr.bf16.mxu0 0
  %761 = vmatpush1.bf16.msra.mxu0 0
  %762 = vmatprep.subr.bf16.mxu0 0
  %763 = vmatpush1.bf16.msra.mxu0 0
  %764 = vmatprep.subr.bf16.mxu0 0
  %765 = vmatpush1.bf16.msra.mxu0 0
  %766 = vmatprep.subr.bf16.mxu0 0
  %767 = vmatpush1.bf16.msra.mxu0 0
  %768 = vmatprep.subr.bf16.mxu0 0
  %769 = vmatpush1.bf16.msra.mxu0 0
  %770 = vmatprep.subr.bf16.mxu0 0
  %771 = vmatpush1.bf16.msra.mxu0 0
  %772 = vmatprep.subr.bf16.mxu0 0
  %773 = vmatpush1.bf16.msra.mxu0 0
  %774 = vmatprep.mubr.bf16.mxu0 0
  %775 = vmatmul.mubr.bf16.gmra.mrb[0].mxu0 %v740
  %v776 = vpop.f32.mrb[0].mxu0
  %v777 = vadd.f32 %v714, %v776
  %v778 = vpop.f32.mrb[0].mxu0
  %v779 = vadd.f32 %v736, %v778
  %v780 = vpop.f32.mrb[0].mxu0
  %v781 = vpop.f32.mrb[0].mxu0
  %782 = vdwg.mxu0
  %vm783 = vcmask 1043456
  %v784 = vsel %vm783, %v777, -inf
  %v785 = vsel %vm783, %v779, -inf
  %v786 = vmax.f32 %v784, %v785
  %787 = vmax.xlane.f32.xlu0 %v786
  %v788 = vpop.xlane.xlu0 %787
  %v789 = vsub.f32 %v777, %v788
  %v790 = vsub.f32 %v779, %v788
  %v791 = vmul.f32 %v789, 1.442695
  %v792 = vpow.pop %v791
  %v793 = vmul.f32 %v790, 1.442695
  %v794 = vpow.pop %v793
  %v795 = vsel %vm783, %v792, 0.0
  %v796 = vsel %vm783, %v794, 0.0
  %v797 = vadd.f32 %v795, %v796
  %798 = vadd.xlane.f32.xlu0 %v797
  %v799 = vpop.xlane.xlu0 %798
  %v800 = vrcp.pop %v799
  %v801 = vmul.f32 %v792, %v800
  %v802 = vmul.f32 %v794, %v800
  %v803 = vmul.f32 %v801, 0.0
  %v804 = vmul.f32 %v802, %v534
  %v805 = vld [vmem:[%s3] sm:$0xf]
  %v806 = vld [vmem:[%s3 + $0x8] sm:$0xf]
  %v807 = vld [vmem:[%s3 + $0x10] sm:$0xf]
  %v808 = vld [vmem:[%s3 + $0x18] sm:$0xf]
  %v809 = vld [vmem:[%s3 + $0x20] sm:$0xf]
  %v810 = vld [vmem:[%s3 + $0x28] sm:$0xf]
  %v811 = vld [vmem:[%s3 + $0x30] sm:$0xf]
  %v812 = vld [vmem:[%s3 + $0x38] sm:$0xf]
  %v813 = vld [vmem:[%s3 + $0x40] sm:$0xf]
  %v814 = vld [vmem:[%s3 + $0x48] sm:$0xf]
  %v815 = vld [vmem:[%s3 + $0x50] sm:$0xf]
  %v816 = vld [vmem:[%s3 + $0x58] sm:$0xf]
  %v817 = vld [vmem:[%s3 + $0x60] sm:$0xf]
  %v818 = vld [vmem:[%s3 + $0x68] sm:$0xf]
  %v819 = vld [vmem:[%s3 + $0x70] sm:$0xf]
  %v820 = vld [vmem:[%s3 + $0x78] sm:$0xf]
  %v821 = vld [vmem:[%s3 + $0x80] sm:$0xf]
  %v822 = vld [vmem:[%s3 + $0x88] sm:$0xf]
  %v823 = vld [vmem:[%s3 + $0x90] sm:$0xf]
  %v824 = vld [vmem:[%s3 + $0x98] sm:$0xf]
  %v825 = vld [vmem:[%s3 + $0xa0] sm:$0xf]
  %v826 = vld [vmem:[%s3 + $0xa8] sm:$0xf]
  %v827 = vld [vmem:[%s3 + $0xb0] sm:$0xf]
  %v828 = vld [vmem:[%s3 + $0xb8] sm:$0xf]
  %v829 = vld [vmem:[%s3 + $0xc0] sm:$0xf]
  %v830 = vld [vmem:[%s3 + $0xc8] sm:$0xf]
  %v831 = vld [vmem:[%s3 + $0xd0] sm:$0xf]
  %v832 = vld [vmem:[%s3 + $0xd8] sm:$0xf]
  %v833 = vld [vmem:[%s3 + $0xe0] sm:$0xf]
  %v834 = vld [vmem:[%s3 + $0xe8] sm:$0xf]
  %v835 = vld [vmem:[%s3 + $0xf0] sm:$0xf]
  %v836 = vld [vmem:[%s3 + $0xf8] sm:$0xf]
  %v837 = vpack.c.bf16 %v803, %v803
  %v838 = vpack.c.bf16 %v804, %v804
  %v839 = vld [vmem:[%s5] sm:$0xf]
  %v840 = vld [vmem:[%s5 + $0x8] sm:$0xf]
  %v843 = vunpack.c.l.b16 %v839
  %v844 = vunpack.c.l.b16 %v840
  %v845 = vpack.c.b16 %v844, %v843
  %vm847 = vcmask 130048
  %v849 = vsel %vm847, 0, 0
  %851 = vmatprep.subr.bf16.mxu0 0
  %852 = vmatpush1.bf16.msra.mxu0 %v845
  %853 = vmatprep.subr.bf16.mxu0 0
  %854 = vmatpush1.bf16.msra.mxu0 0
  %855 = vmatprep.subr.bf16.mxu0 0
  %856 = vmatpush1.bf16.msra.mxu0 0
  %857 = vmatprep.subr.bf16.mxu0 0
  %858 = vmatpush1.bf16.msra.mxu0 0
  %859 = vmatprep.subr.bf16.mxu0 0
  %860 = vmatpush1.bf16.msra.mxu0 0
  %861 = vmatprep.subr.bf16.mxu0 0
  %862 = vmatpush1.bf16.msra.mxu0 0
  %863 = vmatprep.subr.bf16.mxu0 0
  %864 = vmatpush1.bf16.msra.mxu0 0
  %865 = vmatprep.subr.bf16.mxu0 0
  %866 = vmatpush1.bf16.msra.mxu0 0
  %867 = vmatprep.subr.bf16.mxu0 0
  %868 = vmatpush1.bf16.msra.mxu0 0
  %869 = vmatprep.subr.bf16.mxu0 0
  %870 = vmatpush1.bf16.msra.mxu0 0
  %871 = vmatprep.subr.bf16.mxu0 0
  %872 = vmatpush1.bf16.msra.mxu0 0
  %873 = vmatprep.subr.bf16.mxu0 0
  %874 = vmatpush1.bf16.msra.mxu0 0
  %875 = vmatprep.subr.bf16.mxu0 0
  %876 = vmatpush1.bf16.msra.mxu0 0
  %877 = vmatprep.subr.bf16.mxu0 0
  %878 = vmatpush1.bf16.msra.mxu0 0
  %879 = vmatprep.subr.bf16.mxu0 0
  %880 = vmatpush1.bf16.msra.mxu0 0
  %881 = vmatprep.subr.bf16.mxu0 0
  %882 = vmatpush1.bf16.msra.mxu0 0
  %883 = vmatprep.mubr.bf16.mxu0 0
  %884 = vmatmul.mubr.bf16.gmra.mrb[0].mxu0 %v849
  %v885 = vpop.f32.mrb[0].mxu0
  %v886 = vadd.f32 0.0, %v885
  %v887 = vpop.f32.mrb[0].mxu0
  %v888 = vpop.f32.mrb[0].mxu0
  %v889 = vpop.f32.mrb[0].mxu0
  %890 = vdwg.mxu0
  %v923 = vunpack.c.l.b16 %v805
  %v924 = vunpack.c.l.b16 %v806
  %v925 = vunpack.c.l.b16 %v807
  %v926 = vunpack.c.l.b16 %v808
  %v927 = vunpack.c.l.b16 %v809
  %v928 = vunpack.c.l.b16 %v810
  %v929 = vunpack.c.l.b16 %v811
  %v930 = vunpack.c.l.b16 %v812
  %v931 = vunpack.c.l.b16 %v813
  %v932 = vunpack.c.l.b16 %v814
  %v933 = vunpack.c.l.b16 %v815
  %v934 = vunpack.c.l.b16 %v816
  %v935 = vunpack.c.l.b16 %v817
  %v936 = vunpack.c.l.b16 %v818
  %v937 = vunpack.c.l.b16 %v819
  %v938 = vunpack.c.l.b16 %v820
  %v939 = vunpack.c.l.b16 %v821
  %v940 = vunpack.c.l.b16 %v822
  %v941 = vunpack.c.l.b16 %v823
  %v942 = vunpack.c.l.b16 %v824
  %v943 = vunpack.c.l.b16 %v825
  %v944 = vunpack.c.l.b16 %v826
  %v945 = vunpack.c.l.b16 %v827
  %v946 = vunpack.c.l.b16 %v828
  %v947 = vunpack.c.l.b16 %v829
  %v948 = vunpack.c.l.b16 %v830
  %v949 = vunpack.c.l.b16 %v831
  %v950 = vunpack.c.l.b16 %v832
  %v951 = vunpack.c.l.b16 %v833
  %v952 = vunpack.c.l.b16 %v834
  %v953 = vunpack.c.l.b16 %v835
  %v954 = vunpack.c.l.b16 %v836
  %v955 = vpack.c.b16 %v924, %v923
  %v956 = vpack.c.b16 %v926, %v925
  %v957 = vpack.c.b16 %v928, %v927
  %v958 = vpack.c.b16 %v930, %v929
  %v959 = vpack.c.b16 %v932, %v931
  %v960 = vpack.c.b16 %v934, %v933
  %v961 = vpack.c.b16 %v936, %v935
  %v962 = vpack.c.b16 %v938, %v937
  %v963 = vpack.c.b16 %v940, %v939
  %v964 = vpack.c.b16 %v942, %v941
  %v965 = vpack.c.b16 %v944, %v943
  %v966 = vpack.c.b16 %v946, %v945
  %v967 = vpack.c.b16 %v948, %v947
  %v968 = vpack.c.b16 %v950, %v949
  %v969 = vpack.c.b16 %v952, %v951
  %v970 = vpack.c.b16 %v954, %v953
  %987 = vmatprep.subr.bf16.mxu0 0
  %988 = vmatpush1.bf16.msra.mxu0 %v955
  %989 = vmatprep.subr.bf16.mxu0 0
  %990 = vmatpush1.bf16.msra.mxu0 %v956
  %991 = vmatprep.subr.bf16.mxu0 0
  %992 = vmatpush1.bf16.msra.mxu0 %v957
  %993 = vmatprep.subr.bf16.mxu0 0
  %994 = vmatpush1.bf16.msra.mxu0 %v958
  %995 = vmatprep.subr.bf16.mxu0 0
  %996 = vmatpush1.bf16.msra.mxu0 %v959
  %997 = vmatprep.subr.bf16.mxu0 0
  %998 = vmatpush1.bf16.msra.mxu0 %v960
  %999 = vmatprep.subr.bf16.mxu0 0
  %1000 = vmatpush1.bf16.msra.mxu0 %v961
  %1001 = vmatprep.subr.bf16.mxu0 0
  %1002 = vmatpush1.bf16.msra.mxu0 %v962
  %1003 = vmatprep.subr.bf16.mxu0 0
  %1004 = vmatpush1.bf16.msra.mxu0 %v963
  %1005 = vmatprep.subr.bf16.mxu0 0
  %1006 = vmatpush1.bf16.msra.mxu0 %v964
  %1007 = vmatprep.subr.bf16.mxu0 0
  %1008 = vmatpush1.bf16.msra.mxu0 %v965
  %1009 = vmatprep.subr.bf16.mxu0 0
  %1010 = vmatpush1.bf16.msra.mxu0 %v966
  %1011 = vmatprep.subr.bf16.mxu0 0
  %1012 = vmatpush1.bf16.msra.mxu0 %v967
  %1013 = vmatprep.subr.bf16.mxu0 0
  %1014 = vmatpush1.bf16.msra.mxu0 %v968
  %1015 = vmatprep.subr.bf16.mxu0 0
  %1016 = vmatpush1.bf16.msra.mxu0 %v969
  %1017 = vmatprep.subr.bf16.mxu0 0
  %1018 = vmatpush1.bf16.msra.mxu0 %v970
  %1019 = vmatprep.mubr.bf16.mxu0 %v838
  %1020 = vmatmul.mubr.bf16.gmra.mrb[0].mxu0 %v837
  %v1021 = vpop.f32.mrb[0].mxu0
  %v1022 = vadd.f32 %v886, %v1021
  %v1023 = vpop.f32.mrb[0].mxu0
  %v1024 = vpop.f32.mrb[0].mxu0
  %v1025 = vpop.f32.mrb[0].mxu0
  %1026 = vdwg.mxu0
  %v1027 = vld [vmem:[%s6 + $0x1c] sm:$0xf]
  %v1028 = vadd.f32 %v1022, %v1027
  %v1029 = vmax.f32 %v1028, 0.0
  %v1030 = vld [vmem:[%s2 + $0x10] sm:$0xf]
  %v1031 = vld [vmem:[%s2 + $0x28] sm:$0xf]
  %v1032 = vld [vmem:[%s2 + $0x40] sm:$0xf]
  %v1033 = vld [vmem:[%s2 + $0x58] sm:$0xf]
  %v1034 = vld [vmem:[%s2 + $0x70] sm:$0xf]
  %v1035 = vld [vmem:[%s2 + $0x88] sm:$0xf]
  %v1036 = vld [vmem:[%s2 + $0xa0] sm:$0xf]
  %v1037 = vld [vmem:[%s2 + $0xb8] sm:$0xf]
  %v1038 = vld [vmem:[%s2 + $0xd0] sm:$0xf]
  %v1039 = vld [vmem:[%s2 + $0xe8] sm:$0xf]
  %v1040 = vld [vmem:[%s2 + $0x100] sm:$0xf]
  %v1041 = vld [vmem:[%s2 + $0x118] sm:$0xf]
  %v1042 = vld [vmem:[%s2 + $0x130] sm:$0xf]
  %v1043 = vld [vmem:[%s2 + $0x148] sm:$0xf]
  %v1044 = vld [vmem:[%s2 + $0x160] sm:$0xf]
  %v1045 = vld [vmem:[%s2 + $0x178] sm:$0xf]
  %v1046 = vpack.c.bf16 %v1029, %v1029
  %v1047 = vld [vmem:[%s6 + $0x20] sm:$0xf]
  %v1064 = vunpack.c.l.b16 %v1030
  %v1065 = vunpack.c.l.b16 %v1031
  %v1066 = vunpack.c.l.b16 %v1032
  %v1067 = vunpack.c.l.b16 %v1033
  %v1068 = vunpack.c.l.b16 %v1034
  %v1069 = vunpack.c.l.b16 %v1035
  %v1070 = vunpack.c.l.b16 %v1036
  %v1071 = vunpack.c.l.b16 %v1037
  %v1072 = vunpack.c.l.b16 %v1038
  %v1073 = vunpack.c.l.b16 %v1039
  %v1074 = vunpack.c.l.b16 %v1040
  %v1075 = vunpack.c.l.b16 %v1041
  %v1076 = vunpack.c.l.b16 %v1042
  %v1077 = vunpack.c.l.b16 %v1043
  %v1078 = vunpack.c.l.b16 %v1044
  %v1079 = vunpack.c.l.b16 %v1045
  %v1080 = vpack.c.b16 %v1065, %v1064
  %v1081 = vpack.c.b16 %v1067, %v1066
  %v1082 = vpack.c.b16 %v1069, %v1068
  %v1083 = vpack.c.b16 %v1071, %v1070
  %v1084 = vpack.c.b16 %v1073, %v1072
  %v1085 = vpack.c.b16 %v1075, %v1074
  %v1086 = vpack.c.b16 %v1077, %v1076
  %v1087 = vpack.c.b16 %v1079, %v1078
  %1096 = vmatprep.subr.bf16.mxu0 0
  %1097 = vmatpush1.bf16.msra.mxu0 %v1080
  %1098 = vmatprep.subr.bf16.mxu0 0
  %1099 = vmatpush1.bf16.msra.mxu0 %v1081
  %1100 = vmatprep.subr.bf16.mxu0 0
  %1101 = vmatpush1.bf16.msra.mxu0 %v1082
  %1102 = vmatprep.subr.bf16.mxu0 0
  %1103 = vmatpush1.bf16.msra.mxu0 %v1083
  %1104 = vmatprep.subr.bf16.mxu0 0
  %1105 = vmatpush1.bf16.msra.mxu0 %v1084
  %1106 = vmatprep.subr.bf16.mxu0 0
  %1107 = vmatpush1.bf16.msra.mxu0 %v1085
  %1108 = vmatprep.subr.bf16.mxu0 0
  %1109 = vmatpush1.bf16.msra.mxu0 %v1086
  %1110 = vmatprep.subr.bf16.mxu0 0
  %1111 = vmatpush1.bf16.msra.mxu0 %v1087
  %1112 = vmatprep.subr.bf16.mxu0 0
  %1113 = vmatpush1.bf16.msra.mxu0 0
  %1114 = vmatprep.subr.bf16.mxu0 0
  %1115 = vmatpush1.bf16.msra.mxu0 0
  %1116 = vmatprep.subr.bf16.mxu0 0
  %1117 = vmatpush1.bf16.msra.mxu0 0
  %1118 = vmatprep.subr.bf16.mxu0 0
  %1119 = vmatpush1.bf16.msra.mxu0 0
  %1120 = vmatprep.subr.bf16.mxu0 0
  %1121 = vmatpush1.bf16.msra.mxu0 0
  %1122 = vmatprep.subr.bf16.mxu0 0
  %1123 = vmatpush1.bf16.msra.mxu0 0
  %1124 = vmatprep.subr.bf16.mxu0 0
  %1125 = vmatpush1.bf16.msra.mxu0 0
  %1126 = vmatprep.subr.bf16.mxu0 0
  %1127 = vmatpush1.bf16.msra.mxu0 0
  %1128 = vmatprep.mubr.bf16.mxu0 0
  %1129 = vmatmul.mubr.bf16.gmra.mrb[0].mxu0 %v1046
  %v1130 = vpop.f32.mrb[0].mxu0
  %v1131 = vadd.f32 %v1047, %v1130
  %v1132 = vpop.f32.mrb[0].mxu0
  %v1133 = vpop.f32.mrb[0].mxu0
  %v1134 = vpop.f32.mrb[0].mxu0
  %1135 = vdwg.mxu0
  %v1136 = vtanh.pop %v1131
  %v1137 = vxor.u32 %v1131, 2147483648
  %v1138 = vmul.f32 %v1137, 1.442695
  %v1139 = vpow.pop %v1138
  %v1140 = vadd.f32 %v1139, 1.0
  %v1141 = vrcp.pop %v1140
  %v1142 = vmul.f32 1.0, %v1141
  %v1143 = vmul.f32 %v1142, 0.0
  %1145 = vrot.lane.b32.xlu0 %v1136, 32
  %v1146 = vpop.permute.xlu0 %1145
  %v1148 = vmul.f32 %v1142, %v1146
  %1150 = vrot.lane.b32.xlu0 %v1148, 112
  %v1151 = vpop.permute.xlu0 %1150
  %v1153 = vadd.f32 %v1143, %v1151
  %v1154 = vpack.c.bf16 %v536, %v536
  %1155 = vmatprep.subr.bf16.mxu0 %v364
  %1156 = vmatpush1.bf16.msra.mxu0 %v363
  %1157 = vmatprep.subr.bf16.mxu0 %v368
  %1158 = vmatpush1.bf16.msra.mxu0 %v367
  %1159 = vmatprep.subr.bf16.mxu0 %v372
  %1160 = vmatpush1.bf16.msra.mxu0 %v371
  %1161 = vmatprep.subr.bf16.mxu0 %v376
  %1162 = vmatpush1.bf16.msra.mxu0 %v375
  %1163 = vmatprep.subr.bf16.mxu0 %v380
  %1164 = vmatpush1.bf16.msra.mxu0 %v379
  %1165 = vmatprep.subr.bf16.mxu0 %v384
  %1166 = vmatpush1.bf16.msra.mxu0 %v383
  %1167 = vmatprep.subr.bf16.mxu0 %v388
  %1168 = vmatpush1.bf16.msra.mxu0 %v387
  %1169 = vmatprep.subr.bf16.mxu0 %v392
  %1170 = vmatpush1.bf16.msra.mxu0 %v391
  %1171 = vmatprep.subr.bf16.mxu0 0
  %1172 = vmatpush1.bf16.msra.mxu0 0
  %1173 = vmatprep.subr.bf16.mxu0 0
  %1174 = vmatpush1.bf16.msra.mxu0 0
  %1175 = vmatprep.subr.bf16.mxu0 0
  %1176 = vmatpush1.bf16.msra.mxu0 0
  %1177 = vmatprep.subr.bf16.mxu0 0
  %1178 = vmatpush1.bf16.msra.mxu0 0
  %1179 = vmatprep.subr.bf16.mxu0 0
  %1180 = vmatpush1.bf16.msra.mxu0 0
  %1181 = vmatprep.subr.bf16.mxu0 0
  %1182 = vmatpush1.bf16.msra.mxu0 0
  %1183 = vmatprep.subr.bf16.mxu0 0
  %1184 = vmatpush1.bf16.msra.mxu0 0
  %1185 = vmatprep.subr.bf16.mxu0 0
  %1186 = vmatpush1.bf16.msra.mxu0 0
  %1187 = vmatprep.mubr.bf16.mxu0 0
  %1188 = vmatmul.mubr.bf16.gmra.mrb[0].mxu0 %v1154
  %v1189 = vpop.f32.mrb[0].mxu0
  %v1190 = vadd.f32 0.0, %v1189
  %v1191 = vpop.f32.mrb[0].mxu0
  %v1192 = vadd.f32 0.0, %v1191
  %v1193 = vpop.f32.mrb[0].mxu0
  %v1194 = vpop.f32.mrb[0].mxu0
  %1195 = vdwg.mxu0
  %1196 = vmatprep.subr.bf16.mxu0 %v366
  %1197 = vmatpush1.bf16.msra.mxu0 %v365
  %1198 = vmatprep.subr.bf16.mxu0 %v370
  %1199 = vmatpush1.bf16.msra.mxu0 %v369
  %1200 = vmatprep.subr.bf16.mxu0 %v374
  %1201 = vmatpush1.bf16.msra.mxu0 %v373
  %1202 = vmatprep.subr.bf16.mxu0 %v378
  %1203 = vmatpush1.bf16.msra.mxu0 %v377
  %1204 = vmatprep.subr.bf16.mxu0 %v382
  %1205 = vmatpush1.bf16.msra.mxu0 %v381
  %1206 = vmatprep.subr.bf16.mxu0 %v386
  %1207 = vmatpush1.bf16.msra.mxu0 %v385
  %1208 = vmatprep.subr.bf16.mxu0 %v390
  %1209 = vmatpush1.bf16.msra.mxu0 %v389
  %1210 = vmatprep.subr.bf16.mxu0 %v394
  %1211 = vmatpush1.bf16.msra.mxu0 %v393
  %1212 = vmatprep.subr.bf16.mxu0 0
  %1213 = vmatpush1.bf16.msra.mxu0 0
  %1214 = vmatprep.subr.bf16.mxu0 0
  %1215 = vmatpush1.bf16.msra.mxu0 0
  %1216 = vmatprep.subr.bf16.mxu0 0
  %1217 = vmatpush1.bf16.msra.mxu0 0
  %1218 = vmatprep.subr.bf16.mxu0 0
  %1219 = vmatpush1.bf16.msra.mxu0 0
  %1220 = vmatprep.subr.bf16.mxu0 0
  %1221 = vmatpush1.bf16.msra.mxu0 0
  %1222 = vmatprep.subr.bf16.mxu0 0
  %1223 = vmatpush1.bf16.msra.mxu0 0
  %1224 = vmatprep.subr.bf16.mxu0 0
  %1225 = vmatpush1.bf16.msra.mxu0 0
  %1226 = vmatprep.subr.bf16.mxu0 0
  %1227 = vmatpush1.bf16.msra.mxu0 0
  %1228 = vmatprep.mubr.bf16.mxu0 0
  %1229 = vmatmul.mubr.bf16.gmra.mrb[0].mxu0 %v1154
  %v1230 = vpop.f32.mrb[0].mxu0
  %v1231 = vadd.f32 0.0, %v1230
  %v1232 = vpop.f32.mrb[0].mxu0
  %v1233 = vadd.f32 0.0, %v1232
  %v1234 = vpop.f32.mrb[0].mxu0
  %v1235 = vpop.f32.mrb[0].mxu0
  %1236 = vdwg.mxu0
  %v1241 = vrot.slane %v1190, 4
  %v1242 = vrot.slane %v1192, 4
  %v1243 = vrot.slane %v1231, 4
  %v1244 = vrot.slane %v1233, 4
  %v1249 = vadd.f32 %v168, %v1241
  %v1250 = vadd.f32 %v170, %v1242
  %v1251 = vadd.f32 %v219, %v1243
  %v1252 = vadd.f32 %v221, %v1244
  %v1253 = vxor.u32 %v1249, 2147483648
  %v1254 = vmul.f32 %v1253, 1.442695
  %v1255 = vpow.pop %v1254
  %v1256 = vadd.f32 %v1255, 1.0
  %v1257 = vrcp.pop %v1256
  %v1258 = vmul.f32 1.0, %v1257
  %v1259 = vxor.u32 %v1250, 2147483648
  %v1260 = vmul.f32 %v1259, 1.442695
  %v1261 = vpow.pop %v1260
  %v1262 = vadd.f32 %v1261, 1.0
  %v1263 = vrcp.pop %v1262
  %v1264 = vmul.f32 1.0, %v1263
  %v1265 = vtanh.pop %v1251
  %v1266 = vxor.u32 %v1252, 2147483648
  %v1267 = vmul.f32 %v1266, 1.442695
  %v1268 = vpow.pop %v1267
  %v1269 = vadd.f32 %v1268, 1.0
  %v1270 = vrcp.pop %v1269
  %v1271 = vmul.f32 1.0, %v1270
  %v1273 = vrot.slane %v534, 4
  %v1275 = vmul.f32 %v1264, %v1273
  %v1276 = vmul.f32 %v1258, %v1265
  %v1277 = vadd.f32 %v1275, %v1276
  %v1278 = vtanh.pop %v1277
  %v1279 = vmul.f32 %v1271, %v1278
  %v1281 = vrot.slane %v1277, 4
  %v1283 = vpack.c.bf16 %v1281, %v1281
  %1284 = vmatprep.subr.bf16.mxu0 0
  %1285 = vmatpush1.bf16.msra.mxu0 %v636
  %1286 = vmatprep.subr.bf16.mxu0 0
  %1287 = vmatpush1.bf16.msra.mxu0 %v637
  %1288 = vmatprep.subr.bf16.mxu0 0
  %1289 = vmatpush1.bf16.msra.mxu0 %v638
  %1290 = vmatprep.subr.bf16.mxu0 0
  %1291 = vmatpush1.bf16.msra.mxu0 %v639
  %1292 = vmatprep.subr.bf16.mxu0 0
  %1293 = vmatpush1.bf16.msra.mxu0 %v640
  %1294 = vmatprep.subr.bf16.mxu0 0
  %1295 = vmatpush1.bf16.msra.mxu0 %v641
  %1296 = vmatprep.subr.bf16.mxu0 0
  %1297 = vmatpush1.bf16.msra.mxu0 %v642
  %1298 = vmatprep.subr.bf16.mxu0 0
  %1299 = vmatpush1.bf16.msra.mxu0 %v643
  %1300 = vmatprep.subr.bf16.mxu0 0
  %1301 = vmatpush1.bf16.msra.mxu0 %v644
  %1302 = vmatprep.subr.bf16.mxu0 0
  %1303 = vmatpush1.bf16.msra.mxu0 %v645
  %1304 = vmatprep.subr.bf16.mxu0 0
  %1305 = vmatpush1.bf16.msra.mxu0 %v646
  %1306 = vmatprep.subr.bf16.mxu0 0
  %1307 = vmatpush1.bf16.msra.mxu0 %v647
  %1308 = vmatprep.subr.bf16.mxu0 0
  %1309 = vmatpush1.bf16.msra.mxu0 %v648
  %1310 = vmatprep.subr.bf16.mxu0 0
  %1311 = vmatpush1.bf16.msra.mxu0 %v649
  %1312 = vmatprep.subr.bf16.mxu0 0
  %1313 = vmatpush1.bf16.msra.mxu0 %v650
  %1314 = vmatprep.subr.bf16.mxu0 0
  %1315 = vmatpush1.bf16.msra.mxu0 %v651
  %1316 = vmatprep.mubr.bf16.mxu0 %v1283
  %1317 = vmatmul.mubr.bf16.gmra.mrb[0].mxu0 %v570
  %v1318 = vpop.f32.mrb[0].mxu0
  %v1319 = vadd.f32 %v571, %v1318
  %v1320 = vpop.f32.mrb[0].mxu0
  %v1321 = vpop.f32.mrb[0].mxu0
  %v1322 = vpop.f32.mrb[0].mxu0
  %1323 = vdwg.mxu0
  %v1324 = vmax.f32 %v1319, 0.0
  %v1325 = vpack.c.bf16 %v1324, %v1324
  %v1327 = vsel %vm738, %v1325, 0
  %1329 = vmatprep.subr.bf16.mxu0 %v728
  %1330 = vmatpush1.bf16.msra.mxu0 %v727
  %1331 = vmatprep.subr.bf16.mxu0 %v730
  %1332 = vmatpush1.bf16.msra.mxu0 %v729
  %1333 = vmatprep.subr.bf16.mxu0 0
  %1334 = vmatpush1.bf16.msra.mxu0 0
  %1335 = vmatprep.subr.bf16.mxu0 0
  %1336 = vmatpush1.bf16.msra.mxu0 0
  %1337 = vmatprep.subr.bf16.mxu0 0
  %1338 = vmatpush1.bf16.msra.mxu0 0
  %1339 = vmatprep.subr.bf16.mxu0 0
  %1340 = vmatpush1.bf16.msra.mxu0 0
  %1341 = vmatprep.subr.bf16.mxu0 0
  %1342 = vmatpush1.bf16.msra.mxu0 0
  %1343 = vmatprep.subr.bf16.mxu0 0
  %1344 = vmatpush1.bf16.msra.mxu0 0
  %1345 = vmatprep.subr.bf16.mxu0 0
  %1346 = vmatpush1.bf16.msra.mxu0 0
  %1347 = vmatprep.subr.bf16.mxu0 0
  %1348 = vmatpush1.bf16.msra.mxu0 0
  %1349 = vmatprep.subr.bf16.mxu0 0
  %1350 = vmatpush1.bf16.msra.mxu0 0
  %1351 = vmatprep.subr.bf16.mxu0 0
  %1352 = vmatpush1.bf16.msra.mxu0 0
  %1353 = vmatprep.subr.bf16.mxu0 0
  %1354 = vmatpush1.bf16.msra.mxu0 0
  %1355 = vmatprep.subr.bf16.mxu0 0
  %1356 = vmatpush1.bf16.msra.mxu0 0
  %1357 = vmatprep.subr.bf16.mxu0 0
  %1358 = vmatpush1.bf16.msra.mxu0 0
  %1359 = vmatprep.subr.bf16.mxu0 0
  %1360 = vmatpush1.bf16.msra.mxu0 0
  %1361 = vmatprep.mubr.bf16.mxu0 0
  %1362 = vmatmul.mubr.bf16.gmra.mrb[0].mxu0 %v1327
  %v1363 = vpop.f32.mrb[0].mxu0
  %v1364 = vadd.f32 %v714, %v1363
  %v1365 = vpop.f32.mrb[0].mxu0
  %v1366 = vadd.f32 %v736, %v1365
  %v1367 = vpop.f32.mrb[0].mxu0
  %v1368 = vpop.f32.mrb[0].mxu0
  %1369 = vdwg.mxu0
  %v1370 = vsel %vm783, %v1364, -inf
  %v1371 = vsel %vm783, %v1366, -inf
  %v1372 = vmax.f32 %v1370, %v1371
  %1373 = vmax.xlane.f32.xlu0 %v1372
  %v1374 = vpop.xlane.xlu0 %1373
  %v1375 = vsub.f32 %v1364, %v1374
  %v1376 = vsub.f32 %v1366, %v1374
  %v1377 = vmul.f32 %v1375, 1.442695
  %v1378 = vpow.pop %v1377
  %v1379 = vmul.f32 %v1376, 1.442695
  %v1380 = vpow.pop %v1379
  %v1381 = vsel %vm783, %v1378, 0.0
  %v1382 = vsel %vm783, %v1380, 0.0
  %v1383 = vadd.f32 %v1381, %v1382
  %1384 = vadd.xlane.f32.xlu0 %v1383
  %v1385 = vpop.xlane.xlu0 %1384
  %v1386 = vrcp.pop %v1385
  %v1387 = vmul.f32 %v1378, %v1386
  %v1388 = vmul.f32 %v1380, %v1386
  %v1389 = vmul.f32 %v1387, %v534
  %v1390 = vmul.f32 %v1388, %v1281
  %v1391 = vpack.c.bf16 %v1389, %v1389
  %v1392 = vpack.c.bf16 %v1390, %v1390
  %v1393 = vpack.c.bf16 %v1153, %v1153
  %1395 = vrot.lane.b32.xlu0 %v1393, 112
  %v1396 = vpop.permute.xlu0 %1395
  %v1398 = vsel %vm847, %v1396, 0
  %1400 = vmatprep.subr.bf16.mxu0 0
  %1401 = vmatpush1.bf16.msra.mxu0 %v845
  %1402 = vmatprep.subr.bf16.mxu0 0
  %1403 = vmatpush1.bf16.msra.mxu0 0
  %1404 = vmatprep.subr.bf16.mxu0 0
  %1405 = vmatpush1.bf16.msra.mxu0 0
  %1406 = vmatprep.subr.bf16.mxu0 0
  %1407 = vmatpush1.bf16.msra.mxu0 0
  %1408 = vmatprep.subr.bf16.mxu0 0
  %1409 = vmatpush1.bf16.msra.mxu0 0
  %1410 = vmatprep.subr.bf16.mxu0 0
  %1411 = vmatpush1.bf16.msra.mxu0 0
  %1412 = vmatprep.subr.bf16.mxu0 0
  %1413 = vmatpush1.bf16.msra.mxu0 0
  %1414 = vmatprep.subr.bf16.mxu0 0
  %1415 = vmatpush1.bf16.msra.mxu0 0
  %1416 = vmatprep.subr.bf16.mxu0 0
  %1417 = vmatpush1.bf16.msra.mxu0 0
  %1418 = vmatprep.subr.bf16.mxu0 0
  %1419 = vmatpush1.bf16.msra.mxu0 0
  %1420 = vmatprep.subr.bf16.mxu0 0
  %1421 = vmatpush1.bf16.msra.mxu0 0
  %1422 = vmatprep.subr.bf16.mxu0 0
  %1423 = vmatpush1.bf16.msra.mxu0 0
  %1424 = vmatprep.subr.bf16.mxu0 0
  %1425 = vmatpush1.bf16.msra.mxu0 0
  %1426 = vmatprep.subr.bf16.mxu0 0
  %1427 = vmatpush1.bf16.msra.mxu0 0
  %1428 = vmatprep.subr.bf16.mxu0 0
  %1429 = vmatpush1.bf16.msra.mxu0 0
  %1430 = vmatprep.subr.bf16.mxu0 0
  %1431 = vmatpush1.bf16.msra.mxu0 0
  %1432 = vmatprep.mubr.bf16.mxu0 0
  %1433 = vmatmul.mubr.bf16.gmra.mrb[0].mxu0 %v1398
  %v1434 = vpop.f32.mrb[0].mxu0
  %v1435 = vadd.f32 0.0, %v1434
  %v1436 = vpop.f32.mrb[0].mxu0
  %v1437 = vpop.f32.mrb[0].mxu0
  %v1438 = vpop.f32.mrb[0].mxu0
  %1439 = vdwg.mxu0
  %1440 = vmatprep.subr.bf16.mxu0 0
  %1441 = vmatpush1.bf16.msra.mxu0 %v955
  %1442 = vmatprep.subr.bf16.mxu0 0
  %1443 = vmatpush1.bf16.msra.mxu0 %v956
  %1444 = vmatprep.subr.bf16.mxu0 0
  %1445 = vmatpush1.bf16.msra.mxu0 %v957
  %1446 = vmatprep.subr.bf16.mxu0 0
  %1447 = vmatpush1.bf16.msra.mxu0 %v958
  %1448 = vmatprep.subr.bf16.mxu0 0
  %1449 = vmatpush1.bf16.msra.mxu0 %v959
  %1450 = vmatprep.subr.bf16.mxu0 0
  %1451 = vmatpush1.bf16.msra.mxu0 %v960
  %1452 = vmatprep.subr.bf16.mxu0 0
  %1453 = vmatpush1.bf16.msra.mxu0 %v961
  %1454 = vmatprep.subr.bf16.mxu0 0
  %1455 = vmatpush1.bf16.msra.mxu0 %v962
  %1456 = vmatprep.subr.bf16.mxu0 0
  %1457 = vmatpush1.bf16.msra.mxu0 %v963
  %1458 = vmatprep.subr.bf16.mxu0 0
  %1459 = vmatpush1.bf16.msra.mxu0 %v964
  %1460 = vmatprep.subr.bf16.mxu0 0
  %1461 = vmatpush1.bf16.msra.mxu0 %v965
  %1462 = vmatprep.subr.bf16.mxu0 0
  %1463 = vmatpush1.bf16.msra.mxu0 %v966
  %1464 = vmatprep.subr.bf16.mxu0 0
  %1465 = vmatpush1.bf16.msra.mxu0 %v967
  %1466 = vmatprep.subr.bf16.mxu0 0
  %1467 = vmatpush1.bf16.msra.mxu0 %v968
  %1468 = vmatprep.subr.bf16.mxu0 0
  %1469 = vmatpush1.bf16.msra.mxu0 %v969
  %1470 = vmatprep.subr.bf16.mxu0 0
  %1471 = vmatpush1.bf16.msra.mxu0 %v970
  %1472 = vmatprep.mubr.bf16.mxu0 %v1392
  %1473 = vmatmul.mubr.bf16.gmra.mrb[0].mxu0 %v1391
  %v1474 = vpop.f32.mrb[0].mxu0
  %v1475 = vadd.f32 %v1435, %v1474
  %v1476 = vpop.f32.mrb[0].mxu0
  %v1477 = vpop.f32.mrb[0].mxu0
  %v1478 = vpop.f32.mrb[0].mxu0
  %1479 = vdwg.mxu0
  %v1480 = vadd.f32 %v1475, %v1027
  %v1481 = vmax.f32 %v1480, 0.0
  %v1482 = vpack.c.bf16 %v1481, %v1481
  %1483 = vmatprep.subr.bf16.mxu0 0
  %1484 = vmatpush1.bf16.msra.mxu0 %v1080
  %1485 = vmatprep.subr.bf16.mxu0 0
  %1486 = vmatpush1.bf16.msra.mxu0 %v1081
  %1487 = vmatprep.subr.bf16.mxu0 0
  %1488 = vmatpush1.bf16.msra.mxu0 %v1082
  %1489 = vmatprep.subr.bf16.mxu0 0
  %1490 = vmatpush1.bf16.msra.mxu0 %v1083
  %1491 = vmatprep.subr.bf16.mxu0 0
  %1492 = vmatpush1.bf16.msra.mxu0 %v1084
  %1493 = vmatprep.subr.bf16.mxu0 0
  %1494 = vmatpush1.bf16.msra.mxu0 %v1085
  %1495 = vmatprep.subr.bf16.mxu0 0
  %1496 = vmatpush1.bf16.msra.mxu0 %v1086
  %1497 = vmatprep.subr.bf16.mxu0 0
  %1498 = vmatpush1.bf16.msra.mxu0 %v1087
  %1499 = vmatprep.subr.bf16.mxu0 0
  %1500 = vmatpush1.bf16.msra.mxu0 0
  %1501 = vmatprep.subr.bf16.mxu0 0
  %1502 = vmatpush1.bf16.msra.mxu0 0
  %1503 = vmatprep.subr.bf16.mxu0 0
  %1504 = vmatpush1.bf16.msra.mxu0 0
  %1505 = vmatprep.subr.bf16.mxu0 0
  %1506 = vmatpush1.bf16.msra.mxu0 0
  %1507 = vmatprep.subr.bf16.mxu0 0
  %1508 = vmatpush1.bf16.msra.mxu0 0
  %1509 = vmatprep.subr.bf16.mxu0 0
  %1510 = vmatpush1.bf16.msra.mxu0 0
  %1511 = vmatprep.subr.bf16.mxu0 0
  %1512 = vmatpush1.bf16.msra.mxu0 0
  %1513 = vmatprep.subr.bf16.mxu0 0
  %1514 = vmatpush1.bf16.msra.mxu0 0
  %1515 = vmatprep.mubr.bf16.mxu0 0
  %1516 = vmatmul.mubr.bf16.gmra.mrb[0].mxu0 %v1482
  %v1517 = vpop.f32.mrb[0].mxu0
  %v1518 = vadd.f32 %v1047, %v1517
  %v1519 = vpop.f32.mrb[0].mxu0
  %v1520 = vpop.f32.mrb[0].mxu0
  %v1521 = vpop.f32.mrb[0].mxu0
  %1522 = vdwg.mxu0
  %v1523 = vtanh.pop %v1518
  %v1524 = vxor.u32 %v1518, 2147483648
  %v1525 = vmul.f32 %v1524, 1.442695
  %v1526 = vpow.pop %v1525
  %v1527 = vadd.f32 %v1526, 1.0
  %v1528 = vrcp.pop %v1527
  %v1529 = vmul.f32 1.0, %v1528
  %v1530 = vmul.f32 %v1529, %v1153
  %1532 = vrot.lane.b32.xlu0 %v1523, 32
  %v1533 = vpop.permute.xlu0 %1532
  %v1535 = vmul.f32 %v1529, %v1533
  %1537 = vrot.lane.b32.xlu0 %v1535, 112
  %v1538 = vpop.permute.xlu0 %1537
  %v1540 = vadd.f32 %v1530, %v1538
  %v1541 = vpack.c.bf16 %v1279, %v1279
  %v1543 = vrot.slane %v1541, 2
  %1545 = vmatprep.subr.bf16.mxu0 %v364
  %1546 = vmatpush1.bf16.msra.mxu0 %v363
  %1547 = vmatprep.subr.bf16.mxu0 %v368
  %1548 = vmatpush1.bf16.msra.mxu0 %v367
  %1549 = vmatprep.subr.bf16.mxu0 %v372
  %1550 = vmatpush1.bf16.msra.mxu0 %v371
  %1551 = vmatprep.subr.bf16.mxu0 %v376
  %1552 = vmatpush1.bf16.msra.mxu0 %v375
  %1553 = vmatprep.subr.bf16.mxu0 %v380
  %1554 = vmatpush1.bf16.msra.mxu0 %v379
  %1555 = vmatprep.subr.bf16.mxu0 %v384
  %1556 = vmatpush1.bf16.msra.mxu0 %v383
  %1557 = vmatprep.subr.bf16.mxu0 %v388
  %1558 = vmatpush1.bf16.msra.mxu0 %v387
  %1559 = vmatprep.subr.bf16.mxu0 %v392
  %1560 = vmatpush1.bf16.msra.mxu0 %v391
  %1561 = vmatprep.subr.bf16.mxu0 0
  %1562 = vmatpush1.bf16.msra.mxu0 0
  %1563 = vmatprep.subr.bf16.mxu0 0
  %1564 = vmatpush1.bf16.msra.mxu0 0
  %1565 = vmatprep.subr.bf16.mxu0 0
  %1566 = vmatpush1.bf16.msra.mxu0 0
  %1567 = vmatprep.subr.bf16.mxu0 0
  %1568 = vmatpush1.bf16.msra.mxu0 0
  %1569 = vmatprep.subr.bf16.mxu0 0
  %1570 = vmatpush1.bf16.msra.mxu0 0
  %1571 = vmatprep.subr.bf16.mxu0 0
  %1572 = vmatpush1.bf16.msra.mxu0 0
  %1573 = vmatprep.subr.bf16.mxu0 0
  %1574 = vmatpush1.bf16.msra.mxu0 0
  %1575 = vmatprep.subr.bf16.mxu0 0
  %1576 = vmatpush1.bf16.msra.mxu0 0
  %1577 = vmatprep.mubr.bf16.mxu0 0
  %1578 = vmatmul.mubr.bf16.gmra.mrb[0].mxu0 %v1543
  %v1579 = vpop.f32.mrb[0].mxu0
  %v1580 = vadd.f32 0.0, %v1579
  %v1581 = vpop.f32.mrb[0].mxu0
  %v1582 = vadd.f32 0.0, %v1581
  %v1583 = vpop.f32.mrb[0].mxu0
  %v1584 = vpop.f32.mrb[0].mxu0
  %1585 = vdwg.mxu0
  %1586 = vmatprep.subr.bf16.mxu0 %v366
  %1587 = vmatpush1.bf16.msra.mxu0 %v365
  %1588 = vmatprep.subr.bf16.mxu0 %v370
  %1589 = vmatpush1.bf16.msra.mxu0 %v369
  %1590 = vmatprep.subr.bf16.mxu0 %v374
  %1591 = vmatpush1.bf16.msra.mxu0 %v373
  %1592 = vmatprep.subr.bf16.mxu0 %v378
  %1593 = vmatpush1.bf16.msra.mxu0 %v377
  %1594 = vmatprep.subr.bf16.mxu0 %v382
  %1595 = vmatpush1.bf16.msra.mxu0 %v381
  %1596 = vmatprep.subr.bf16.mxu0 %v386
  %1597 = vmatpush1.bf16.msra.mxu0 %v385
  %1598 = vmatprep.subr.bf16.mxu0 %v390
  %1599 = vmatpush1.bf16.msra.mxu0 %v389
  %1600 = vmatprep.subr.bf16.mxu0 %v394
  %1601 = vmatpush1.bf16.msra.mxu0 %v393
  %1602 = vmatprep.subr.bf16.mxu0 0
  %1603 = vmatpush1.bf16.msra.mxu0 0
  %1604 = vmatprep.subr.bf16.mxu0 0
  %1605 = vmatpush1.bf16.msra.mxu0 0
  %1606 = vmatprep.subr.bf16.mxu0 0
  %1607 = vmatpush1.bf16.msra.mxu0 0
  %1608 = vmatprep.subr.bf16.mxu0 0
  %1609 = vmatpush1.bf16.msra.mxu0 0
  %1610 = vmatprep.subr.bf16.mxu0 0
  %1611 = vmatpush1.bf16.msra.mxu0 0
  %1612 = vmatprep.subr.bf16.mxu0 0
  %1613 = vmatpush1.bf16.msra.mxu0 0
  %1614 = vmatprep.subr.bf16.mxu0 0
  %1615 = vmatpush1.bf16.msra.mxu0 0
  %1616 = vmatprep.subr.bf16.mxu0 0
  %1617 = vmatpush1.bf16.msra.mxu0 0
  %1618 = vmatprep.mubr.bf16.mxu0 0
  %1619 = vmatmul.mubr.bf16.gmra.mrb[0].mxu0 %v1543
  %v1620 = vpop.f32.mrb[0].mxu0
  %v1621 = vadd.f32 0.0, %v1620
  %v1622 = vpop.f32.mrb[0].mxu0
  %v1623 = vadd.f32 0.0, %v1622
  %v1624 = vpop.f32.mrb[0].mxu0
  %v1625 = vpop.f32.mrb[0].mxu0
  %1626 = vdwg.mxu0
  %v1627 = vadd.f32 %v172, %v1580
  %v1628 = vadd.f32 %v174, %v1582
  %v1629 = vadd.f32 %v223, %v1621
  %v1630 = vadd.f32 %v225, %v1623
  %v1631 = vxor.u32 %v1627, 2147483648
  %v1632 = vmul.f32 %v1631, 1.442695
  %v1633 = vpow.pop %v1632
  %v1634 = vadd.f32 %v1633, 1.0
  %v1635 = vrcp.pop %v1634
  %v1636 = vmul.f32 1.0, %v1635
  %v1637 = vxor.u32 %v1628, 2147483648
  %v1638 = vmul.f32 %v1637, 1.442695
  %v1639 = vpow.pop %v1638
  %v1640 = vadd.f32 %v1639, 1.0
  %v1641 = vrcp.pop %v1640
  %v1642 = vmul.f32 1.0, %v1641
  %v1643 = vtanh.pop %v1629
  %v1644 = vxor.u32 %v1630, 2147483648
  %v1645 = vmul.f32 %v1644, 1.442695
  %v1646 = vpow.pop %v1645
  %v1647 = vadd.f32 %v1646, 1.0
  %v1648 = vrcp.pop %v1647
  %v1649 = vmul.f32 1.0, %v1648
  %v1650 = vmul.f32 %v1642, %v1281
  %v1651 = vmul.f32 %v1636, %v1643
  %v1652 = vadd.f32 %v1650, %v1651
  %v1653 = vtanh.pop %v1652
  %v1654 = vmul.f32 %v1649, %v1653
  %v1656 = vrot.slane %v1652, 4
  %v1658 = vpack.c.bf16 %v1277, %v1277
  %v1659 = vpack.c.bf16 %v1656, %v1656
  %v1662 = vrot.slane %v1658, 2
  %v1663 = vrot.slane %v1659, 2
  %1666 = vmatprep.subr.bf16.mxu0 0
  %1667 = vmatpush1.bf16.msra.mxu0 %v636
  %1668 = vmatprep.subr.bf16.mxu0 0
  %1669 = vmatpush1.bf16.msra.mxu0 %v637
  %1670 = vmatprep.subr.bf16.mxu0 0
  %1671 = vmatpush1.bf16.msra.mxu0 %v638
  %1672 = vmatprep.subr.bf16.mxu0 0
  %1673 = vmatpush1.bf16.msra.mxu0 %v639
  %1674 = vmatprep.subr.bf16.mxu0 0
  %1675 = vmatpush1.bf16.msra.mxu0 %v640
  %1676 = vmatprep.subr.bf16.mxu0 0
  %1677 = vmatpush1.bf16.msra.mxu0 %v641
  %1678 = vmatprep.subr.bf16.mxu0 0
  %1679 = vmatpush1.bf16.msra.mxu0 %v642
  %1680 = vmatprep.subr.bf16.mxu0 0
  %1681 = vmatpush1.bf16.msra.mxu0 %v643
  %1682 = vmatprep.subr.bf16.mxu0 0
  %1683 = vmatpush1.bf16.msra.mxu0 %v644
  %1684 = vmatprep.subr.bf16.mxu0 0
  %1685 = vmatpush1.bf16.msra.mxu0 %v645
  %1686 = vmatprep.subr.bf16.mxu0 0
  %1687 = vmatpush1.bf16.msra.mxu0 %v646
  %1688 = vmatprep.subr.bf16.mxu0 0
  %1689 = vmatpush1.bf16.msra.mxu0 %v647
  %1690 = vmatprep.subr.bf16.mxu0 0
  %1691 = vmatpush1.bf16.msra.mxu0 %v648
  %1692 = vmatprep.subr.bf16.mxu0 0
  %1693 = vmatpush1.bf16.msra.mxu0 %v649
  %1694 = vmatprep.subr.bf16.mxu0 0
  %1695 = vmatpush1.bf16.msra.mxu0 %v650
  %1696 = vmatprep.subr.bf16.mxu0 0
  %1697 = vmatpush1.bf16.msra.mxu0 %v651
  %1698 = vmatprep.mubr.bf16.mxu0 %v1663
  %1699 = vmatmul.mubr.bf16.gmra.mrb[0].mxu0 %v1662
  %v1700 = vpop.f32.mrb[0].mxu0
  %v1701 = vadd.f32 %v571, %v1700
  %v1702 = vpop.f32.mrb[0].mxu0
  %v1703 = vpop.f32.mrb[0].mxu0
  %v1704 = vpop.f32.mrb[0].mxu0
  %1705 = vdwg.mxu0
  %v1706 = vmax.f32 %v1701, 0.0
  %v1707 = vpack.c.bf16 %v1706, %v1706
  %v1709 = vsel %vm738, %v1707, 0
  %1711 = vmatprep.subr.bf16.mxu0 %v728
  %1712 = vmatpush1.bf16.msra.mxu0 %v727
  %1713 = vmatprep.subr.bf16.mxu0 %v730
  %1714 = vmatpush1.bf16.msra.mxu0 %v729
  %1715 = vmatprep.subr.bf16.mxu0 0
  %1716 = vmatpush1.bf16.msra.mxu0 0
  %1717 = vmatprep.subr.bf16.mxu0 0
  %1718 = vmatpush1.bf16.msra.mxu0 0
  %1719 = vmatprep.subr.bf16.mxu0 0
  %1720 = vmatpush1.bf16.msra.mxu0 0
  %1721 = vmatprep.subr.bf16.mxu0 0
  %1722 = vmatpush1.bf16.msra.mxu0 0
  %1723 = vmatprep.subr.bf16.mxu0 0
  %1724 = vmatpush1.bf16.msra.mxu0 0
  %1725 = vmatprep.subr.bf16.mxu0 0
  %1726 = vmatpush1.bf16.msra.mxu0 0
  %1727 = vmatprep.subr.bf16.mxu0 0
  %1728 = vmatpush1.bf16.msra.mxu0 0
  %1729 = vmatprep.subr.bf16.mxu0 0
  %1730 = vmatpush1.bf16.msra.mxu0 0
  %1731 = vmatprep.subr.bf16.mxu0 0
  %1732 = vmatpush1.bf16.msra.mxu0 0
  %1733 = vmatprep.subr.bf16.mxu0 0
  %1734 = vmatpush1.bf16.msra.mxu0 0
  %1735 = vmatprep.subr.bf16.mxu0 0
  %1736 = vmatpush1.bf16.msra.mxu0 0
  %1737 = vmatprep.subr.bf16.mxu0 0
  %1738 = vmatpush1.bf16.msra.mxu0 0
  %1739 = vmatprep.subr.bf16.mxu0 0
  %1740 = vmatpush1.bf16.msra.mxu0 0
  %1741 = vmatprep.subr.bf16.mxu0 0
  %1742 = vmatpush1.bf16.msra.mxu0 0
  %1743 = vmatprep.mubr.bf16.mxu0 0
  %1744 = vmatmul.mubr.bf16.gmra.mrb[0].mxu0 %v1709
  %v1745 = vpop.f32.mrb[0].mxu0
  %v1746 = vadd.f32 %v714, %v1745
  %v1747 = vpop.f32.mrb[0].mxu0
  %v1748 = vadd.f32 %v736, %v1747
  %v1749 = vpop.f32.mrb[0].mxu0
  %v1750 = vpop.f32.mrb[0].mxu0
  %1751 = vdwg.mxu0
  %v1752 = vsel %vm783, %v1746, -inf
  %v1753 = vsel %vm783, %v1748, -inf
  %v1754 = vmax.f32 %v1752, %v1753
  %1755 = vmax.xlane.f32.xlu0 %v1754
  %v1756 = vpop.xlane.xlu0 %1755
  %v1757 = vsub.f32 %v1746, %v1756
  %v1758 = vsub.f32 %v1748, %v1756
  %v1759 = vmul.f32 %v1757, 1.442695
  %v1760 = vpow.pop %v1759
  %v1761 = vmul.f32 %v1758, 1.442695
  %v1762 = vpow.pop %v1761
  %v1763 = vsel %vm783, %v1760, 0.0
  %v1764 = vsel %vm783, %v1762, 0.0
  %v1765 = vadd.f32 %v1763, %v1764
  %1766 = vadd.xlane.f32.xlu0 %v1765
  %v1767 = vpop.xlane.xlu0 %1766
  %v1768 = vrcp.pop %v1767
  %v1769 = vmul.f32 %v1760, %v1768
  %v1770 = vmul.f32 %v1762, %v1768
  %v1771 = vrot.slane %v1656, 4
  %v1773 = vmul.f32 %v1769, %v1281
  %v1774 = vmul.f32 %v1770, %v1771
  %v1775 = vpack.c.bf16 %v1773, %v1773
  %v1776 = vpack.c.bf16 %v1774, %v1774
  %v1777 = vpack.c.bf16 %v1540, %v1540
  %1779 = vrot.lane.b32.xlu0 %v1777, 112
  %v1780 = vpop.permute.xlu0 %1779
  %v1782 = vsel %vm847, %v1780, 0
  %1784 = vmatprep.subr.bf16.mxu0 0
  %1785 = vmatpush1.bf16.msra.mxu0 %v845
  %1786 = vmatprep.subr.bf16.mxu0 0
  %1787 = vmatpush1.bf16.msra.mxu0 0
  %1788 = vmatprep.subr.bf16.mxu0 0
  %1789 = vmatpush1.bf16.msra.mxu0 0
  %1790 = vmatprep.subr.bf16.mxu0 0
  %1791 = vmatpush1.bf16.msra.mxu0 0
  %1792 = vmatprep.subr.bf16.mxu0 0
  %1793 = vmatpush1.bf16.msra.mxu0 0
  %1794 = vmatprep.subr.bf16.mxu0 0
  %1795 = vmatpush1.bf16.msra.mxu0 0
  %1796 = vmatprep.subr.bf16.mxu0 0
  %1797 = vmatpush1.bf16.msra.mxu0 0
  %1798 = vmatprep.subr.bf16.mxu0 0
  %1799 = vmatpush1.bf16.msra.mxu0 0
  %1800 = vmatprep.subr.bf16.mxu0 0
  %1801 = vmatpush1.bf16.msra.mxu0 0
  %1802 = vmatprep.subr.bf16.mxu0 0
  %1803 = vmatpush1.bf16.msra.mxu0 0
  %1804 = vmatprep.subr.bf16.mxu0 0
  %1805 = vmatpush1.bf16.msra.mxu0 0
  %1806 = vmatprep.subr.bf16.mxu0 0
  %1807 = vmatpush1.bf16.msra.mxu0 0
  %1808 = vmatprep.subr.bf16.mxu0 0
  %1809 = vmatpush1.bf16.msra.mxu0 0
  %1810 = vmatprep.subr.bf16.mxu0 0
  %1811 = vmatpush1.bf16.msra.mxu0 0
  %1812 = vmatprep.subr.bf16.mxu0 0
  %1813 = vmatpush1.bf16.msra.mxu0 0
  %1814 = vmatprep.subr.bf16.mxu0 0
  %1815 = vmatpush1.bf16.msra.mxu0 0
  %1816 = vmatprep.mubr.bf16.mxu0 0
  %1817 = vmatmul.mubr.bf16.gmra.mrb[0].mxu0 %v1782
  %v1818 = vpop.f32.mrb[0].mxu0
  %v1819 = vadd.f32 0.0, %v1818
  %v1820 = vpop.f32.mrb[0].mxu0
  %v1821 = vpop.f32.mrb[0].mxu0
  %v1822 = vpop.f32.mrb[0].mxu0
  %1823 = vdwg.mxu0
  %1824 = vmatprep.subr.bf16.mxu0 0
  %1825 = vmatpush1.bf16.msra.mxu0 %v955
  %1826 = vmatprep.subr.bf16.mxu0 0
  %1827 = vmatpush1.bf16.msra.mxu0 %v956
  %1828 = vmatprep.subr.bf16.mxu0 0
  %1829 = vmatpush1.bf16.msra.mxu0 %v957
  %1830 = vmatprep.subr.bf16.mxu0 0
  %1831 = vmatpush1.bf16.msra.mxu0 %v958
  %1832 = vmatprep.subr.bf16.mxu0 0
  %1833 = vmatpush1.bf16.msra.mxu0 %v959
  %1834 = vmatprep.subr.bf16.mxu0 0
  %1835 = vmatpush1.bf16.msra.mxu0 %v960
  %1836 = vmatprep.subr.bf16.mxu0 0
  %1837 = vmatpush1.bf16.msra.mxu0 %v961
  %1838 = vmatprep.subr.bf16.mxu0 0
  %1839 = vmatpush1.bf16.msra.mxu0 %v962
  %1840 = vmatprep.subr.bf16.mxu0 0
  %1841 = vmatpush1.bf16.msra.mxu0 %v963
  %1842 = vmatprep.subr.bf16.mxu0 0
  %1843 = vmatpush1.bf16.msra.mxu0 %v964
  %1844 = vmatprep.subr.bf16.mxu0 0
  %1845 = vmatpush1.bf16.msra.mxu0 %v965
  %1846 = vmatprep.subr.bf16.mxu0 0
  %1847 = vmatpush1.bf16.msra.mxu0 %v966
  %1848 = vmatprep.subr.bf16.mxu0 0
  %1849 = vmatpush1.bf16.msra.mxu0 %v967
  %1850 = vmatprep.subr.bf16.mxu0 0
  %1851 = vmatpush1.bf16.msra.mxu0 %v968
  %1852 = vmatprep.subr.bf16.mxu0 0
  %1853 = vmatpush1.bf16.msra.mxu0 %v969
  %1854 = vmatprep.subr.bf16.mxu0 0
  %1855 = vmatpush1.bf16.msra.mxu0 %v970
  %1856 = vmatprep.mubr.bf16.mxu0 %v1776
  %1857 = vmatmul.mubr.bf16.gmra.mrb[0].mxu0 %v1775
  %v1858 = vpop.f32.mrb[0].mxu0
  %v1859 = vadd.f32 %v1819, %v1858
  %v1860 = vpop.f32.mrb[0].mxu0
  %v1861 = vpop.f32.mrb[0].mxu0
  %v1862 = vpop.f32.mrb[0].mxu0
  %1863 = vdwg.mxu0
  %v1864 = vadd.f32 %v1859, %v1027
  %v1865 = vmax.f32 %v1864, 0.0
  %v1866 = vpack.c.bf16 %v1865, %v1865
  %1867 = vmatprep.subr.bf16.mxu0 0
  %1868 = vmatpush1.bf16.msra.mxu0 %v1080
  %1869 = vmatprep.subr.bf16.mxu0 0
  %1870 = vmatpush1.bf16.msra.mxu0 %v1081
  %1871 = vmatprep.subr.bf16.mxu0 0
  %1872 = vmatpush1.bf16.msra.mxu0 %v1082
  %1873 = vmatprep.subr.bf16.mxu0 0
  %1874 = vmatpush1.bf16.msra.mxu0 %v1083
  %1875 = vmatprep.subr.bf16.mxu0 0
  %1876 = vmatpush1.bf16.msra.mxu0 %v1084
  %1877 = vmatprep.subr.bf16.mxu0 0
  %1878 = vmatpush1.bf16.msra.mxu0 %v1085
  %1879 = vmatprep.subr.bf16.mxu0 0
  %1880 = vmatpush1.bf16.msra.mxu0 %v1086
  %1881 = vmatprep.subr.bf16.mxu0 0
  %1882 = vmatpush1.bf16.msra.mxu0 %v1087
  %1883 = vmatprep.subr.bf16.mxu0 0
  %1884 = vmatpush1.bf16.msra.mxu0 0
  %1885 = vmatprep.subr.bf16.mxu0 0
  %1886 = vmatpush1.bf16.msra.mxu0 0
  %1887 = vmatprep.subr.bf16.mxu0 0
  %1888 = vmatpush1.bf16.msra.mxu0 0
  %1889 = vmatprep.subr.bf16.mxu0 0
  %1890 = vmatpush1.bf16.msra.mxu0 0
  %1891 = vmatprep.subr.bf16.mxu0 0
  %1892 = vmatpush1.bf16.msra.mxu0 0
  %1893 = vmatprep.subr.bf16.mxu0 0
  %1894 = vmatpush1.bf16.msra.mxu0 0
  %1895 = vmatprep.subr.bf16.mxu0 0
  %1896 = vmatpush1.bf16.msra.mxu0 0
  %1897 = vmatprep.subr.bf16.mxu0 0
  %1898 = vmatpush1.bf16.msra.mxu0 0
  %1899 = vmatprep.mubr.bf16.mxu0 0
  %1900 = vmatmul.mubr.bf16.gmra.mrb[0].mxu0 %v1866
  %v1901 = vpop.f32.mrb[0].mxu0
  %v1902 = vadd.f32 %v1047, %v1901
  %v1903 = vpop.f32.mrb[0].mxu0
  %v1904 = vpop.f32.mrb[0].mxu0
  %v1905 = vpop.f32.mrb[0].mxu0
  %1906 = vdwg.mxu0
  %v1907 = vtanh.pop %v1902
  %v1908 = vxor.u32 %v1902, 2147483648
  %v1909 = vmul.f32 %v1908, 1.442695
  %v1910 = vpow.pop %v1909
  %v1911 = vadd.f32 %v1910, 1.0
  %v1912 = vrcp.pop %v1911
  %v1913 = vmul.f32 1.0, %v1912
  %v1914 = vmul.f32 %v1913, %v1540
  %1916 = vrot.lane.b32.xlu0 %v1907, 32
  %v1917 = vpop.permute.xlu0 %1916
  %v1919 = vmul.f32 %v1913, %v1917
  %1921 = vrot.lane.b32.xlu0 %v1919, 112
  %v1922 = vpop.permute.xlu0 %1921
  %v1924 = vadd.f32 %v1914, %v1922
  %v1925 = vpack.c.bf16 %v1654, %v1654
  %1926 = vmatprep.subr.bf16.mxu0 %v364
  %1927 = vmatpush1.bf16.msra.mxu0 %v363
  %1928 = vmatprep.subr.bf16.mxu0 %v368
  %1929 = vmatpush1.bf16.msra.mxu0 %v367
  %1930 = vmatprep.subr.bf16.mxu0 %v372
  %1931 = vmatpush1.bf16.msra.mxu0 %v371
  %1932 = vmatprep.subr.bf16.mxu0 %v376
  %1933 = vmatpush1.bf16.msra.mxu0 %v375
  %1934 = vmatprep.subr.bf16.mxu0 %v380
  %1935 = vmatpush1.bf16.msra.mxu0 %v379
  %1936 = vmatprep.subr.bf16.mxu0 %v384
  %1937 = vmatpush1.bf16.msra.mxu0 %v383
  %1938 = vmatprep.subr.bf16.mxu0 %v388
  %1939 = vmatpush1.bf16.msra.mxu0 %v387
  %1940 = vmatprep.subr.bf16.mxu0 %v392
  %1941 = vmatpush1.bf16.msra.mxu0 %v391
  %1942 = vmatprep.subr.bf16.mxu0 0
  %1943 = vmatpush1.bf16.msra.mxu0 0
  %1944 = vmatprep.subr.bf16.mxu0 0
  %1945 = vmatpush1.bf16.msra.mxu0 0
  %1946 = vmatprep.subr.bf16.mxu0 0
  %1947 = vmatpush1.bf16.msra.mxu0 0
  %1948 = vmatprep.subr.bf16.mxu0 0
  %1949 = vmatpush1.bf16.msra.mxu0 0
  %1950 = vmatprep.subr.bf16.mxu0 0
  %1951 = vmatpush1.bf16.msra.mxu0 0
  %1952 = vmatprep.subr.bf16.mxu0 0
  %1953 = vmatpush1.bf16.msra.mxu0 0
  %1954 = vmatprep.subr.bf16.mxu0 0
  %1955 = vmatpush1.bf16.msra.mxu0 0
  %1956 = vmatprep.subr.bf16.mxu0 0
  %1957 = vmatpush1.bf16.msra.mxu0 0
  %1958 = vmatprep.mubr.bf16.mxu0 0
  %1959 = vmatmul.mubr.bf16.gmra.mrb[0].mxu0 %v1925
  %v1960 = vpop.f32.mrb[0].mxu0
  %v1961 = vadd.f32 0.0, %v1960
  %v1962 = vpop.f32.mrb[0].mxu0
  %v1963 = vadd.f32 0.0, %v1962
  %v1964 = vpop.f32.mrb[0].mxu0
  %v1965 = vpop.f32.mrb[0].mxu0
  %1966 = vdwg.mxu0
  %1967 = vmatprep.subr.bf16.mxu0 %v366
  %1968 = vmatpush1.bf16.msra.mxu0 %v365
  %1969 = vmatprep.subr.bf16.mxu0 %v370
  %1970 = vmatpush1.bf16.msra.mxu0 %v369
  %1971 = vmatprep.subr.bf16.mxu0 %v374
  %1972 = vmatpush1.bf16.msra.mxu0 %v373
  %1973 = vmatprep.subr.bf16.mxu0 %v378
  %1974 = vmatpush1.bf16.msra.mxu0 %v377
  %1975 = vmatprep.subr.bf16.mxu0 %v382
  %1976 = vmatpush1.bf16.msra.mxu0 %v381
  %1977 = vmatprep.subr.bf16.mxu0 %v386
  %1978 = vmatpush1.bf16.msra.mxu0 %v385
  %1979 = vmatprep.subr.bf16.mxu0 %v390
  %1980 = vmatpush1.bf16.msra.mxu0 %v389
  %1981 = vmatprep.subr.bf16.mxu0 %v394
  %1982 = vmatpush1.bf16.msra.mxu0 %v393
  %1983 = vmatprep.subr.bf16.mxu0 0
  %1984 = vmatpush1.bf16.msra.mxu0 0
  %1985 = vmatprep.subr.bf16.mxu0 0
  %1986 = vmatpush1.bf16.msra.mxu0 0
  %1987 = vmatprep.subr.bf16.mxu0 0
  %1988 = vmatpush1.bf16.msra.mxu0 0
  %1989 = vmatprep.subr.bf16.mxu0 0
  %1990 = vmatpush1.bf16.msra.mxu0 0
  %1991 = vmatprep.subr.bf16.mxu0 0
  %1992 = vmatpush1.bf16.msra.mxu0 0
  %1993 = vmatprep.subr.bf16.mxu0 0
  %1994 = vmatpush1.bf16.msra.mxu0 0
  %1995 = vmatprep.subr.bf16.mxu0 0
  %1996 = vmatpush1.bf16.msra.mxu0 0
  %1997 = vmatprep.subr.bf16.mxu0 0
  %1998 = vmatpush1.bf16.msra.mxu0 0
  %1999 = vmatprep.mubr.bf16.mxu0 0
  %2000 = vmatmul.mubr.bf16.gmra.mrb[0].mxu0 %v1925
  %v2001 = vpop.f32.mrb[0].mxu0
  %v2002 = vadd.f32 0.0, %v2001
  %v2003 = vpop.f32.mrb[0].mxu0
  %v2004 = vadd.f32 0.0, %v2003
  %v2005 = vpop.f32.mrb[0].mxu0
  %v2006 = vpop.f32.mrb[0].mxu0
  %2007 = vdwg.mxu0
  %v2012 = vrot.slane %v1961, 4
  %v2013 = vrot.slane %v1963, 4
  %v2014 = vrot.slane %v2002, 4
  %v2015 = vrot.slane %v2004, 4
  %v2020 = vadd.f32 %v172, %v2012
  %v2021 = vadd.f32 %v174, %v2013
  %v2022 = vadd.f32 %v223, %v2014
  %v2023 = vadd.f32 %v225, %v2015
  %v2024 = vxor.u32 %v2020, 2147483648
  %v2025 = vmul.f32 %v2024, 1.442695
  %v2026 = vpow.pop %v2025
  %v2027 = vadd.f32 %v2026, 1.0
  %v2028 = vrcp.pop %v2027
  %v2029 = vmul.f32 1.0, %v2028
  %v2030 = vxor.u32 %v2021, 2147483648
  %v2031 = vmul.f32 %v2030, 1.442695
  %v2032 = vpow.pop %v2031
  %v2033 = vadd.f32 %v2032, 1.0
  %v2034 = vrcp.pop %v2033
  %v2035 = vmul.f32 1.0, %v2034
  %v2036 = vtanh.pop %v2022
  %v2037 = vxor.u32 %v2023, 2147483648
  %v2038 = vmul.f32 %v2037, 1.442695
  %v2039 = vpow.pop %v2038
  %v2040 = vadd.f32 %v2039, 1.0
  %v2041 = vrcp.pop %v2040
  %v2042 = vmul.f32 1.0, %v2041
  %v2043 = vmul.f32 %v2035, %v1656
  %v2044 = vmul.f32 %v2029, %v2036
  %v2045 = vadd.f32 %v2043, %v2044
  %v2046 = vtanh.pop %v2045
  %v2047 = vmul.f32 %v2042, %v2046
  %v2049 = vrot.slane %v2045, 4
  %v2051 = vpack.c.bf16 %v1652, %v1652
  %v2052 = vpack.c.bf16 %v2049, %v2049
  %2053 = vmatprep.subr.bf16.mxu0 0
  %2054 = vmatpush1.bf16.msra.mxu0 %v636
  %2055 = vmatprep.subr.bf16.mxu0 0
  %2056 = vmatpush1.bf16.msra.mxu0 %v637
  %2057 = vmatprep.subr.bf16.mxu0 0
  %2058 = vmatpush1.bf16.msra.mxu0 %v638
  %2059 = vmatprep.subr.bf16.mxu0 0
  %2060 = vmatpush1.bf16.msra.mxu0 %v639
  %2061 = vmatprep.subr.bf16.mxu0 0
  %2062 = vmatpush1.bf16.msra.mxu0 %v640
  %2063 = vmatprep.subr.bf16.mxu0 0
  %2064 = vmatpush1.bf16.msra.mxu0 %v641
  %2065 = vmatprep.subr.bf16.mxu0 0
  %2066 = vmatpush1.bf16.msra.mxu0 %v642
  %2067 = vmatprep.subr.bf16.mxu0 0
  %2068 = vmatpush1.bf16.msra.mxu0 %v643
  %2069 = vmatprep.subr.bf16.mxu0 0
  %2070 = vmatpush1.bf16.msra.mxu0 %v644
  %2071 = vmatprep.subr.bf16.mxu0 0
  %2072 = vmatpush1.bf16.msra.mxu0 %v645
  %2073 = vmatprep.subr.bf16.mxu0 0
  %2074 = vmatpush1.bf16.msra.mxu0 %v646
  %2075 = vmatprep.subr.bf16.mxu0 0
  %2076 = vmatpush1.bf16.msra.mxu0 %v647
  %2077 = vmatprep.subr.bf16.mxu0 0
  %2078 = vmatpush1.bf16.msra.mxu0 %v648
  %2079 = vmatprep.subr.bf16.mxu0 0
  %2080 = vmatpush1.bf16.msra.mxu0 %v649
  %2081 = vmatprep.subr.bf16.mxu0 0
  %2082 = vmatpush1.bf16.msra.mxu0 %v650
  %2083 = vmatprep.subr.bf16.mxu0 0
  %2084 = vmatpush1.bf16.msra.mxu0 %v651
  %2085 = vmatprep.mubr.bf16.mxu0 %v2052
  %2086 = vmatmul.mubr.bf16.gmra.mrb[0].mxu0 %v2051
  %v2087 = vpop.f32.mrb[0].mxu0
  %v2088 = vadd.f32 %v571, %v2087
  %v2089 = vpop.f32.mrb[0].mxu0
  %v2090 = vpop.f32.mrb[0].mxu0
  %v2091 = vpop.f32.mrb[0].mxu0
  %2092 = vdwg.mxu0
  %v2093 = vmax.f32 %v2088, 0.0
  %v2094 = vpack.c.bf16 %v2093, %v2093
  %v2096 = vsel %vm738, %v2094, 0
  %2098 = vmatprep.subr.bf16.mxu0 %v728
  %2099 = vmatpush1.bf16.msra.mxu0 %v727
  %2100 = vmatprep.subr.bf16.mxu0 %v730
  %2101 = vmatpush1.bf16.msra.mxu0 %v729
  %2102 = vmatprep.subr.bf16.mxu0 0
  %2103 = vmatpush1.bf16.msra.mxu0 0
  %2104 = vmatprep.subr.bf16.mxu0 0
  %2105 = vmatpush1.bf16.msra.mxu0 0
  %2106 = vmatprep.subr.bf16.mxu0 0
  %2107 = vmatpush1.bf16.msra.mxu0 0
  %2108 = vmatprep.subr.bf16.mxu0 0
  %2109 = vmatpush1.bf16.msra.mxu0 0
  %2110 = vmatprep.subr.bf16.mxu0 0
  %2111 = vmatpush1.bf16.msra.mxu0 0
  %2112 = vmatprep.subr.bf16.mxu0 0
  %2113 = vmatpush1.bf16.msra.mxu0 0
  %2114 = vmatprep.subr.bf16.mxu0 0
  %2115 = vmatpush1.bf16.msra.mxu0 0
  %2116 = vmatprep.subr.bf16.mxu0 0
  %2117 = vmatpush1.bf16.msra.mxu0 0
  %2118 = vmatprep.subr.bf16.mxu0 0
  %2119 = vmatpush1.bf16.msra.mxu0 0
  %2120 = vmatprep.subr.bf16.mxu0 0
  %2121 = vmatpush1.bf16.msra.mxu0 0
  %2122 = vmatprep.subr.bf16.mxu0 0
  %2123 = vmatpush1.bf16.msra.mxu0 0
  %2124 = vmatprep.subr.bf16.mxu0 0
  %2125 = vmatpush1.bf16.msra.mxu0 0
  %2126 = vmatprep.subr.bf16.mxu0 0
  %2127 = vmatpush1.bf16.msra.mxu0 0
  %2128 = vmatprep.subr.bf16.mxu0 0
  %2129 = vmatpush1.bf16.msra.mxu0 0
  %2130 = vmatprep.mubr.bf16.mxu0 0
  %2131 = vmatmul.mubr.bf16.gmra.mrb[0].mxu0 %v2096
  %v2132 = vpop.f32.mrb[0].mxu0
  %v2133 = vadd.f32 %v714, %v2132
  %v2134 = vpop.f32.mrb[0].mxu0
  %v2135 = vadd.f32 %v736, %v2134
  %v2136 = vpop.f32.mrb[0].mxu0
  %v2137 = vpop.f32.mrb[0].mxu0
  %2138 = vdwg.mxu0
  %v2139 = vsel %vm783, %v2133, -inf
  %v2140 = vsel %vm783, %v2135, -inf
  %v2141 = vmax.f32 %v2139, %v2140
  %2142 = vmax.xlane.f32.xlu0 %v2141
  %v2143 = vpop.xlane.xlu0 %2142
  %v2144 = vsub.f32 %v2133, %v2143
  %v2145 = vsub.f32 %v2135, %v2143
  %v2146 = vmul.f32 %v2144, 1.442695
  %v2147 = vpow.pop %v2146
  %v2148 = vmul.f32 %v2145, 1.442695
  %v2149 = vpow.pop %v2148
  %v2150 = vsel %vm783, %v2147, 0.0
  %v2151 = vsel %vm783, %v2149, 0.0
  %v2152 = vadd.f32 %v2150, %v2151
  %2153 = vadd.xlane.f32.xlu0 %v2152
  %v2154 = vpop.xlane.xlu0 %2153
  %v2155 = vrcp.pop %v2154
  %v2156 = vmul.f32 %v2147, %v2155
  %v2157 = vmul.f32 %v2149, %v2155
  %v2158 = vmul.f32 %v2156, %v1652
  %v2159 = vmul.f32 %v2157, %v2049
  %v2160 = vpack.c.bf16 %v2158, %v2158
  %v2161 = vpack.c.bf16 %v2159, %v2159
  %v2162 = vpack.c.bf16 %v1924, %v1924
  %2164 = vrot.lane.b32.xlu0 %v2162, 112
  %v2165 = vpop.permute.xlu0 %2164
  %v2167 = vsel %vm847, %v2165, 0
  %2169 = vmatprep.subr.bf16.mxu0 0
  %2170 = vmatpush1.bf16.msra.mxu0 %v845
  %2171 = vmatprep.subr.bf16.mxu0 0
  %2172 = vmatpush1.bf16.msra.mxu0 0
  %2173 = vmatprep.subr.bf16.mxu0 0
  %2174 = vmatpush1.bf16.msra.mxu0 0
  %2175 = vmatprep.subr.bf16.mxu0 0
  %2176 = vmatpush1.bf16.msra.mxu0 0
  %2177 = vmatprep.subr.bf16.mxu0 0
  %2178 = vmatpush1.bf16.msra.mxu0 0
  %2179 = vmatprep.subr.bf16.mxu0 0
  %2180 = vmatpush1.bf16.msra.mxu0 0
  %2181 = vmatprep.subr.bf16.mxu0 0
  %2182 = vmatpush1.bf16.msra.mxu0 0
  %2183 = vmatprep.subr.bf16.mxu0 0
  %2184 = vmatpush1.bf16.msra.mxu0 0
  %2185 = vmatprep.subr.bf16.mxu0 0
  %2186 = vmatpush1.bf16.msra.mxu0 0
  %2187 = vmatprep.subr.bf16.mxu0 0
  %2188 = vmatpush1.bf16.msra.mxu0 0
  %2189 = vmatprep.subr.bf16.mxu0 0
  %2190 = vmatpush1.bf16.msra.mxu0 0
  %2191 = vmatprep.subr.bf16.mxu0 0
  %2192 = vmatpush1.bf16.msra.mxu0 0
  %2193 = vmatprep.subr.bf16.mxu0 0
  %2194 = vmatpush1.bf16.msra.mxu0 0
  %2195 = vmatprep.subr.bf16.mxu0 0
  %2196 = vmatpush1.bf16.msra.mxu0 0
  %2197 = vmatprep.subr.bf16.mxu0 0
  %2198 = vmatpush1.bf16.msra.mxu0 0
  %2199 = vmatprep.subr.bf16.mxu0 0
  %2200 = vmatpush1.bf16.msra.mxu0 0
  %2201 = vmatprep.mubr.bf16.mxu0 0
  %2202 = vmatmul.mubr.bf16.gmra.mrb[0].mxu0 %v2167
  %v2203 = vpop.f32.mrb[0].mxu0
  %v2204 = vadd.f32 0.0, %v2203
  %v2205 = vpop.f32.mrb[0].mxu0
  %v2206 = vpop.f32.mrb[0].mxu0
  %v2207 = vpop.f32.mrb[0].mxu0
  %2208 = vdwg.mxu0
  %2209 = vmatprep.subr.bf16.mxu0 0
  %2210 = vmatpush1.bf16.msra.mxu0 %v955
  %2211 = vmatprep.subr.bf16.mxu0 0
  %2212 = vmatpush1.bf16.msra.mxu0 %v956
  %2213 = vmatprep.subr.bf16.mxu0 0
  %2214 = vmatpush1.bf16.msra.mxu0 %v957
  %2215 = vmatprep.subr.bf16.mxu0 0
  %2216 = vmatpush1.bf16.msra.mxu0 %v958
  %2217 = vmatprep.subr.bf16.mxu0 0
  %2218 = vmatpush1.bf16.msra.mxu0 %v959
  %2219 = vmatprep.subr.bf16.mxu0 0
  %2220 = vmatpush1.bf16.msra.mxu0 %v960
  %2221 = vmatprep.subr.bf16.mxu0 0
  %2222 = vmatpush1.bf16.msra.mxu0 %v961
  %2223 = vmatprep.subr.bf16.mxu0 0
  %2224 = vmatpush1.bf16.msra.mxu0 %v962
  %2225 = vmatprep.subr.bf16.mxu0 0
  %2226 = vmatpush1.bf16.msra.mxu0 %v963
  %2227 = vmatprep.subr.bf16.mxu0 0
  %2228 = vmatpush1.bf16.msra.mxu0 %v964
  %2229 = vmatprep.subr.bf16.mxu0 0
  %2230 = vmatpush1.bf16.msra.mxu0 %v965
  %2231 = vmatprep.subr.bf16.mxu0 0
  %2232 = vmatpush1.bf16.msra.mxu0 %v966
  %2233 = vmatprep.subr.bf16.mxu0 0
  %2234 = vmatpush1.bf16.msra.mxu0 %v967
  %2235 = vmatprep.subr.bf16.mxu0 0
  %2236 = vmatpush1.bf16.msra.mxu0 %v968
  %2237 = vmatprep.subr.bf16.mxu0 0
  %2238 = vmatpush1.bf16.msra.mxu0 %v969
  %2239 = vmatprep.subr.bf16.mxu0 0
  %2240 = vmatpush1.bf16.msra.mxu0 %v970
  %2241 = vmatprep.mubr.bf16.mxu0 %v2161
  %2242 = vmatmul.mubr.bf16.gmra.mrb[0].mxu0 %v2160
  %v2243 = vpop.f32.mrb[0].mxu0
  %v2244 = vadd.f32 %v2204, %v2243
  %v2245 = vpop.f32.mrb[0].mxu0
  %v2246 = vpop.f32.mrb[0].mxu0
  %v2247 = vpop.f32.mrb[0].mxu0
  %2248 = vdwg.mxu0
  %v2249 = vadd.f32 %v2244, %v1027
  %v2250 = vmax.f32 %v2249, 0.0
  %v2251 = vpack.c.bf16 %v2250, %v2250
  %2252 = vmatprep.subr.bf16.mxu0 0
  %2253 = vmatpush1.bf16.msra.mxu0 %v1080
  %2254 = vmatprep.subr.bf16.mxu0 0
  %2255 = vmatpush1.bf16.msra.mxu0 %v1081
  %2256 = vmatprep.subr.bf16.mxu0 0
  %2257 = vmatpush1.bf16.msra.mxu0 %v1082
  %2258 = vmatprep.subr.bf16.mxu0 0
  %2259 = vmatpush1.bf16.msra.mxu0 %v1083
  %2260 = vmatprep.subr.bf16.mxu0 0
  %2261 = vmatpush1.bf16.msra.mxu0 %v1084
  %2262 = vmatprep.subr.bf16.mxu0 0
  %2263 = vmatpush1.bf16.msra.mxu0 %v1085
  %2264 = vmatprep.subr.bf16.mxu0 0
  %2265 = vmatpush1.bf16.msra.mxu0 %v1086
  %2266 = vmatprep.subr.bf16.mxu0 0
  %2267 = vmatpush1.bf16.msra.mxu0 %v1087
  %2268 = vmatprep.subr.bf16.mxu0 0
  %2269 = vmatpush1.bf16.msra.mxu0 0
  %2270 = vmatprep.subr.bf16.mxu0 0
  %2271 = vmatpush1.bf16.msra.mxu0 0
  %2272 = vmatprep.subr.bf16.mxu0 0
  %2273 = vmatpush1.bf16.msra.mxu0 0
  %2274 = vmatprep.subr.bf16.mxu0 0
  %2275 = vmatpush1.bf16.msra.mxu0 0
  %2276 = vmatprep.subr.bf16.mxu0 0
  %2277 = vmatpush1.bf16.msra.mxu0 0
  %2278 = vmatprep.subr.bf16.mxu0 0
  %2279 = vmatpush1.bf16.msra.mxu0 0
  %2280 = vmatprep.subr.bf16.mxu0 0
  %2281 = vmatpush1.bf16.msra.mxu0 0
  %2282 = vmatprep.subr.bf16.mxu0 0
  %2283 = vmatpush1.bf16.msra.mxu0 0
  %2284 = vmatprep.mubr.bf16.mxu0 0
  %2285 = vmatmul.mubr.bf16.gmra.mrb[0].mxu0 %v2251
  %v2286 = vpop.f32.mrb[0].mxu0
  %v2287 = vadd.f32 %v1047, %v2286
  %v2288 = vpop.f32.mrb[0].mxu0
  %v2289 = vpop.f32.mrb[0].mxu0
  %v2290 = vpop.f32.mrb[0].mxu0
  %2291 = vdwg.mxu0
  %v2292 = vtanh.pop %v2287
  %v2293 = vxor.u32 %v2287, 2147483648
  %v2294 = vmul.f32 %v2293, 1.442695
  %v2295 = vpow.pop %v2294
  %v2296 = vadd.f32 %v2295, 1.0
  %v2297 = vrcp.pop %v2296
  %v2298 = vmul.f32 1.0, %v2297
  %v2299 = vmul.f32 %v2298, %v1924
  %2301 = vrot.lane.b32.xlu0 %v2292, 32
  %v2302 = vpop.permute.xlu0 %2301
  %v2304 = vmul.f32 %v2298, %v2302
  %2306 = vrot.lane.b32.xlu0 %v2304, 112
  %v2307 = vpop.permute.xlu0 %2306
  %v2309 = vadd.f32 %v2299, %v2307
  %v2310 = vpack.c.bf16 %v2047, %v2047
  %v2312 = vrot.slane %v2310, 2
  %2314 = vmatprep.subr.bf16.mxu0 %v364
  %2315 = vmatpush1.bf16.msra.mxu0 %v363
  %2316 = vmatprep.subr.bf16.mxu0 %v368
  %2317 = vmatpush1.bf16.msra.mxu0 %v367
  %2318 = vmatprep.subr.bf16.mxu0 %v372
  %2319 = vmatpush1.bf16.msra.mxu0 %v371
  %2320 = vmatprep.subr.bf16.mxu0 %v376
  %2321 = vmatpush1.bf16.msra.mxu0 %v375
  %2322 = vmatprep.subr.bf16.mxu0 %v380
  %2323 = vmatpush1.bf16.msra.mxu0 %v379
  %2324 = vmatprep.subr.bf16.mxu0 %v384
  %2325 = vmatpush1.bf16.msra.mxu0 %v383
  %2326 = vmatprep.subr.bf16.mxu0 %v388
  %2327 = vmatpush1.bf16.msra.mxu0 %v387
  %2328 = vmatprep.subr.bf16.mxu0 %v392
  %2329 = vmatpush1.bf16.msra.mxu0 %v391
  %2330 = vmatprep.subr.bf16.mxu0 0
  %2331 = vmatpush1.bf16.msra.mxu0 0
  %2332 = vmatprep.subr.bf16.mxu0 0
  %2333 = vmatpush1.bf16.msra.mxu0 0
  %2334 = vmatprep.subr.bf16.mxu0 0
  %2335 = vmatpush1.bf16.msra.mxu0 0
  %2336 = vmatprep.subr.bf16.mxu0 0
  %2337 = vmatpush1.bf16.msra.mxu0 0
  %2338 = vmatprep.subr.bf16.mxu0 0
  %2339 = vmatpush1.bf16.msra.mxu0 0
  %2340 = vmatprep.subr.bf16.mxu0 0
  %2341 = vmatpush1.bf16.msra.mxu0 0
  %2342 = vmatprep.subr.bf16.mxu0 0
  %2343 = vmatpush1.bf16.msra.mxu0 0
  %2344 = vmatprep.subr.bf16.mxu0 0
  %2345 = vmatpush1.bf16.msra.mxu0 0
  %2346 = vmatprep.mubr.bf16.mxu0 0
  %2347 = vmatmul.mubr.bf16.gmra.mrb[0].mxu0 %v2312
  %v2348 = vpop.f32.mrb[0].mxu0
  %v2349 = vadd.f32 0.0, %v2348
  %v2350 = vpop.f32.mrb[0].mxu0
  %v2351 = vadd.f32 0.0, %v2350
  %v2352 = vpop.f32.mrb[0].mxu0
  %v2353 = vpop.f32.mrb[0].mxu0
  %2354 = vdwg.mxu0
  %2355 = vmatprep.subr.bf16.mxu0 %v366
  %2356 = vmatpush1.bf16.msra.mxu0 %v365
  %2357 = vmatprep.subr.bf16.mxu0 %v370
  %2358 = vmatpush1.bf16.msra.mxu0 %v369
  %2359 = vmatprep.subr.bf16.mxu0 %v374
  %2360 = vmatpush1.bf16.msra.mxu0 %v373
  %2361 = vmatprep.subr.bf16.mxu0 %v378
  %2362 = vmatpush1.bf16.msra.mxu0 %v377
  %2363 = vmatprep.subr.bf16.mxu0 %v382
  %2364 = vmatpush1.bf16.msra.mxu0 %v381
  %2365 = vmatprep.subr.bf16.mxu0 %v386
  %2366 = vmatpush1.bf16.msra.mxu0 %v385
  %2367 = vmatprep.subr.bf16.mxu0 %v390
  %2368 = vmatpush1.bf16.msra.mxu0 %v389
  %2369 = vmatprep.subr.bf16.mxu0 %v394
  %2370 = vmatpush1.bf16.msra.mxu0 %v393
  %2371 = vmatprep.subr.bf16.mxu0 0
  %2372 = vmatpush1.bf16.msra.mxu0 0
  %2373 = vmatprep.subr.bf16.mxu0 0
  %2374 = vmatpush1.bf16.msra.mxu0 0
  %2375 = vmatprep.subr.bf16.mxu0 0
  %2376 = vmatpush1.bf16.msra.mxu0 0
  %2377 = vmatprep.subr.bf16.mxu0 0
  %2378 = vmatpush1.bf16.msra.mxu0 0
  %2379 = vmatprep.subr.bf16.mxu0 0
  %2380 = vmatpush1.bf16.msra.mxu0 0
  %2381 = vmatprep.subr.bf16.mxu0 0
  %2382 = vmatpush1.bf16.msra.mxu0 0
  %2383 = vmatprep.subr.bf16.mxu0 0
  %2384 = vmatpush1.bf16.msra.mxu0 0
  %2385 = vmatprep.subr.bf16.mxu0 0
  %2386 = vmatpush1.bf16.msra.mxu0 0
  %2387 = vmatprep.mubr.bf16.mxu0 0
  %2388 = vmatmul.mubr.bf16.gmra.mrb[0].mxu0 %v2312
  %v2389 = vpop.f32.mrb[0].mxu0
  %v2390 = vadd.f32 0.0, %v2389
  %v2391 = vpop.f32.mrb[0].mxu0
  %v2392 = vadd.f32 0.0, %v2391
  %v2393 = vpop.f32.mrb[0].mxu0
  %v2394 = vpop.f32.mrb[0].mxu0
  %2395 = vdwg.mxu0
  %v2396 = vadd.f32 %v178, %v2349
  %v2397 = vadd.f32 %v180, %v2351
  %v2398 = vadd.f32 %v229, %v2390
  %v2399 = vadd.f32 %v231, %v2392
  %v2400 = vxor.u32 %v2396, 2147483648
  %v2401 = vmul.f32 %v2400, 1.442695
  %v2402 = vpow.pop %v2401
  %v2403 = vadd.f32 %v2402, 1.0
  %v2404 = vrcp.pop %v2403
  %v2405 = vmul.f32 1.0, %v2404
  %v2406 = vxor.u32 %v2397, 2147483648
  %v2407 = vmul.f32 %v2406, 1.442695
  %v2408 = vpow.pop %v2407
  %v2409 = vadd.f32 %v2408, 1.0
  %v2410 = vrcp.pop %v2409
  %v2411 = vmul.f32 1.0, %v2410
  %v2412 = vtanh.pop %v2398
  %v2413 = vxor.u32 %v2399, 2147483648
  %v2414 = vmul.f32 %v2413, 1.442695
  %v2415 = vpow.pop %v2414
  %v2416 = vadd.f32 %v2415, 1.0
  %v2417 = vrcp.pop %v2416
  %v2418 = vmul.f32 1.0, %v2417
  %v2419 = vmul.f32 %v2411, %v2049
  %v2420 = vmul.f32 %v2405, %v2412
  %v2421 = vadd.f32 %v2419, %v2420
  %v2422 = vtanh.pop %v2421
  %v2423 = vmul.f32 %v2418, %v2422
  %v2425 = vrot.slane %v2421, 4
  %v2427 = vpack.c.bf16 %v2045, %v2045
  %v2428 = vpack.c.bf16 %v2425, %v2425
  %v2431 = vrot.slane %v2427, 2
  %v2432 = vrot.slane %v2428, 2
  %2435 = vmatprep.subr.bf16.mxu0 0
  %2436 = vmatpush1.bf16.msra.mxu0 %v636
  %2437 = vmatprep.subr.bf16.mxu0 0
  %2438 = vmatpush1.bf16.msra.mxu0 %v637
  %2439 = vmatprep.subr.bf16.mxu0 0
  %2440 = vmatpush1.bf16.msra.mxu0 %v638
  %2441 = vmatprep.subr.bf16.mxu0 0
  %2442 = vmatpush1.bf16.msra.mxu0 %v639
  %2443 = vmatprep.subr.bf16.mxu0 0
  %2444 = vmatpush1.bf16.msra.mxu0 %v640
  %2445 = vmatprep.subr.bf16.mxu0 0
  %2446 = vmatpush1.bf16.msra.mxu0 %v641
  %2447 = vmatprep.subr.bf16.mxu0 0
  %2448 = vmatpush1.bf16.msra.mxu0 %v642
  %2449 = vmatprep.subr.bf16.mxu0 0
  %2450 = vmatpush1.bf16.msra.mxu0 %v643
  %2451 = vmatprep.subr.bf16.mxu0 0
  %2452 = vmatpush1.bf16.msra.mxu0 %v644
  %2453 = vmatprep.subr.bf16.mxu0 0
  %2454 = vmatpush1.bf16.msra.mxu0 %v645
  %2455 = vmatprep.subr.bf16.mxu0 0
  %2456 = vmatpush1.bf16.msra.mxu0 %v646
  %2457 = vmatprep.subr.bf16.mxu0 0
  %2458 = vmatpush1.bf16.msra.mxu0 %v647
  %2459 = vmatprep.subr.bf16.mxu0 0
  %2460 = vmatpush1.bf16.msra.mxu0 %v648
  %2461 = vmatprep.subr.bf16.mxu0 0
  %2462 = vmatpush1.bf16.msra.mxu0 %v649
  %2463 = vmatprep.subr.bf16.mxu0 0
  %2464 = vmatpush1.bf16.msra.mxu0 %v650
  %2465 = vmatprep.subr.bf16.mxu0 0
  %2466 = vmatpush1.bf16.msra.mxu0 %v651
  %2467 = vmatprep.mubr.bf16.mxu0 %v2432
  %2468 = vmatmul.mubr.bf16.gmra.mrb[0].mxu0 %v2431
  %v2469 = vpop.f32.mrb[0].mxu0
  %v2470 = vadd.f32 %v571, %v2469
  %v2471 = vpop.f32.mrb[0].mxu0
  %v2472 = vpop.f32.mrb[0].mxu0
  %v2473 = vpop.f32.mrb[0].mxu0
  %2474 = vdwg.mxu0
  %v2475 = vmax.f32 %v2470, 0.0
  %v2476 = vpack.c.bf16 %v2475, %v2475
  %v2478 = vsel %vm738, %v2476, 0
  %2480 = vmatprep.subr.bf16.mxu0 %v728
  %2481 = vmatpush1.bf16.msra.mxu0 %v727
  %2482 = vmatprep.subr.bf16.mxu0 %v730
  %2483 = vmatpush1.bf16.msra.mxu0 %v729
  %2484 = vmatprep.subr.bf16.mxu0 0
  %2485 = vmatpush1.bf16.msra.mxu0 0
  %2486 = vmatprep.subr.bf16.mxu0 0
  %2487 = vmatpush1.bf16.msra.mxu0 0
  %2488 = vmatprep.subr.bf16.mxu0 0
  %2489 = vmatpush1.bf16.msra.mxu0 0
  %2490 = vmatprep.subr.bf16.mxu0 0
  %2491 = vmatpush1.bf16.msra.mxu0 0
  %2492 = vmatprep.subr.bf16.mxu0 0
  %2493 = vmatpush1.bf16.msra.mxu0 0
  %2494 = vmatprep.subr.bf16.mxu0 0
  %2495 = vmatpush1.bf16.msra.mxu0 0
  %2496 = vmatprep.subr.bf16.mxu0 0
  %2497 = vmatpush1.bf16.msra.mxu0 0
  %2498 = vmatprep.subr.bf16.mxu0 0
  %2499 = vmatpush1.bf16.msra.mxu0 0
  %2500 = vmatprep.subr.bf16.mxu0 0
  %2501 = vmatpush1.bf16.msra.mxu0 0
  %2502 = vmatprep.subr.bf16.mxu0 0
  %2503 = vmatpush1.bf16.msra.mxu0 0
  %2504 = vmatprep.subr.bf16.mxu0 0
  %2505 = vmatpush1.bf16.msra.mxu0 0
  %2506 = vmatprep.subr.bf16.mxu0 0
  %2507 = vmatpush1.bf16.msra.mxu0 0
  %2508 = vmatprep.subr.bf16.mxu0 0
  %2509 = vmatpush1.bf16.msra.mxu0 0
  %2510 = vmatprep.subr.bf16.mxu0 0
  %2511 = vmatpush1.bf16.msra.mxu0 0
  %2512 = vmatprep.mubr.bf16.mxu0 0
  %2513 = vmatmul.mubr.bf16.gmra.mrb[0].mxu0 %v2478
  %v2514 = vpop.f32.mrb[0].mxu0
  %v2515 = vadd.f32 %v714, %v2514
  %v2516 = vpop.f32.mrb[0].mxu0
  %v2517 = vadd.f32 %v736, %v2516
  %v2518 = vpop.f32.mrb[0].mxu0
  %v2519 = vpop.f32.mrb[0].mxu0
  %2520 = vdwg.mxu0
  %v2521 = vsel %vm783, %v2515, -inf
  %v2522 = vsel %vm783, %v2517, -inf
  %v2523 = vmax.f32 %v2521, %v2522
  %2524 = vmax.xlane.f32.xlu0 %v2523
  %v2525 = vpop.xlane.xlu0 %2524
  %v2526 = vsub.f32 %v2515, %v2525
  %v2527 = vsub.f32 %v2517, %v2525
  %v2528 = vmul.f32 %v2526, 1.442695
  %v2529 = vpow.pop %v2528
  %v2530 = vmul.f32 %v2527, 1.442695
  %v2531 = vpow.pop %v2530
  %v2532 = vsel %vm783, %v2529, 0.0
  %v2533 = vsel %vm783, %v2531, 0.0
  %v2534 = vadd.f32 %v2532, %v2533
  %2535 = vadd.xlane.f32.xlu0 %v2534
  %v2536 = vpop.xlane.xlu0 %2535
  %v2537 = vrcp.pop %v2536
  %v2538 = vmul.f32 %v2529, %v2537
  %v2539 = vmul.f32 %v2531, %v2537
  %v2540 = vrot.slane %v2425, 4
  %v2542 = vmul.f32 %v2538, %v2049
  %v2543 = vmul.f32 %v2539, %v2540
  %v2544 = vpack.c.bf16 %v2542, %v2542
  %v2545 = vpack.c.bf16 %v2543, %v2543
  %v2546 = vpack.c.bf16 %v2309, %v2309
  %2548 = vrot.lane.b32.xlu0 %v2546, 112
  %v2549 = vpop.permute.xlu0 %2548
  %v2551 = vsel %vm847, %v2549, 0
  %2553 = vmatprep.subr.bf16.mxu0 0
  %2554 = vmatpush1.bf16.msra.mxu0 %v845
  %2555 = vmatprep.subr.bf16.mxu0 0
  %2556 = vmatpush1.bf16.msra.mxu0 0
  %2557 = vmatprep.subr.bf16.mxu0 0
  %2558 = vmatpush1.bf16.msra.mxu0 0
  %2559 = vmatprep.subr.bf16.mxu0 0
  %2560 = vmatpush1.bf16.msra.mxu0 0
  %2561 = vmatprep.subr.bf16.mxu0 0
  %2562 = vmatpush1.bf16.msra.mxu0 0
  %2563 = vmatprep.subr.bf16.mxu0 0
  %2564 = vmatpush1.bf16.msra.mxu0 0
  %2565 = vmatprep.subr.bf16.mxu0 0
  %2566 = vmatpush1.bf16.msra.mxu0 0
  %2567 = vmatprep.subr.bf16.mxu0 0
  %2568 = vmatpush1.bf16.msra.mxu0 0
  %2569 = vmatprep.subr.bf16.mxu0 0
  %2570 = vmatpush1.bf16.msra.mxu0 0
  %2571 = vmatprep.subr.bf16.mxu0 0
  %2572 = vmatpush1.bf16.msra.mxu0 0
  %2573 = vmatprep.subr.bf16.mxu0 0
  %2574 = vmatpush1.bf16.msra.mxu0 0
  %2575 = vmatprep.subr.bf16.mxu0 0
  %2576 = vmatpush1.bf16.msra.mxu0 0
  %2577 = vmatprep.subr.bf16.mxu0 0
  %2578 = vmatpush1.bf16.msra.mxu0 0
  %2579 = vmatprep.subr.bf16.mxu0 0
  %2580 = vmatpush1.bf16.msra.mxu0 0
  %2581 = vmatprep.subr.bf16.mxu0 0
  %2582 = vmatpush1.bf16.msra.mxu0 0
  %2583 = vmatprep.subr.bf16.mxu0 0
  %2584 = vmatpush1.bf16.msra.mxu0 0
  %2585 = vmatprep.mubr.bf16.mxu0 0
  %2586 = vmatmul.mubr.bf16.gmra.mrb[0].mxu0 %v2551
  %v2587 = vpop.f32.mrb[0].mxu0
  %v2588 = vadd.f32 0.0, %v2587
  %v2589 = vpop.f32.mrb[0].mxu0
  %v2590 = vpop.f32.mrb[0].mxu0
  %v2591 = vpop.f32.mrb[0].mxu0
  %2592 = vdwg.mxu0
  %2593 = vmatprep.subr.bf16.mxu0 0
  %2594 = vmatpush1.bf16.msra.mxu0 %v955
  %2595 = vmatprep.subr.bf16.mxu0 0
  %2596 = vmatpush1.bf16.msra.mxu0 %v956
  %2597 = vmatprep.subr.bf16.mxu0 0
  %2598 = vmatpush1.bf16.msra.mxu0 %v957
  %2599 = vmatprep.subr.bf16.mxu0 0
  %2600 = vmatpush1.bf16.msra.mxu0 %v958
  %2601 = vmatprep.subr.bf16.mxu0 0
  %2602 = vmatpush1.bf16.msra.mxu0 %v959
  %2603 = vmatprep.subr.bf16.mxu0 0
  %2604 = vmatpush1.bf16.msra.mxu0 %v960
  %2605 = vmatprep.subr.bf16.mxu0 0
  %2606 = vmatpush1.bf16.msra.mxu0 %v961
  %2607 = vmatprep.subr.bf16.mxu0 0
  %2608 = vmatpush1.bf16.msra.mxu0 %v962
  %2609 = vmatprep.subr.bf16.mxu0 0
  %2610 = vmatpush1.bf16.msra.mxu0 %v963
  %2611 = vmatprep.subr.bf16.mxu0 0
  %2612 = vmatpush1.bf16.msra.mxu0 %v964
  %2613 = vmatprep.subr.bf16.mxu0 0
  %2614 = vmatpush1.bf16.msra.mxu0 %v965
  %2615 = vmatprep.subr.bf16.mxu0 0
  %2616 = vmatpush1.bf16.msra.mxu0 %v966
  %2617 = vmatprep.subr.bf16.mxu0 0
  %2618 = vmatpush1.bf16.msra.mxu0 %v967
  %2619 = vmatprep.subr.bf16.mxu0 0
  %2620 = vmatpush1.bf16.msra.mxu0 %v968
  %2621 = vmatprep.subr.bf16.mxu0 0
  %2622 = vmatpush1.bf16.msra.mxu0 %v969
  %2623 = vmatprep.subr.bf16.mxu0 0
  %2624 = vmatpush1.bf16.msra.mxu0 %v970
  %2625 = vmatprep.mubr.bf16.mxu0 %v2545
  %2626 = vmatmul.mubr.bf16.gmra.mrb[0].mxu0 %v2544
  %v2627 = vpop.f32.mrb[0].mxu0
  %v2628 = vadd.f32 %v2588, %v2627
  %v2629 = vpop.f32.mrb[0].mxu0
  %v2630 = vpop.f32.mrb[0].mxu0
  %v2631 = vpop.f32.mrb[0].mxu0
  %2632 = vdwg.mxu0
  %v2633 = vadd.f32 %v2628, %v1027
  %v2634 = vmax.f32 %v2633, 0.0
  %v2635 = vpack.c.bf16 %v2634, %v2634
  %2636 = vmatprep.subr.bf16.mxu0 0
  %2637 = vmatpush1.bf16.msra.mxu0 %v1080
  %2638 = vmatprep.subr.bf16.mxu0 0
  %2639 = vmatpush1.bf16.msra.mxu0 %v1081
  %2640 = vmatprep.subr.bf16.mxu0 0
  %2641 = vmatpush1.bf16.msra.mxu0 %v1082
  %2642 = vmatprep.subr.bf16.mxu0 0
  %2643 = vmatpush1.bf16.msra.mxu0 %v1083
  %2644 = vmatprep.subr.bf16.mxu0 0
  %2645 = vmatpush1.bf16.msra.mxu0 %v1084
  %2646 = vmatprep.subr.bf16.mxu0 0
  %2647 = vmatpush1.bf16.msra.mxu0 %v1085
  %2648 = vmatprep.subr.bf16.mxu0 0
  %2649 = vmatpush1.bf16.msra.mxu0 %v1086
  %2650 = vmatprep.subr.bf16.mxu0 0
  %2651 = vmatpush1.bf16.msra.mxu0 %v1087
  %2652 = vmatprep.subr.bf16.mxu0 0
  %2653 = vmatpush1.bf16.msra.mxu0 0
  %2654 = vmatprep.subr.bf16.mxu0 0
  %2655 = vmatpush1.bf16.msra.mxu0 0
  %2656 = vmatprep.subr.bf16.mxu0 0
  %2657 = vmatpush1.bf16.msra.mxu0 0
  %2658 = vmatprep.subr.bf16.mxu0 0
  %2659 = vmatpush1.bf16.msra.mxu0 0
  %2660 = vmatprep.subr.bf16.mxu0 0
  %2661 = vmatpush1.bf16.msra.mxu0 0
  %2662 = vmatprep.subr.bf16.mxu0 0
  %2663 = vmatpush1.bf16.msra.mxu0 0
  %2664 = vmatprep.subr.bf16.mxu0 0
  %2665 = vmatpush1.bf16.msra.mxu0 0
  %2666 = vmatprep.subr.bf16.mxu0 0
  %2667 = vmatpush1.bf16.msra.mxu0 0
  %2668 = vmatprep.mubr.bf16.mxu0 0
  %2669 = vmatmul.mubr.bf16.gmra.mrb[0].mxu0 %v2635
  %v2670 = vpop.f32.mrb[0].mxu0
  %v2671 = vadd.f32 %v1047, %v2670
  %v2672 = vpop.f32.mrb[0].mxu0
  %v2673 = vpop.f32.mrb[0].mxu0
  %v2674 = vpop.f32.mrb[0].mxu0
  %2675 = vdwg.mxu0
  %v2676 = vtanh.pop %v2671
  %v2677 = vxor.u32 %v2671, 2147483648
  %v2678 = vmul.f32 %v2677, 1.442695
  %v2679 = vpow.pop %v2678
  %v2680 = vadd.f32 %v2679, 1.0
  %v2681 = vrcp.pop %v2680
  %v2682 = vmul.f32 1.0, %v2681
  %v2683 = vmul.f32 %v2682, %v2309
  %2685 = vrot.lane.b32.xlu0 %v2676, 32
  %v2686 = vpop.permute.xlu0 %2685
  %v2688 = vmul.f32 %v2682, %v2686
  %2690 = vrot.lane.b32.xlu0 %v2688, 112
  %v2691 = vpop.permute.xlu0 %2690
  %v2693 = vadd.f32 %v2683, %v2691
  %v2694 = vpack.c.bf16 %v2423, %v2423
  %2695 = vmatprep.subr.bf16.mxu0 %v364
  %2696 = vmatpush1.bf16.msra.mxu0 %v363
  %2697 = vmatprep.subr.bf16.mxu0 %v368
  %2698 = vmatpush1.bf16.msra.mxu0 %v367
  %2699 = vmatprep.subr.bf16.mxu0 %v372
  %2700 = vmatpush1.bf16.msra.mxu0 %v371
  %2701 = vmatprep.subr.bf16.mxu0 %v376
  %2702 = vmatpush1.bf16.msra.mxu0 %v375
  %2703 = vmatprep.subr.bf16.mxu0 %v380
  %2704 = vmatpush1.bf16.msra.mxu0 %v379
  %2705 = vmatprep.subr.bf16.mxu0 %v384
  %2706 = vmatpush1.bf16.msra.mxu0 %v383
  %2707 = vmatprep.subr.bf16.mxu0 %v388
  %2708 = vmatpush1.bf16.msra.mxu0 %v387
  %2709 = vmatprep.subr.bf16.mxu0 %v392
  %2710 = vmatpush1.bf16.msra.mxu0 %v391
  %2711 = vmatprep.subr.bf16.mxu0 0
  %2712 = vmatpush1.bf16.msra.mxu0 0
  %2713 = vmatprep.subr.bf16.mxu0 0
  %2714 = vmatpush1.bf16.msra.mxu0 0
  %2715 = vmatprep.subr.bf16.mxu0 0
  %2716 = vmatpush1.bf16.msra.mxu0 0
  %2717 = vmatprep.subr.bf16.mxu0 0
  %2718 = vmatpush1.bf16.msra.mxu0 0
  %2719 = vmatprep.subr.bf16.mxu0 0
  %2720 = vmatpush1.bf16.msra.mxu0 0
  %2721 = vmatprep.subr.bf16.mxu0 0
  %2722 = vmatpush1.bf16.msra.mxu0 0
  %2723 = vmatprep.subr.bf16.mxu0 0
  %2724 = vmatpush1.bf16.msra.mxu0 0
  %2725 = vmatprep.subr.bf16.mxu0 0
  %2726 = vmatpush1.bf16.msra.mxu0 0
  %2727 = vmatprep.mubr.bf16.mxu0 0
  %2728 = vmatmul.mubr.bf16.gmra.mrb[0].mxu0 %v2694
  %v2729 = vpop.f32.mrb[0].mxu0
  %v2730 = vadd.f32 0.0, %v2729
  %v2731 = vpop.f32.mrb[0].mxu0
  %v2732 = vadd.f32 0.0, %v2731
  %v2733 = vpop.f32.mrb[0].mxu0
  %v2734 = vpop.f32.mrb[0].mxu0
  %2735 = vdwg.mxu0
  %2736 = vmatprep.subr.bf16.mxu0 %v366
  %2737 = vmatpush1.bf16.msra.mxu0 %v365
  %2738 = vmatprep.subr.bf16.mxu0 %v370
  %2739 = vmatpush1.bf16.msra.mxu0 %v369
  %2740 = vmatprep.subr.bf16.mxu0 %v374
  %2741 = vmatpush1.bf16.msra.mxu0 %v373
  %2742 = vmatprep.subr.bf16.mxu0 %v378
  %2743 = vmatpush1.bf16.msra.mxu0 %v377
  %2744 = vmatprep.subr.bf16.mxu0 %v382
  %2745 = vmatpush1.bf16.msra.mxu0 %v381
  %2746 = vmatprep.subr.bf16.mxu0 %v386
  %2747 = vmatpush1.bf16.msra.mxu0 %v385
  %2748 = vmatprep.subr.bf16.mxu0 %v390
  %2749 = vmatpush1.bf16.msra.mxu0 %v389
  %2750 = vmatprep.subr.bf16.mxu0 %v394
  %2751 = vmatpush1.bf16.msra.mxu0 %v393
  %2752 = vmatprep.subr.bf16.mxu0 0
  %2753 = vmatpush1.bf16.msra.mxu0 0
  %2754 = vmatprep.subr.bf16.mxu0 0
  %2755 = vmatpush1.bf16.msra.mxu0 0
  %2756 = vmatprep.subr.bf16.mxu0 0
  %2757 = vmatpush1.bf16.msra.mxu0 0
  %2758 = vmatprep.subr.bf16.mxu0 0
  %2759 = vmatpush1.bf16.msra.mxu0 0
  %2760 = vmatprep.subr.bf16.mxu0 0
  %2761 = vmatpush1.bf16.msra.mxu0 0
  %2762 = vmatprep.subr.bf16.mxu0 0
  %2763 = vmatpush1.bf16.msra.mxu0 0
  %2764 = vmatprep.subr.bf16.mxu0 0
  %2765 = vmatpush1.bf16.msra.mxu0 0
  %2766 = vmatprep.subr.bf16.mxu0 0
  %2767 = vmatpush1.bf16.msra.mxu0 0
  %2768 = vmatprep.mubr.bf16.mxu0 0
  %2769 = vmatmul.mubr.bf16.gmra.mrb[0].mxu0 %v2694
  %v2770 = vpop.f32.mrb[0].mxu0
  %v2771 = vadd.f32 0.0, %v2770
  %v2772 = vpop.f32.mrb[0].mxu0
  %v2773 = vadd.f32 0.0, %v2772
  %v2774 = vpop.f32.mrb[0].mxu0
  %v2775 = vpop.f32.mrb[0].mxu0
  %2776 = vdwg.mxu0
  %v2781 = vrot.slane %v2730, 4
  %v2782 = vrot.slane %v2732, 4
  %v2783 = vrot.slane %v2771, 4
  %v2784 = vrot.slane %v2773, 4
  %v2789 = vadd.f32 %v178, %v2781
  %v2790 = vadd.f32 %v180, %v2782
  %v2791 = vadd.f32 %v229, %v2783
  %v2792 = vadd.f32 %v231, %v2784
  %v2793 = vxor.u32 %v2789, 2147483648
  %v2794 = vmul.f32 %v2793, 1.442695
  %v2795 = vpow.pop %v2794
  %v2796 = vadd.f32 %v2795, 1.0
  %v2797 = vrcp.pop %v2796
  %v2798 = vmul.f32 1.0, %v2797
  %v2799 = vxor.u32 %v2790, 2147483648
  %v2800 = vmul.f32 %v2799, 1.442695
  %v2801 = vpow.pop %v2800
  %v2802 = vadd.f32 %v2801, 1.0
  %v2803 = vrcp.pop %v2802
  %v2804 = vmul.f32 1.0, %v2803
  %v2805 = vtanh.pop %v2791
  %v2806 = vxor.u32 %v2792, 2147483648
  %v2807 = vmul.f32 %v2806, 1.442695
  %v2808 = vpow.pop %v2807
  %v2809 = vadd.f32 %v2808, 1.0
  %v2810 = vrcp.pop %v2809
  %v2811 = vmul.f32 1.0, %v2810
  %v2812 = vmul.f32 %v2804, %v2425
  %v2813 = vmul.f32 %v2798, %v2805
  %v2814 = vadd.f32 %v2812, %v2813
  %v2815 = vtanh.pop %v2814
  %v2816 = vmul.f32 %v2811, %v2815
  %v2818 = vrot.slane %v2814, 4
  %v2820 = vpack.c.bf16 %v2421, %v2421
  %v2821 = vpack.c.bf16 %v2818, %v2818
  %2822 = vmatprep.subr.bf16.mxu0 0
  %2823 = vmatpush1.bf16.msra.mxu0 %v636
  %2824 = vmatprep.subr.bf16.mxu0 0
  %2825 = vmatpush1.bf16.msra.mxu0 %v637
  %2826 = vmatprep.subr.bf16.mxu0 0
  %2827 = vmatpush1.bf16.msra.mxu0 %v638
  %2828 = vmatprep.subr.bf16.mxu0 0
  %2829 = vmatpush1.bf16.msra.mxu0 %v639
  %2830 = vmatprep.subr.bf16.mxu0 0
  %2831 = vmatpush1.bf16.msra.mxu0 %v640
  %2832 = vmatprep.subr.bf16.mxu0 0
  %2833 = vmatpush1.bf16.msra.mxu0 %v641
  %2834 = vmatprep.subr.bf16.mxu0 0
  %2835 = vmatpush1.bf16.msra.mxu0 %v642
  %2836 = vmatprep.subr.bf16.mxu0 0
  %2837 = vmatpush1.bf16.msra.mxu0 %v643
  %2838 = vmatprep.subr.bf16.mxu0 0
  %2839 = vmatpush1.bf16.msra.mxu0 %v644
  %2840 = vmatprep.subr.bf16.mxu0 0
  %2841 = vmatpush1.bf16.msra.mxu0 %v645
  %2842 = vmatprep.subr.bf16.mxu0 0
  %2843 = vmatpush1.bf16.msra.mxu0 %v646
  %2844 = vmatprep.subr.bf16.mxu0 0
  %2845 = vmatpush1.bf16.msra.mxu0 %v647
  %2846 = vmatprep.subr.bf16.mxu0 0
  %2847 = vmatpush1.bf16.msra.mxu0 %v648
  %2848 = vmatprep.subr.bf16.mxu0 0
  %2849 = vmatpush1.bf16.msra.mxu0 %v649
  %2850 = vmatprep.subr.bf16.mxu0 0
  %2851 = vmatpush1.bf16.msra.mxu0 %v650
  %2852 = vmatprep.subr.bf16.mxu0 0
  %2853 = vmatpush1.bf16.msra.mxu0 %v651
  %2854 = vmatprep.mubr.bf16.mxu0 %v2821
  %2855 = vmatmul.mubr.bf16.gmra.mrb[0].mxu0 %v2820
  %v2856 = vpop.f32.mrb[0].mxu0
  %v2857 = vadd.f32 %v571, %v2856
  %v2858 = vpop.f32.mrb[0].mxu0
  %v2859 = vpop.f32.mrb[0].mxu0
  %v2860 = vpop.f32.mrb[0].mxu0
  %2861 = vdwg.mxu0
  %v2862 = vmax.f32 %v2857, 0.0
  %v2863 = vpack.c.bf16 %v2862, %v2862
  %v2865 = vsel %vm738, %v2863, 0
  %2867 = vmatprep.subr.bf16.mxu0 %v728
  %2868 = vmatpush1.bf16.msra.mxu0 %v727
  %2869 = vmatprep.subr.bf16.mxu0 %v730
  %2870 = vmatpush1.bf16.msra.mxu0 %v729
  %2871 = vmatprep.subr.bf16.mxu0 0
  %2872 = vmatpush1.bf16.msra.mxu0 0
  %2873 = vmatprep.subr.bf16.mxu0 0
  %2874 = vmatpush1.bf16.msra.mxu0 0
  %2875 = vmatprep.subr.bf16.mxu0 0
  %2876 = vmatpush1.bf16.msra.mxu0 0
  %2877 = vmatprep.subr.bf16.mxu0 0
  %2878 = vmatpush1.bf16.msra.mxu0 0
  %2879 = vmatprep.subr.bf16.mxu0 0
  %2880 = vmatpush1.bf16.msra.mxu0 0
  %2881 = vmatprep.subr.bf16.mxu0 0
  %2882 = vmatpush1.bf16.msra.mxu0 0
  %2883 = vmatprep.subr.bf16.mxu0 0
  %2884 = vmatpush1.bf16.msra.mxu0 0
  %2885 = vmatprep.subr.bf16.mxu0 0
  %2886 = vmatpush1.bf16.msra.mxu0 0
  %2887 = vmatprep.subr.bf16.mxu0 0
  %2888 = vmatpush1.bf16.msra.mxu0 0
  %2889 = vmatprep.subr.bf16.mxu0 0
  %2890 = vmatpush1.bf16.msra.mxu0 0
  %2891 = vmatprep.subr.bf16.mxu0 0
  %2892 = vmatpush1.bf16.msra.mxu0 0
  %2893 = vmatprep.subr.bf16.mxu0 0
  %2894 = vmatpush1.bf16.msra.mxu0 0
  %2895 = vmatprep.subr.bf16.mxu0 0
  %2896 = vmatpush1.bf16.msra.mxu0 0
  %2897 = vmatprep.subr.bf16.mxu0 0
  %2898 = vmatpush1.bf16.msra.mxu0 0
  %2899 = vmatprep.mubr.bf16.mxu0 0
  %2900 = vmatmul.mubr.bf16.gmra.mrb[0].mxu0 %v2865
  %v2901 = vpop.f32.mrb[0].mxu0
  %v2902 = vadd.f32 %v714, %v2901
  %v2903 = vpop.f32.mrb[0].mxu0
  %v2904 = vadd.f32 %v736, %v2903
  %v2905 = vpop.f32.mrb[0].mxu0
  %v2906 = vpop.f32.mrb[0].mxu0
  %2907 = vdwg.mxu0
  %v2908 = vsel %vm783, %v2902, -inf
  %v2909 = vsel %vm783, %v2904, -inf
  %v2910 = vmax.f32 %v2908, %v2909
  %2911 = vmax.xlane.f32.xlu0 %v2910
  %v2912 = vpop.xlane.xlu0 %2911
  %v2913 = vsub.f32 %v2902, %v2912
  %v2914 = vsub.f32 %v2904, %v2912
  %v2915 = vmul.f32 %v2913, 1.442695
  %v2916 = vpow.pop %v2915
  %v2917 = vmul.f32 %v2914, 1.442695
  %v2918 = vpow.pop %v2917
  %v2919 = vsel %vm783, %v2916, 0.0
  %v2920 = vsel %vm783, %v2918, 0.0
  %v2921 = vadd.f32 %v2919, %v2920
  %2922 = vadd.xlane.f32.xlu0 %v2921
  %v2923 = vpop.xlane.xlu0 %2922
  %v2924 = vrcp.pop %v2923
  %v2925 = vmul.f32 %v2916, %v2924
  %v2926 = vmul.f32 %v2918, %v2924
  %v2927 = vmul.f32 %v2925, %v2421
  %v2928 = vmul.f32 %v2926, %v2818
  %v2929 = vpack.c.bf16 %v2927, %v2927
  %v2930 = vpack.c.bf16 %v2928, %v2928
  %v2931 = vpack.c.bf16 %v2693, %v2693
  %2933 = vrot.lane.b32.xlu0 %v2931, 112
  %v2934 = vpop.permute.xlu0 %2933
  %v2936 = vsel %vm847, %v2934, 0
  %2938 = vmatprep.subr.bf16.mxu0 0
  %2939 = vmatpush1.bf16.msra.mxu0 %v845
  %2940 = vmatprep.subr.bf16.mxu0 0
  %2941 = vmatpush1.bf16.msra.mxu0 0
  %2942 = vmatprep.subr.bf16.mxu0 0
  %2943 = vmatpush1.bf16.msra.mxu0 0
  %2944 = vmatprep.subr.bf16.mxu0 0
  %2945 = vmatpush1.bf16.msra.mxu0 0
  %2946 = vmatprep.subr.bf16.mxu0 0
  %2947 = vmatpush1.bf16.msra.mxu0 0
  %2948 = vmatprep.subr.bf16.mxu0 0
  %2949 = vmatpush1.bf16.msra.mxu0 0
  %2950 = vmatprep.subr.bf16.mxu0 0
  %2951 = vmatpush1.bf16.msra.mxu0 0
  %2952 = vmatprep.subr.bf16.mxu0 0
  %2953 = vmatpush1.bf16.msra.mxu0 0
  %2954 = vmatprep.subr.bf16.mxu0 0
  %2955 = vmatpush1.bf16.msra.mxu0 0
  %2956 = vmatprep.subr.bf16.mxu0 0
  %2957 = vmatpush1.bf16.msra.mxu0 0
  %2958 = vmatprep.subr.bf16.mxu0 0
  %2959 = vmatpush1.bf16.msra.mxu0 0
  %2960 = vmatprep.subr.bf16.mxu0 0
  %2961 = vmatpush1.bf16.msra.mxu0 0
  %2962 = vmatprep.subr.bf16.mxu0 0
  %2963 = vmatpush1.bf16.msra.mxu0 0
  %2964 = vmatprep.subr.bf16.mxu0 0
  %2965 = vmatpush1.bf16.msra.mxu0 0
  %2966 = vmatprep.subr.bf16.mxu0 0
  %2967 = vmatpush1.bf16.msra.mxu0 0
  %2968 = vmatprep.subr.bf16.mxu0 0
  %2969 = vmatpush1.bf16.msra.mxu0 0
  %2970 = vmatprep.mubr.bf16.mxu0 0
  %2971 = vmatmul.mubr.bf16.gmra.mrb[0].mxu0 %v2936
  %v2972 = vpop.f32.mrb[0].mxu0
  %v2973 = vadd.f32 0.0, %v2972
  %v2974 = vpop.f32.mrb[0].mxu0
  %v2975 = vpop.f32.mrb[0].mxu0
  %v2976 = vpop.f32.mrb[0].mxu0
  %2977 = vdwg.mxu0
  %2978 = vmatprep.subr.bf16.mxu0 0
  %2979 = vmatpush1.bf16.msra.mxu0 %v955
  %2980 = vmatprep.subr.bf16.mxu0 0
  %2981 = vmatpush1.bf16.msra.mxu0 %v956
  %2982 = vmatprep.subr.bf16.mxu0 0
  %2983 = vmatpush1.bf16.msra.mxu0 %v957
  %2984 = vmatprep.subr.bf16.mxu0 0
  %2985 = vmatpush1.bf16.msra.mxu0 %v958
  %2986 = vmatprep.subr.bf16.mxu0 0
  %2987 = vmatpush1.bf16.msra.mxu0 %v959
  %2988 = vmatprep.subr.bf16.mxu0 0
  %2989 = vmatpush1.bf16.msra.mxu0 %v960
  %2990 = vmatprep.subr.bf16.mxu0 0
  %2991 = vmatpush1.bf16.msra.mxu0 %v961
  %2992 = vmatprep.subr.bf16.mxu0 0
  %2993 = vmatpush1.bf16.msra.mxu0 %v962
  %2994 = vmatprep.subr.bf16.mxu0 0
  %2995 = vmatpush1.bf16.msra.mxu0 %v963
  %2996 = vmatprep.subr.bf16.mxu0 0
  %2997 = vmatpush1.bf16.msra.mxu0 %v964
  %2998 = vmatprep.subr.bf16.mxu0 0
  %2999 = vmatpush1.bf16.msra.mxu0 %v965
  %3000 = vmatprep.subr.bf16.mxu0 0
  %3001 = vmatpush1.bf16.msra.mxu0 %v966
  %3002 = vmatprep.subr.bf16.mxu0 0
  %3003 = vmatpush1.bf16.msra.mxu0 %v967
  %3004 = vmatprep.subr.bf16.mxu0 0
  %3005 = vmatpush1.bf16.msra.mxu0 %v968
  %3006 = vmatprep.subr.bf16.mxu0 0
  %3007 = vmatpush1.bf16.msra.mxu0 %v969
  %3008 = vmatprep.subr.bf16.mxu0 0
  %3009 = vmatpush1.bf16.msra.mxu0 %v970
  %3010 = vmatprep.mubr.bf16.mxu0 %v2930
  %3011 = vmatmul.mubr.bf16.gmra.mrb[0].mxu0 %v2929
  %v3012 = vpop.f32.mrb[0].mxu0
  %v3013 = vadd.f32 %v2973, %v3012
  %v3014 = vpop.f32.mrb[0].mxu0
  %v3015 = vpop.f32.mrb[0].mxu0
  %v3016 = vpop.f32.mrb[0].mxu0
  %3017 = vdwg.mxu0
  %v3018 = vadd.f32 %v3013, %v1027
  %v3019 = vmax.f32 %v3018, 0.0
  %v3020 = vpack.c.bf16 %v3019, %v3019
  %3021 = vmatprep.subr.bf16.mxu0 0
  %3022 = vmatpush1.bf16.msra.mxu0 %v1080
  %3023 = vmatprep.subr.bf16.mxu0 0
  %3024 = vmatpush1.bf16.msra.mxu0 %v1081
  %3025 = vmatprep.subr.bf16.mxu0 0
  %3026 = vmatpush1.bf16.msra.mxu0 %v1082
  %3027 = vmatprep.subr.bf16.mxu0 0
  %3028 = vmatpush1.bf16.msra.mxu0 %v1083
  %3029 = vmatprep.subr.bf16.mxu0 0
  %3030 = vmatpush1.bf16.msra.mxu0 %v1084
  %3031 = vmatprep.subr.bf16.mxu0 0
  %3032 = vmatpush1.bf16.msra.mxu0 %v1085
  %3033 = vmatprep.subr.bf16.mxu0 0
  %3034 = vmatpush1.bf16.msra.mxu0 %v1086
  %3035 = vmatprep.subr.bf16.mxu0 0
  %3036 = vmatpush1.bf16.msra.mxu0 %v1087
  %3037 = vmatprep.subr.bf16.mxu0 0
  %3038 = vmatpush1.bf16.msra.mxu0 0
  %3039 = vmatprep.subr.bf16.mxu0 0
  %3040 = vmatpush1.bf16.msra.mxu0 0
  %3041 = vmatprep.subr.bf16.mxu0 0
  %3042 = vmatpush1.bf16.msra.mxu0 0
  %3043 = vmatprep.subr.bf16.mxu0 0
  %3044 = vmatpush1.bf16.msra.mxu0 0
  %3045 = vmatprep.subr.bf16.mxu0 0
  %3046 = vmatpush1.bf16.msra.mxu0 0
  %3047 = vmatprep.subr.bf16.mxu0 0
  %3048 = vmatpush1.bf16.msra.mxu0 0
  %3049 = vmatprep.subr.bf16.mxu0 0
  %3050 = vmatpush1.bf16.msra.mxu0 0
  %3051 = vmatprep.subr.bf16.mxu0 0
  %3052 = vmatpush1.bf16.msra.mxu0 0
  %3053 = vmatprep.mubr.bf16.mxu0 0
  %3054 = vmatmul.mubr.bf16.gmra.mrb[0].mxu0 %v3020
  %v3055 = vpop.f32.mrb[0].mxu0
  %v3056 = vadd.f32 %v1047, %v3055
  %v3057 = vpop.f32.mrb[0].mxu0
  %v3058 = vpop.f32.mrb[0].mxu0
  %v3059 = vpop.f32.mrb[0].mxu0
  %3060 = vdwg.mxu0
  %v3061 = vtanh.pop %v3056
  %v3062 = vxor.u32 %v3056, 2147483648
  %v3063 = vmul.f32 %v3062, 1.442695
  %v3064 = vpow.pop %v3063
  %v3065 = vadd.f32 %v3064, 1.0
  %v3066 = vrcp.pop %v3065
  %v3067 = vmul.f32 1.0, %v3066
  %v3068 = vmul.f32 %v3067, %v2693
  %3070 = vrot.lane.b32.xlu0 %v3061, 32
  %v3071 = vpop.permute.xlu0 %3070
  %v3073 = vmul.f32 %v3067, %v3071
  %3075 = vrot.lane.b32.xlu0 %v3073, 112
  %v3076 = vpop.permute.xlu0 %3075
  %v3078 = vadd.f32 %v3068, %v3076
  %v3079 = vld [vmem:[%s2 + $0x14] sm:$0xf]
  %v3080 = vld [vmem:[%s2 + $0x2c] sm:$0xf]
  %v3081 = vld [vmem:[%s2 + $0x44] sm:$0xf]
  %v3082 = vld [vmem:[%s2 + $0x5c] sm:$0xf]
  %v3083 = vld [vmem:[%s2 + $0x74] sm:$0xf]
  %v3084 = vld [vmem:[%s2 + $0x8c] sm:$0xf]
  %v3085 = vld [vmem:[%s2 + $0xa4] sm:$0xf]
  %v3086 = vld [vmem:[%s2 + $0xbc] sm:$0xf]
  %v3087 = vld [vmem:[%s2 + $0xd4] sm:$0xf]
  %v3088 = vld [vmem:[%s2 + $0xec] sm:$0xf]
  %v3089 = vld [vmem:[%s2 + $0x104] sm:$0xf]
  %v3090 = vld [vmem:[%s2 + $0x11c] sm:$0xf]
  %v3091 = vld [vmem:[%s2 + $0x134] sm:$0xf]
  %v3092 = vld [vmem:[%s2 + $0x14c] sm:$0xf]
  %v3093 = vld [vmem:[%s2 + $0x164] sm:$0xf]
  %v3094 = vld [vmem:[%s2 + $0x17c] sm:$0xf]
  %v3095 = vpack.c.bf16 %v2816, %v2816
  %v3096 = vld [vmem:[%s5 + $0x4] sm:$0xf]
  %v3097 = vld [vmem:[%s5 + $0xc] sm:$0xf]
  %v3098 = vpack.c.bf16 %v3078, %v3078
  %3100 = vrot.lane.b32.xlu0 %v3098, 112
  %v3101 = vpop.permute.xlu0 %3100
  %v3104 = vunpack.c.l.b16 %v3096
  %v3105 = vunpack.c.l.b16 %v3097
  %v3106 = vpack.c.b16 %v3105, %v3104
  %v3109 = vsel %vm847, %v3101, 0
  %3111 = vmatprep.subr.bf16.mxu0 0
  %3112 = vmatpush1.bf16.msra.mxu0 %v3106
  %3113 = vmatprep.subr.bf16.mxu0 0
  %3114 = vmatpush1.bf16.msra.mxu0 0
  %3115 = vmatprep.subr.bf16.mxu0 0
  %3116 = vmatpush1.bf16.msra.mxu0 0
  %3117 = vmatprep.subr.bf16.mxu0 0
  %3118 = vmatpush1.bf16.msra.mxu0 0
  %3119 = vmatprep.subr.bf16.mxu0 0
  %3120 = vmatpush1.bf16.msra.mxu0 0
  %3121 = vmatprep.subr.bf16.mxu0 0
  %3122 = vmatpush1.bf16.msra.mxu0 0
  %3123 = vmatprep.subr.bf16.mxu0 0
  %3124 = vmatpush1.bf16.msra.mxu0 0
  %3125 = vmatprep.subr.bf16.mxu0 0
  %3126 = vmatpush1.bf16.msra.mxu0 0
  %3127 = vmatprep.subr.bf16.mxu0 0
  %3128 = vmatpush1.bf16.msra.mxu0 0
  %3129 = vmatprep.subr.bf16.mxu0 0
  %3130 = vmatpush1.bf16.msra.mxu0 0
  %3131 = vmatprep.subr.bf16.mxu0 0
  %3132 = vmatpush1.bf16.msra.mxu0 0
  %3133 = vmatprep.subr.bf16.mxu0 0
  %3134 = vmatpush1.bf16.msra.mxu0 0
  %3135 = vmatprep.subr.bf16.mxu0 0
  %3136 = vmatpush1.bf16.msra.mxu0 0
  %3137 = vmatprep.subr.bf16.mxu0 0
  %3138 = vmatpush1.bf16.msra.mxu0 0
  %3139 = vmatprep.subr.bf16.mxu0 0
  %3140 = vmatpush1.bf16.msra.mxu0 0
  %3141 = vmatprep.subr.bf16.mxu0 0
  %3142 = vmatpush1.bf16.msra.mxu0 0
  %3143 = vmatprep.mubr.bf16.mxu0 0
  %3144 = vmatmul.mubr.bf16.gmra.mrb[0].mxu0 %v3109
  %v3145 = vpop.f32.mrb[0].mxu0
  %v3146 = vadd.f32 0.0, %v3145
  %v3147 = vpop.f32.mrb[0].mxu0
  %v3148 = vpop.f32.mrb[0].mxu0
  %v3149 = vpop.f32.mrb[0].mxu0
  %3150 = vdwg.mxu0
  %v3152 = vrot.slane %v3095, 2
  %v3170 = vunpack.c.l.b16 %v3079
  %v3171 = vunpack.c.l.b16 %v3080
  %v3172 = vunpack.c.l.b16 %v3081
  %v3173 = vunpack.c.l.b16 %v3082
  %v3174 = vunpack.c.l.b16 %v3083
  %v3175 = vunpack.c.l.b16 %v3084
  %v3176 = vunpack.c.l.b16 %v3085
  %v3177 = vunpack.c.l.b16 %v3086
  %v3178 = vunpack.c.l.b16 %v3087
  %v3179 = vunpack.c.l.b16 %v3088
  %v3180 = vunpack.c.l.b16 %v3089
  %v3181 = vunpack.c.l.b16 %v3090
  %v3182 = vunpack.c.l.b16 %v3091
  %v3183 = vunpack.c.l.b16 %v3092
  %v3184 = vunpack.c.l.b16 %v3093
  %v3185 = vunpack.c.l.b16 %v3094
  %v3186 = vpack.c.b16 %v3171, %v3170
  %v3187 = vpack.c.b16 %v3173, %v3172
  %v3188 = vpack.c.b16 %v3175, %v3174
  %v3189 = vpack.c.b16 %v3177, %v3176
  %v3190 = vpack.c.b16 %v3179, %v3178
  %v3191 = vpack.c.b16 %v3181, %v3180
  %v3192 = vpack.c.b16 %v3183, %v3182
  %v3193 = vpack.c.b16 %v3185, %v3184
  %3202 = vmatprep.subr.bf16.mxu0 0
  %3203 = vmatpush1.bf16.msra.mxu0 %v3186
  %3204 = vmatprep.subr.bf16.mxu0 0
  %3205 = vmatpush1.bf16.msra.mxu0 %v3187
  %3206 = vmatprep.subr.bf16.mxu0 0
  %3207 = vmatpush1.bf16.msra.mxu0 %v3188
  %3208 = vmatprep.subr.bf16.mxu0 0
  %3209 = vmatpush1.bf16.msra.mxu0 %v3189
  %3210 = vmatprep.subr.bf16.mxu0 0
  %3211 = vmatpush1.bf16.msra.mxu0 %v3190
  %3212 = vmatprep.subr.bf16.mxu0 0
  %3213 = vmatpush1.bf16.msra.mxu0 %v3191
  %3214 = vmatprep.subr.bf16.mxu0 0
  %3215 = vmatpush1.bf16.msra.mxu0 %v3192
  %3216 = vmatprep.subr.bf16.mxu0 0
  %3217 = vmatpush1.bf16.msra.mxu0 %v3193
  %3218 = vmatprep.subr.bf16.mxu0 0
  %3219 = vmatpush1.bf16.msra.mxu0 0
  %3220 = vmatprep.subr.bf16.mxu0 0
  %3221 = vmatpush1.bf16.msra.mxu0 0
  %3222 = vmatprep.subr.bf16.mxu0 0
  %3223 = vmatpush1.bf16.msra.mxu0 0
  %3224 = vmatprep.subr.bf16.mxu0 0
  %3225 = vmatpush1.bf16.msra.mxu0 0
  %3226 = vmatprep.subr.bf16.mxu0 0
  %3227 = vmatpush1.bf16.msra.mxu0 0
  %3228 = vmatprep.subr.bf16.mxu0 0
  %3229 = vmatpush1.bf16.msra.mxu0 0
  %3230 = vmatprep.subr.bf16.mxu0 0
  %3231 = vmatpush1.bf16.msra.mxu0 0
  %3232 = vmatprep.subr.bf16.mxu0 0
  %3233 = vmatpush1.bf16.msra.mxu0 0
  %3234 = vmatprep.mubr.bf16.mxu0 0
  %3235 = vmatmul.mubr.bf16.gmra.mrb[0].mxu0 %v3152
  %v3236 = vpop.f32.mrb[0].mxu0
  %v3237 = vadd.f32 %v3146, %v3236
  %v3238 = vpop.f32.mrb[0].mxu0
  %v3239 = vpop.f32.mrb[0].mxu0
  %v3240 = vpop.f32.mrb[0].mxu0
  %3241 = vdwg.mxu0
  %v3242 = vld [vmem:[%s6 + $0x24] sm:$0xf]
  %v3243 = vadd.f32 %v3237, %v3242
  %v3244 = vmax.f32 %v3243, 0.0
  %v3245 = vld [vmem:[%s4 + $0x8] sm:$0xf]
  %v3246 = vld [vmem:[%s4 + $0x14] sm:$0xf]
  %v3247 = vld [vmem:[%s4 + $0x20] sm:$0xf]
  %v3248 = vld [vmem:[%s4 + $0x2c] sm:$0xf]
  %v3249 = vpack.c.bf16 %v3244, %v3244
  %v3250 = vld [vmem:[%s6 + $0x28] sm:$0xf]
  %v3255 = vunpack.c.l.b16 %v3245
  %v3256 = vunpack.c.l.b16 %v3246
  %v3257 = vunpack.c.l.b16 %v3247
  %v3258 = vunpack.c.l.b16 %v3248
  %v3259 = vpack.c.b16 %v3256, %v3255
  %v3260 = vpack.c.b16 %v3258, %v3257
  %v3264 = vsel %vm738, %v3249, 0
  %3266 = vmatprep.subr.bf16.mxu0 0
  %3267 = vmatpush1.bf16.msra.mxu0 %v3259
  %3268 = vmatprep.subr.bf16.mxu0 0
  %3269 = vmatpush1.bf16.msra.mxu0 %v3260
  %3270 = vmatprep.subr.bf16.mxu0 0
  %3271 = vmatpush1.bf16.msra.mxu0 0
  %3272 = vmatprep.subr.bf16.mxu0 0
  %3273 = vmatpush1.bf16.msra.mxu0 0
  %3274 = vmatprep.subr.bf16.mxu0 0
  %3275 = vmatpush1.bf16.msra.mxu0 0
  %3276 = vmatprep.subr.bf16.mxu0 0
  %3277 = vmatpush1.bf16.msra.mxu0 0
  %3278 = vmatprep.subr.bf16.mxu0 0
  %3279 = vmatpush1.bf16.msra.mxu0 0
  %3280 = vmatprep.subr.bf16.mxu0 0
  %3281 = vmatpush1.bf16.msra.mxu0 0
  %3282 = vmatprep.subr.bf16.mxu0 0
  %3283 = vmatpush1.bf16.msra.mxu0 0
  %3284 = vmatprep.subr.bf16.mxu0 0
  %3285 = vmatpush1.bf16.msra.mxu0 0
  %3286 = vmatprep.subr.bf16.mxu0 0
  %3287 = vmatpush1.bf16.msra.mxu0 0
  %3288 = vmatprep.subr.bf16.mxu0 0
  %3289 = vmatpush1.bf16.msra.mxu0 0
  %3290 = vmatprep.subr.bf16.mxu0 0
  %3291 = vmatpush1.bf16.msra.mxu0 0
  %3292 = vmatprep.subr.bf16.mxu0 0
  %3293 = vmatpush1.bf16.msra.mxu0 0
  %3294 = vmatprep.subr.bf16.mxu0 0
  %3295 = vmatpush1.bf16.msra.mxu0 0
  %3296 = vmatprep.subr.bf16.mxu0 0
  %3297 = vmatpush1.bf16.msra.mxu0 0
  %3298 = vmatprep.mubr.bf16.mxu0 0
  %3299 = vmatmul.mubr.bf16.gmra.mrb[0].mxu0 %v3264
  %v3300 = vpop.f32.mrb[0].mxu0
  %v3301 = vadd.f32 %v3250, %v3300
  %v3302 = vpop.f32.mrb[0].mxu0
  %v3303 = vpop.f32.mrb[0].mxu0
  %v3304 = vpop.f32.mrb[0].mxu0
  %3305 = vdwg.mxu0
  %3306 = vst [vmem:[%s7] sm:$0xf] %v3301
  // Predicated region
  $region30: #{mfn_forward.1} parent=0 // pred_check
    _
  $region31: #{mfn_forward.1} parent=0 // pred_check_branch
    %3308 = sbr.rel (0) target = $region33
  $region32: #{mfn_forward.1} parent=0 // pred_region
    _
  $region33: #{mfn_forward.1} parent=0 // pred_fallthru
    _
  // Predicated region
  $region34: #{mfn_forward.1} parent=0 // pred_check
    _
  $region35: #{mfn_forward.1} parent=0 // pred_check_branch
    %3310 = sbr.rel (0) target = $region37
  $region36: #{mfn_forward.1} parent=0 // pred_region
    _
  $region37: #{mfn_forward.1} parent=0 // pred_fallthru
    _

</llo_original>
